<compile_context>
chip_gen: v7x
topology: tpu7x:2x2x1
jax: 0.10.0
libtpu: 0.0.40
codegen_flags: <defaults>
</compile_context>

<pallas_src>
import functools

import jax
import jax.numpy as jnp
from jax import lax
from jax.experimental import pallas as pl
from jax.experimental.pallas import tpu as pltpu

_LANE = 128


def _round_up(n, m):
    return ((n + m - 1) // m) * m


def _pick_tile(n, candidates=(512, 256, 128)):
    for c in candidates:
        if n % c == 0:
            return c
    return n  # n is always a multiple of 128 here


def _pad2(x, rows, cols):
    x = x.astype(jnp.float32)
    r, c = x.shape
    if r == rows and c == cols:
        return x
    return jnp.pad(x, ((0, rows - r), (0, cols - c)))


# ----------------------------------------------------------------------------
# Pallas kernels
# ----------------------------------------------------------------------------
def _cov_rows_kernel(scal_ref, xl_ref, pleft_ref, xs_ref, psrow_ref, out_ref):
    """One row tile of the stacked covariance K_left = k([xT ; xS], xS).

    pleft columns : [a, c, domain, ||x||^2, 0, 0, 0, 0]   (per left point)
    psrow sublanes: [a, c, domain, ||x||^2, 0, 0, 0, 0]   (per source point)
    coupling  B[i,j] = a_i*a_j + [dom_i == dom_j] * c_i*c_j
    """
    gamma = scal_ref[0]

    xl = xl_ref[...]                       # (TR, DP)  f32
    xs = xs_ref[...]                       # (NSP, DP) f32
    pL = pleft_ref[...]                    # (TR, 8)
    pS = psrow_ref[...]                    # (8, NSP)

    aL, cL, dL, sqL = pL[:, 0:1], pL[:, 1:2], pL[:, 2:3], pL[:, 3:4]
    aS, cS, dS, sqS = pS[0:1, :], pS[1:2, :], pS[2:3, :], pS[3:4, :]

    # x @ xs^T (transpose-rhs MXU pattern); squared norms precomputed.
    cross = lax.dot_general(xl, xs, (((1,), (1,)), ((), ())),
                            preferred_element_type=jnp.float32)   # (TR, NSP)
    d2 = jnp.maximum(sqL + sqS - 2.0 * cross, 0.0)
    coup = aL * aS + jnp.where(dL == dS, cL * cS, 0.0)
    out_ref[...] = coup * jnp.exp(-gamma * d2)


def _posterior_kernel(scal_ref, xt_ref, rhsT_ref, cstar_ref, mu_ref, acc_ref):
    """K-slab reduction: [V^T V | mu*] = vTT^T @ [vTT | alphaSS1], KTT in-kernel.

    rhsT (bf16): rows 0..NT-1 hold vTT^T, row NTP holds alphaSS1^T; the K
    (= NS) axis is the lane axis and is tiled by the grid.
    """
    k = pl.program_id(0)
    last = pl.num_programs(0) - 1
    ntp = cstar_ref.shape[0]

    @pl.when(k == 0)
    def _():
        acc_ref[...] = jnp.zeros_like(acc_ref)
        # Build KTT once (all target points share one domain) and stash it in
        # the resident output block; EUP work overlaps with later MXU slabs.
        gamma = scal_ref[0]
        b_tt = scal_ref[1]
        xt = xt_ref[...]                                          # (NTP, DP)
        sqt = jnp.sum(xt * xt, axis=1, keepdims=True)
        cross = lax.dot_general(xt, xt, (((1,), (1,)), ((), ())),
                                preferred_element_type=jnp.float32)
        d2 = jnp.maximum(sqt + sqt.T - 2.0 * cross, 0.0)
        cstar_ref[...] = b_tt * jnp.exp(-gamma * d2)

    slab = rhsT_ref[...]                                          # (NTP+128, TK) bf16
    acc_ref[...] += lax.dot_general(slab[:ntp, :], slab,
                                    (((1,), (1,)), ((), ())),
                                    preferred_element_type=jnp.float32)

    @pl.when(k == last)
    def _():
        cstar_ref[...] = cstar_ref[...] - acc_ref[:, :ntp]        # KTT - V^T V
        mu_ref[...] = acc_ref[:, ntp:]                            # mu* in lane 0


# ----------------------------------------------------------------------------
# Pallas wrappers
# ----------------------------------------------------------------------------
def build_covariances(scal, xL_p, pL_p, xS_p, pS_row):
    nlp, dp = xL_p.shape
    nsp = xS_p.shape[0]
    tr = _pick_tile(nlp)
    return pl.pallas_call(
        _cov_rows_kernel,
        grid=(nlp // tr,),
        in_specs=[
            pl.BlockSpec(memory_space=pltpu.MemorySpace.SMEM),            # scal
            pl.BlockSpec((tr, dp), lambda i: (i, 0)),                     # xL tile
            pl.BlockSpec((tr, pL_p.shape[1]), lambda i: (i, 0)),          # pL tile
            pl.BlockSpec((nsp, dp), lambda i: (0, 0)),                    # xS (resident)
            pl.BlockSpec((pS_row.shape[0], nsp), lambda i: (0, 0)),       # pS row slab
        ],
        out_specs=pl.BlockSpec((tr, nsp), lambda i: (i, 0)),
        out_shape=jax.ShapeDtypeStruct((nlp, nsp), jnp.float32),
        compiler_params=pltpu.CompilerParams(
            dimension_semantics=("parallel",)),
    )(scal, xL_p, pL_p, xS_p, pS_row)


def gp_posterior(scal, xT_p, rhsT_bf16):
    ntp, dp = xT_p.shape
    nsp = rhsT_bf16.shape[1]
    tk = _pick_tile(nsp)
    return pl.pallas_call(
        _posterior_kernel,
        grid=(nsp // tk,),
        in_specs=[
            pl.BlockSpec(memory_space=pltpu.MemorySpace.SMEM),            # scal
            pl.BlockSpec((ntp, dp), lambda k: (0, 0)),                    # xT (resident)
            pl.BlockSpec((ntp + _LANE, tk), lambda k: (0, k)),            # rhsT K-slab
        ],
        out_specs=(
            pl.BlockSpec((ntp, ntp), lambda k: (0, 0)),
            pl.BlockSpec((ntp, _LANE), lambda k: (0, 0)),
        ),
        out_shape=(
            jax.ShapeDtypeStruct((ntp, ntp), jnp.float32),                # KTT - V^T V
            jax.ShapeDtypeStruct((ntp, _LANE), jnp.float32),              # mu block
        ),
        scratch_shapes=[pltpu.VMEM((ntp, ntp + _LANE), jnp.float32)],
        compiler_params=pltpu.CompilerParams(
            dimension_semantics=("arbitrary",)),
    )(scal, xT_p, rhsT_bf16)


# ----------------------------------------------------------------------------
# Jitted train-mode forward (Pallas kernels + XLA Cholesky/solve glue)
# ----------------------------------------------------------------------------
@functools.partial(jax.jit, static_argnames=("jitter",))
def _train_forward(xT, xS, yS, idxT, idxS, a_dom, c_dom, lik_std_noise,
                   lengthscale, *, jitter):
    NT, D = xT.shape
    NS = xS.shape[0]
    NTP = _round_up(NT, _LANE)
    NSP = _round_up(NS, _LANE)
    DP = _round_up(D, _LANE)

    xT = xT.astype(jnp.float32)
    xS = xS.astype(jnp.float32)
    yS = yS.astype(jnp.float32)

    gamma = 0.5 / (lengthscale.astype(jnp.float32) ** 2)
    aT = a_dom[idxT]; cT = c_dom[idxT]; dT = idxT.astype(jnp.float32)
    aS = a_dom[idxS]; cS = c_dom[idxS]; dS = idxS.astype(jnp.float32)
    b_tt = aT[0] * aT[0] + cT[0] * cT[0]              # all targets share one domain
    nvar_S = lik_std_noise[idxS] ** 2
    nvar_T = lik_std_noise[idxT[0]] ** 2
    scal = jnp.stack([gamma, b_tt]).astype(jnp.float32)

    sqT = jnp.sum(xT * xT, axis=1)
    sqS = jnp.sum(xS * xS, axis=1)

    # Stacked left operand [xT ; xS], lane-padded feature dim.
    xT_p = _pad2(xT, NTP, DP)
    xS_p = _pad2(xS, NSP, DP)
    xL_p = jnp.concatenate([xT_p, xS_p], axis=0)                  # (NLP, DP)

    def _col_params(a, c, d, sq, n_pad):
        p = jnp.stack([a, c, d, sq], axis=1)                      # (n, 4)
        return jnp.pad(p, ((0, n_pad - p.shape[0]), (0, 4))).astype(jnp.float32)

    pL_p = jnp.concatenate([_col_params(aT, cT, dT, sqT, NTP),
                            _col_params(aS, cS, dS, sqS, NSP)], axis=0)

    # Row-form source params: sublanes = [a, c, dom, ||x||^2, 0, 0, 0, 0].
    pS_row = jnp.zeros((8, NSP), jnp.float32)
    pS_row = pS_row.at[0, :NS].set(aS).at[1, :NS].set(cS)
    pS_row = pS_row.at[2, :NS].set(dS).at[3, :NS].set(sqS)

    # --- fused covariance build (one gridded Pallas launch) -----------------
    K_left = build_covariances(scal, xL_p, pL_p, xS_p, pS_row)
    KTS = K_left[:NT, :NS]
    KSS = K_left[NTP:NTP + NS, :NS]

    # --- sequential linear algebra stays in XLA -----------------------------
    # TODO(synk): Cholesky / triangular solves have no clean Pallas equivalent.
    diag = jnp.arange(NS)
    CSS = KSS.at[diag, diag].add(nvar_S)                          # diag lik noise
    LSS = jnp.linalg.cholesky(CSS)
    alphaSS1 = jax.scipy.linalg.solve_triangular(LSS, yS, lower=True)    # (NS, 1)
    vTT = jax.scipy.linalg.solve_triangular(LSS, KTS.T, lower=True)      # (NS, NT)

    # Single posterior operand: rows 0..NT-1 = vTT^T, row NTP = alphaSS1^T.
    rhsT = (jnp.zeros((NTP + _LANE, NSP), jnp.float32)
            .at[:NT, :NS].set(vTT.T)
            .at[NTP, :NS].set(alphaSS1[:, 0])).astype(jnp.bfloat16)

    # --- posterior (KTT built in-kernel; K-slab reduction) -------------------
    cstar_p, mu_p = gp_posterior(scal, xT_p, rhsT)

    mu_star = mu_p[:NT, 0:1]
    # CTT's diag likelihood noise (all targets share one domain) plus jitter to
    # keep C_star PSD for the Cholesky (bumped for the bf16 MXU pass).
    C_star = cstar_p[:NT, :NT] + (nvar_T + jitter) * jnp.eye(NT, dtype=jnp.float32)
    L = jnp.linalg.cholesky(C_star)
    return mu_star, L, LSS


# ----------------------------------------------------------------------------
# TLGaussianProcess (JAX/Pallas port of the PyTorch module, Train_mode branch)
# ----------------------------------------------------------------------------
class TLGaussianProcess:
    def __init__(self, xT, yT, xS, yS, idxS, NDomains):
        self.xT = jnp.asarray(xT, jnp.float32)
        self.yT = jnp.asarray(yT, jnp.float32)
        self.xS = jnp.asarray(xS, jnp.float32)
        self.yS = jnp.asarray(yS, jnp.float32)
        self.idxS = jnp.asarray(idxS, jnp.int32)
        self.idxT = jnp.full((self.xT.shape[0],), NDomains - 1, jnp.int32)
        self.NDomains = NDomains
        self.Train_mode = True

        # nn.Parameter(0.1 * ones(NDomains))
        self.lik_std_noise = 0.1 * jnp.ones((NDomains,), jnp.float32)

        # Deterministic TL_Kernel_var surrogate parameters (see header note).
        self.lengthscale = jnp.asarray(1.0, jnp.float32)
        d = jnp.arange(NDomains, dtype=jnp.float32)
        sigma = 1.0 + 0.1 * d                              # per-domain output scale
        lam = 0.7 + 0.05 * d                               # per-domain coupling (<1)
        self._a = sigma * lam                              # cross-domain part
        self._c = sigma * jnp.sqrt(jnp.clip(1.0 - lam * lam, 0.0))  # same-domain part

        self.mu_star = jnp.zeros_like(self.yT)
        self.L = jnp.eye(self.yT.shape[0], dtype=jnp.float32)
        self.LSS = None

    def forward(self, xT, noiseless=True):
        # NOTE: the reference Train_mode branch ignores `noiseless`; kept as-is.
        if not self.Train_mode:
            # TODO(synk): prediction (Train_mode=False) branch not implemented.
            raise NotImplementedError("Prediction mode not implemented.")
        xT = jnp.asarray(xT, jnp.float32)
        mu_star, L, LSS = _train_forward(
            xT, self.xS, self.yS, self.idxT, self.idxS,
            self._a, self._c, self.lik_std_noise, self.lengthscale,
            jitter=1e-4)
        self.mu_star, self.L, self.LSS = mu_star, L, LSS
        return mu_star, L

    __call__ = forward


# ----------------------------------------------------------------------------
if __name__ == "__main__":
    key = jax.random.PRNGKey(0)
    k1, k2, k3, k4 = jax.random.split(key, 4)

    NDomains = 3
    D = 4
    # Source: 6 points in domain 0, 10 in domain 1 (sorted, as the module expects).
    idxS = [0] * 6 + [1] * 10
    NS = len(idxS)          # 16
    NT = 8                  # target domain (label NDomains-1 == 2)

    xS = jax.random.normal(k1, (NS, D), jnp.float32)
    yS = jax.random.normal(k2, (NS, 1), jnp.float32)
    xT = jax.random.normal(k3, (NT, D), jnp.float32)
    yT = jax.random.normal(k4, (NT, 1), jnp.float32)

    model = TLGaussianProcess(xT, yT, xS, yS, idxS, NDomains)
    mu_star, L = model(xT)
    jax.block_until_ready((mu_star, L))

    assert mu_star.shape == (NT, 1)
    assert L.shape == (NT, NT)
    assert bool(jnp.all(jnp.isfinite(mu_star))) and bool(jnp.all(jnp.isfinite(L)))
    print("KERNEL_OK")
</pallas_src>

<mosaic_0001>
module attributes {stable_mosaic.version = 11 : i64} {
  func.func private @main(%arg0: i32) attributes {dimension_semantics = [#tpu.dimension_semantics<core_parallel>], iteration_bounds = array<i64: 2>, tpu.core_type = #tpu.core_type<sc_scalar_subcore>, window_params = []} {
    return
  }
}

module attributes {stable_mosaic.version = 11 : i64} {
  func.func private @main(%arg0: i32) attributes {dimension_semantics = [#tpu.dimension_semantics<core_parallel>], iteration_bounds = array<i64: 2>, tpu.core_type = #tpu.core_type<sc_scalar_subcore>, window_params = []} {
    return
  }
}

module attributes {stable_mosaic.version = 11 : i64} {
  func.func @_cov_rows_kernel(%arg0: i32, %arg1: memref<2xf32, #tpu.memory_space<smem>>, %arg2: memref<256x128xf32, #tpu.memory_space<vmem>>, %arg3: memref<256x8xf32, #tpu.memory_space<vmem>>, %arg4: memref<128x128xf32, #tpu.memory_space<vmem>>, %arg5: memref<8x128xf32, #tpu.memory_space<vmem>>, %arg6: memref<256x128xf32, #tpu.memory_space<vmem>>) attributes {dimension_semantics = [#tpu.dimension_semantics<parallel>], iteration_bounds = array<i64: 1>, scalar_prefetch = 0 : i64, scratch_operands = 0 : i64, tpu.core_type = #tpu.core_type<tc>, window_params = [{transform_indices = @transform_0, window_bounds = array<i64: 2>}, {transform_indices = @transform_1, window_bounds = array<i64: 256, 128>}, {transform_indices = @transform_2, window_bounds = array<i64: 256, 8>}, {pipeline_mode = #tpu.pipeline_mode<synchronous>, transform_indices = @transform_3, window_bounds = array<i64: 128, 128>}, {pipeline_mode = #tpu.pipeline_mode<synchronous>, transform_indices = @transform_4, window_bounds = array<i64: 8, 128>}, {transform_indices = @transform_5, window_bounds = array<i64: 256, 128>}]} {
    %c0 = arith.constant 0 : index
    %0 = memref.load %arg1[%c0] : memref<2xf32, #tpu.memory_space<smem>>
    %c0_0 = arith.constant 0 : index
    %c0_1 = arith.constant 0 : index
    %1 = vector.load %arg2[%c0_0, %c0_1] : memref<256x128xf32, #tpu.memory_space<vmem>>, vector<256x128xf32>
    %c0_2 = arith.constant 0 : index
    %c0_3 = arith.constant 0 : index
    %2 = vector.load %arg4[%c0_2, %c0_3] : memref<128x128xf32, #tpu.memory_space<vmem>>, vector<128x128xf32>
    %c0_4 = arith.constant 0 : index
    %c0_5 = arith.constant 0 : index
    %3 = vector.load %arg3[%c0_4, %c0_5] : memref<256x8xf32, #tpu.memory_space<vmem>>, vector<256x8xf32>
    %c0_6 = arith.constant 0 : index
    %c0_7 = arith.constant 0 : index
    %4 = vector.load %arg5[%c0_6, %c0_7] : memref<8x128xf32, #tpu.memory_space<vmem>>, vector<8x128xf32>
    %5 = vector.extract_strided_slice %3 {offsets = [0, 0], sizes = [256, 1], strides = [1, 1]} : vector<256x8xf32> to vector<256x1xf32>
    %6 = vector.extract_strided_slice %3 {offsets = [0, 1], sizes = [256, 1], strides = [1, 1]} : vector<256x8xf32> to vector<256x1xf32>
    %7 = vector.extract_strided_slice %3 {offsets = [0, 2], sizes = [256, 1], strides = [1, 1]} : vector<256x8xf32> to vector<256x1xf32>
    %8 = vector.extract_strided_slice %3 {offsets = [0, 3], sizes = [256, 1], strides = [1, 1]} : vector<256x8xf32> to vector<256x1xf32>
    %9 = vector.extract_strided_slice %4 {offsets = [0, 0], sizes = [1, 128], strides = [1, 1]} : vector<8x128xf32> to vector<1x128xf32>
    %10 = vector.extract_strided_slice %4 {offsets = [1, 0], sizes = [1, 128], strides = [1, 1]} : vector<8x128xf32> to vector<1x128xf32>
    %11 = vector.extract_strided_slice %4 {offsets = [2, 0], sizes = [1, 128], strides = [1, 1]} : vector<8x128xf32> to vector<1x128xf32>
    %12 = vector.extract_strided_slice %4 {offsets = [3, 0], sizes = [1, 128], strides = [1, 1]} : vector<8x128xf32> to vector<1x128xf32>
    %cst = arith.constant dense<0.000000e+00> : vector<256x128xf32>
    %13 = tpu.matmul %1, %2, %cst {dimension_numbers = #tpu.dot_dimension_numbers<[1], [1], [0], [0], [0, 0, 1, 0], [], []>} : vector<256x128xf32>, vector<128x128xf32>, vector<256x128xf32> -> vector<256x128xf32>
    %14 = vector.broadcast %8 : vector<256x1xf32> to vector<256x128xf32>
    %15 = vector.broadcast %12 : vector<1x128xf32> to vector<256x128xf32>
    %16 = arith.addf %14, %15 : vector<256x128xf32>
    %cst_8 = arith.constant 2.000000e+00 : f32
    %17 = vector.broadcast %cst_8 : f32 to vector<256x128xf32>
    %18 = arith.mulf %17, %13 : vector<256x128xf32>
    %19 = arith.subf %16, %18 : vector<256x128xf32>
    %cst_9 = arith.constant 0.000000e+00 : f32
    %20 = vector.broadcast %cst_9 : f32 to vector<256x128xf32>
    %21 = arith.maximumf %19, %20 : vector<256x128xf32>
    %22 = vector.broadcast %5 : vector<256x1xf32> to vector<256x128xf32>
    %23 = vector.broadcast %9 : vector<1x128xf32> to vector<256x128xf32>
    %24 = arith.mulf %22, %23 : vector<256x128xf32>
    %25 = vector.broadcast %7 : vector<256x1xf32> to vector<256x128xf32>
    %26 = vector.broadcast %11 : vector<1x128xf32> to vector<256x128xf32>
    %27 = arith.cmpf oeq, %25, %26 : vector<256x128xf32>
    %28 = vector.broadcast %6 : vector<256x1xf32> to vector<256x128xf32>
    %29 = vector.broadcast %10 : vector<1x128xf32> to vector<256x128xf32>
    %30 = arith.mulf %28, %29 : vector<256x128xf32>
    %cst_10 = arith.constant 0.000000e+00 : f32
    %31 = vector.broadcast %cst_10 : f32 to vector<256x128xf32>
    %32 = arith.select %27, %30, %31 : vector<256x128xi1>, vector<256x128xf32>
    %33 = arith.addf %24, %32 : vector<256x128xf32>
    %cst_11 = arith.constant 0.000000e+00 : f32
    %34 = arith.subf %cst_11, %0 : f32
    %35 = vector.broadcast %34 : f32 to vector<256x128xf32>
    %36 = arith.mulf %35, %21 : vector<256x128xf32>
    %37 = math.exp %36 : vector<256x128xf32>
    %38 = arith.mulf %33, %37 : vector<256x128xf32>
    %c0_12 = arith.constant 0 : index
    %c0_13 = arith.constant 0 : index
    %39 = vector.load %arg6[%c0_12, %c0_13] : memref<256x128xf32, #tpu.memory_space<vmem>>, vector<256x128xf32>
    tpu.vector_store %arg6[%c0_12, %c0_13], %38 {strides = array<i32>} : memref<256x128xf32, #tpu.memory_space<vmem>>, vector<256x128xf32>,
    return
  }
  func.func @transform_0(%arg0: i32) -> i32 {
    %c0_i32 = arith.constant 0 : i32
    %c0_i32_0 = arith.constant 0 : i32
    return %c0_i32 : i32
  }
  func.func @transform_1(%arg0: i32) -> (i32, i32) {
    %c0_i32 = arith.constant 0 : i32
    %c0_i32_0 = arith.constant 0 : i32
    return %arg0, %c0_i32 : i32, i32
  }
  func.func @transform_2(%arg0: i32) -> (i32, i32) {
    %c0_i32 = arith.constant 0 : i32
    %c0_i32_0 = arith.constant 0 : i32
    return %arg0, %c0_i32 : i32, i32
  }
  func.func @transform_3(%arg0: i32) -> (i32, i32) {
    %c0_i32 = arith.constant 0 : i32
    %c0_i32_0 = arith.constant 0 : i32
    %c0_i32_1 = arith.constant 0 : i32
    return %c0_i32, %c0_i32_0 : i32, i32
  }
  func.func @transform_4(%arg0: i32) -> (i32, i32) {
    %c0_i32 = arith.constant 0 : i32
    %c0_i32_0 = arith.constant 0 : i32
    %c0_i32_1 = arith.constant 0 : i32
    return %c0_i32, %c0_i32_0 : i32, i32
  }
  func.func @transform_5(%arg0: i32) -> (i32, i32) {
    %c0_i32 = arith.constant 0 : i32
    %c0_i32_0 = arith.constant 0 : i32
    return %arg0, %c0_i32 : i32, i32
  }
}

module attributes {stable_mosaic.version = 11 : i64} {
  func.func @_posterior_kernel(%arg0: i32, %arg1: memref<2xf32, #tpu.memory_space<smem>>, %arg2: memref<128x128xf32, #tpu.memory_space<vmem>>, %arg3: memref<256x128xbf16, #tpu.memory_space<vmem>>, %arg4: memref<128x128xf32, #tpu.memory_space<vmem>>, %arg5: memref<128x128xf32, #tpu.memory_space<vmem>>, %arg6: memref<128x256xf32, #tpu.memory_space<vmem>>) attributes {dimension_semantics = [#tpu.dimension_semantics<arbitrary>], iteration_bounds = array<i64: 1>, scalar_prefetch = 0 : i64, scratch_operands = 1 : i64, tpu.core_type = #tpu.core_type<tc>, window_params = [{transform_indices = @transform_0, window_bounds = array<i64: 2>}, {pipeline_mode = #tpu.pipeline_mode<synchronous>, transform_indices = @transform_1, window_bounds = array<i64: 128, 128>}, {transform_indices = @transform_2, window_bounds = array<i64: 256, 128>}, {pipeline_mode = #tpu.pipeline_mode<synchronous>, transform_indices = @transform_3, window_bounds = array<i64: 128, 128>}, {pipeline_mode = #tpu.pipeline_mode<synchronous>, transform_indices = @transform_4, window_bounds = array<i64: 128, 128>}]} {
    %c0_i32 = arith.constant 0 : i32
    %0 = arith.cmpi eq, %arg0, %c0_i32 : i32
    %1 = arith.extui %0 : i1 to i32
    %c0_i32_0 = arith.constant 0 : i32
    %2 = arith.cmpi ne, %1, %c0_i32_0 : i32
    scf.if %2 {
      %cst_8 = arith.constant 0.000000e+00 : f32
      %12 = vector.broadcast %cst_8 : f32 to vector<128x256xf32>
      %c0_9 = arith.constant 0 : index
      %c0_10 = arith.constant 0 : index
      %13 = vector.load %arg6[%c0_9, %c0_10] : memref<128x256xf32, #tpu.memory_space<vmem>>, vector<128x256xf32>
      tpu.vector_store %arg6[%c0_9, %c0_10], %12 {strides = array<i32>} : memref<128x256xf32, #tpu.memory_space<vmem>>, vector<128x256xf32>,
      %c0_11 = arith.constant 0 : index
      %14 = memref.load %arg1[%c0_11] : memref<2xf32, #tpu.memory_space<smem>>
      %c1 = arith.constant 1 : index
      %15 = memref.load %arg1[%c1] : memref<2xf32, #tpu.memory_space<smem>>
      %c0_12 = arith.constant 0 : index
      %c0_13 = arith.constant 0 : index
      %16 = vector.load %arg2[%c0_12, %c0_13] : memref<128x128xf32, #tpu.memory_space<vmem>>, vector<128x128xf32>
      %17 = arith.mulf %16, %16 : vector<128x128xf32>
      %cst_14 = arith.constant dense<0.000000e+00> : vector<128xf32>
      %18 = vector.multi_reduction <add>, %17, %cst_14 [1] : vector<128x128xf32> to vector<128xf32>
      %19 = vector.shape_cast %18 : vector<128xf32> to vector<128x1xf32>
      %cst_15 = arith.constant dense<0.000000e+00> : vector<128x128xf32>
      %20 = tpu.matmul %16, %16, %cst_15 {dimension_numbers = #tpu.dot_dimension_numbers<[1], [1], [0], [0], [0, 0, 1, 0], [], []>} : vector<128x128xf32>, vector<128x128xf32>, vector<128x128xf32> -> vector<128x128xf32>
      %21 = tpu.transpose %19, [1, 0] : vector<128x1xf32> -> vector<1x128xf32>
      %22 = vector.broadcast %19 : vector<128x1xf32> to vector<128x128xf32>
      %23 = vector.broadcast %21 : vector<1x128xf32> to vector<128x128xf32>
      %24 = arith.addf %22, %23 : vector<128x128xf32>
      %cst_16 = arith.constant 2.000000e+00 : f32
      %25 = vector.broadcast %cst_16 : f32 to vector<128x128xf32>
      %26 = arith.mulf %25, %20 : vector<128x128xf32>
      %27 = arith.subf %24, %26 : vector<128x128xf32>
      %cst_17 = arith.constant 0.000000e+00 : f32
      %28 = vector.broadcast %cst_17 : f32 to vector<128x128xf32>
      %29 = arith.maximumf %27, %28 : vector<128x128xf32>
      %cst_18 = arith.constant 0.000000e+00 : f32
      %30 = arith.subf %cst_18, %14 : f32
      %31 = vector.broadcast %30 : f32 to vector<128x128xf32>
      %32 = arith.mulf %31, %29 : vector<128x128xf32>
      %33 = math.exp %32 : vector<128x128xf32>
      %34 = vector.broadcast %15 : f32 to vector<128x128xf32>
      %35 = arith.mulf %34, %33 : vector<128x128xf32>
      %c0_19 = arith.constant 0 : index
      %c0_20 = arith.constant 0 : index
      %36 = vector.load %arg4[%c0_19, %c0_20] : memref<128x128xf32, #tpu.memory_space<vmem>>, vector<128x128xf32>
      tpu.vector_store %arg4[%c0_19, %c0_20], %35 {strides = array<i32>} : memref<128x128xf32, #tpu.memory_space<vmem>>, vector<128x128xf32>,
    } else {
    }
    %c0 = arith.constant 0 : index
    %c0_1 = arith.constant 0 : index
    %3 = vector.load %arg3[%c0, %c0_1] : memref<256x128xbf16, #tpu.memory_space<vmem>>, vector<256x128xbf16>
    %c0_2 = arith.constant 0 : index
    %c0_3 = arith.constant 0 : index
    %4 = vector.load %arg6[%c0_2, %c0_3] : memref<128x256xf32, #tpu.memory_space<vmem>>, vector<128x256xf32>
    %5 = vector.extract_strided_slice %3 {offsets = [0, 0], sizes = [128, 128], strides = [1, 1]} : vector<256x128xbf16> to vector<128x128xbf16>
    %cst = arith.constant dense<0.000000e+00> : vector<128x256xf32>
    %6 = tpu.matmul %5, %3, %cst {dimension_numbers = #tpu.dot_dimension_numbers<[1], [1], [0], [0], [0, 0, 1, 0], [], []>} : vector<128x128xbf16>, vector<256x128xbf16>, vector<128x256xf32> -> vector<128x256xf32>
    %7 = arith.addf %4, %6 : vector<128x256xf32>
    %c0_4 = arith.constant 0 : index
    %c0_5 = arith.constant 0 : index
    %8 = vector.load %arg6[%c0_4, %c0_5] : memref<128x256xf32, #tpu.memory_space<vmem>>, vector<128x256xf32>
    tpu.vector_store %arg6[%c0_4, %c0_5], %7 {strides = array<i32>} : memref<128x256xf32, #tpu.memory_space<vmem>>, vector<128x256xf32>,
    %c0_i32_6 = arith.constant 0 : i32
    %9 = arith.cmpi eq, %arg0, %c0_i32_6 : i32
    %10 = arith.extui %9 : i1 to i32
    %c0_i32_7 = arith.constant 0 : i32
    %11 = arith.cmpi ne, %10, %c0_i32_7 : i32
    scf.if %11 {
      %c0_8 = arith.constant 0 : index
      %c0_9 = arith.constant 0 : index
      %12 = vector.load %arg4[%c0_8, %c0_9] : memref<128x128xf32, #tpu.memory_space<vmem>>, vector<128x128xf32>
      %c0_10 = arith.constant 0 : index
      %c0_11 = arith.constant 0 : index
      %13 = vector.load %arg6[%c0_10, %c0_11] : memref<128x256xf32, #tpu.memory_space<vmem>>, vector<128x128xf32>
      %14 = arith.subf %12, %13 : vector<128x128xf32>
      %c0_12 = arith.constant 0 : index
      %c0_13 = arith.constant 0 : index
      %15 = vector.load %arg4[%c0_12, %c0_13] : memref<128x128xf32, #tpu.memory_space<vmem>>, vector<128x128xf32>
      tpu.vector_store %arg4[%c0_12, %c0_13], %14 {strides = array<i32>} : memref<128x128xf32, #tpu.memory_space<vmem>>, vector<128x128xf32>,
      %c0_14 = arith.constant 0 : index
      %c128 = arith.constant 128 : index
      %16 = vector.load %arg6[%c0_14, %c128] : memref<128x256xf32, #tpu.memory_space<vmem>>, vector<128x128xf32>
      %c0_15 = arith.constant 0 : index
      %c0_16 = arith.constant 0 : index
      %17 = vector.load %arg5[%c0_15, %c0_16] : memref<128x128xf32, #tpu.memory_space<vmem>>, vector<128x128xf32>
      tpu.vector_store %arg5[%c0_15, %c0_16], %16 {strides = array<i32>} : memref<128x128xf32, #tpu.memory_space<vmem>>, vector<128x128xf32>,
    } else {
    }
    return
  }
  func.func @transform_0(%arg0: i32) -> i32 {
    %c0_i32 = arith.constant 0 : i32
    %c0_i32_0 = arith.constant 0 : i32
    return %c0_i32 : i32
  }
  func.func @transform_1(%arg0: i32) -> (i32, i32) {
    %c0_i32 = arith.constant 0 : i32
    %c0_i32_0 = arith.constant 0 : i32
    %c0_i32_1 = arith.constant 0 : i32
    return %c0_i32, %c0_i32_0 : i32, i32
  }
  func.func @transform_2(%arg0: i32) -> (i32, i32) {
    %c0_i32 = arith.constant 0 : i32
    %c0_i32_0 = arith.constant 0 : i32
    return %c0_i32, %arg0 : i32, i32
  }
  func.func @transform_3(%arg0: i32) -> (i32, i32) {
    %c0_i32 = arith.constant 0 : i32
    %c0_i32_0 = arith.constant 0 : i32
    %c0_i32_1 = arith.constant 0 : i32
    return %c0_i32, %c0_i32_0 : i32, i32
  }
  func.func @transform_4(%arg0: i32) -> (i32, i32) {
    %c0_i32 = arith.constant 0 : i32
    %c0_i32_0 = arith.constant 0 : i32
    %c0_i32_1 = arith.constant 0 : i32
    return %c0_i32, %c0_i32_0 : i32, i32
  }
}

</mosaic_0001>

<llo_original>
// kernel: custom-call.8
$region0: #{custom-call.8}
  %s0 = inlined_call_operand.vmem [shape: f32[16,16], index: 0, kind: input, shape index: {}]
  %s1 = inlined_call_operand.vmem [shape: f32[16,16], index: 1, kind: output, shape index: {}]
  $region1: #{custom-call.8} parent=0
    #allocation0 [shape = 'u8[8192]{0}', space=vmem, size = 0x2000, scoped, tag = 'operand span for operand 0']
    #allocation1 [shape = 'u8[8192]{0}', space=vmem, size = 0x2000, scoped, tag = 'operand span for operand 1']
    // Predicated region
    $region2: #{custom-call.8} parent=1 // pred_check
      _
    $region3: #{custom-call.8} parent=1 // pred_check_branch
      %3 = sbr.rel (0) target = $region5
    $region4: #{custom-call.8} parent=1 // pred_region
      // Predicated region
      $region6: #{custom-call.8} parent=4 // pred_check
        _
      $region7: #{custom-call.8} parent=4 // pred_check_branch
        %5 = sbr.rel (0) target = $region9
      $region8: #{custom-call.8} parent=4 // pred_region
        // Predicated region
        $region21: #{custom-call.8} parent=8 // pred_check
          _
        $region22: #{custom-call.8} parent=8 // pred_check_branch
          %22 = sbr.rel (0) target = $region24
        $region23: #{custom-call.8} parent=8 // pred_region
          loop: start=0, step=1, limit=1
          $region25: #{custom-call.8} parent=23 // loop_pre_header
            _
          $region26: #{custom-call.8} parent=23 // loop_header
            %s24 = sphi 0, %s28
            %p25 = scmp.ge.s32.totalorder %s24, 1
            %s29 = sphi %s0, %s0
            %s30 = sphi [#allocation0], [#allocation0]
          $region27: #{custom-call.8} parent=23 // loop_header_branch
            %27 = sbr.rel (%p25) target = $region31
          $region28: #{custom-call.8} parent=23 // loop_body
            %v31 = vld [vmem:[%s29] sm:$0xff]
            %32 = vst [vmem:[%s30] sm:$0xff] %v31
            %v33 = vld [vmem:[%s29 + $0x8] sm:$0xff]
            %34 = vst [vmem:[%s30 + $0x8] sm:$0xff] %v33
          $region29: #{custom-call.8} parent=23 // loop_footer
            %s28 = sadd.s32 1, %s24
          $region30: #{custom-call.8} parent=23 // loop_footer_branch
            %23 = sbr.rel target = $region26
          $region31: #{custom-call.8} parent=23 // loop_exit
            _
        $region24: #{custom-call.8} parent=8 // pred_fallthru
          _
        // Predicated region
        $region32: #{custom-call.8} parent=8 // pred_check
          _
        $region33: #{custom-call.8} parent=8 // pred_check_branch
          %36 = sbr.rel target = $region35
        $region34: #{custom-call.8} parent=8 // pred_region
          _
        $region35: #{custom-call.8} parent=8 // pred_fallthru
          _
      $region9: #{custom-call.8} parent=4 // pred_fallthru
        _
      // Predicated region
      $region10: #{custom-call.8} parent=4 // pred_check
        _
      $region11: #{custom-call.8} parent=4 // pred_check_branch
        %7 = sbr.rel target = $region13
      $region12: #{custom-call.8} parent=4 // pred_region
        loop: start=0, step=1, limit=1
        $region14: #{custom-call.8} parent=12 // loop_pre_header
          _
        $region15: #{custom-call.8} parent=12 // loop_header
          %s10 = sphi 0, %s14
          %p11 = scmp.ge.s32.totalorder %s10, 1
          %s15 = sphi %s0, %s0
          %s16 = sphi [#allocation0], [#allocation0]
        $region16: #{custom-call.8} parent=12 // loop_header_branch
          %13 = sbr.rel (%p11) target = $region20
        $region17: #{custom-call.8} parent=12 // loop_body
          %v17 = vld [vmem:[%s15] sm:$0xff]
          %18 = vst [vmem:[%s16] sm:$0xff] %v17
          %v19 = vld [vmem:[%s15 + $0x8] sm:$0xff]
          %20 = vst [vmem:[%s16 + $0x8] sm:$0xff] %v19
        $region18: #{custom-call.8} parent=12 // loop_footer
          %s14 = sadd.s32 1, %s10
        $region19: #{custom-call.8} parent=12 // loop_footer_branch
          %9 = sbr.rel target = $region15
        $region20: #{custom-call.8} parent=12 // loop_exit
          _
      $region13: #{custom-call.8} parent=4 // pred_fallthru
        _
    $region5: #{custom-call.8} parent=1 // pred_fallthru
      _
    %37 = vnop
    %38 = vst [vmem:[#allocation1] sm:$0xff] 0.0
    %s39 = scalar_lea.vmem [#allocation1], 8
    %40 = vst [vmem:[%s39] sm:$0xff] 0.0
    %vm41 = vcmask 7168
    %v42 = vld [vmem:[#allocation1] ss:$0 sm:$0xff]
    %v43 = vld [vmem:[#allocation0] ss:$0 sm:$0xff]
    %v44 = vmul.f32 %v42, %v42
    %45 = vadd.xlane.f32.xlu0 %v44
    %v46 = vpop.xlane.xlu0 %45
    %v47 = vsub.f32 %v43, %v46
    %v48 = vrsqrt.pop %v47
    %v49 = vld [vmem:[#allocation0] sm:$0xff]
    %v50 = vld [vmem:[#allocation1] sm:$0xff]
    %v51 = vmul.f32 %v50, %v42
    %52 = vadd.xlane.f32.xlu0 %v51
    %v53 = vpop.xlane.xlu0 %52
    %v54 = vsub.f32 %v49, %v53
    %v55 = vmul.f32 %v54, %v48
    %v56 = vsel %vm41, %v55, 0.0
    %v57 = vadd.f32 %v50, %v56
    %58 = vst [vmem:[#allocation1] sm:$0xff] %v57
    %s59 = scalar_lea.vmem [#allocation0], 8
    %v60 = vld [vmem:[%s59] sm:$0xff]
    %s61 = scalar_lea.vmem [#allocation1], 8
    %v62 = vld [vmem:[%s61] sm:$0xff]
    %v63 = vmul.f32 %v62, %v42
    %64 = vadd.xlane.f32.xlu0 %v63
    %v65 = vpop.xlane.xlu0 %64
    %v66 = vsub.f32 %v60, %v65
    %v67 = vmul.f32 %v66, %v48
    %v68 = vsel %vm41, %v67, 0.0
    %v69 = vadd.f32 %v62, %v68
    %s70 = scalar_lea.vmem [#allocation1], 8
    %71 = vst [vmem:[%s70] sm:$0xff] %v69
    %vm72 = vcmask 15368
    %s73 = scalar_lea.vmem [#allocation1], 1
    %v74 = vld [vmem:[%s73] ss:$0 sm:$0xff]
    %s75 = scalar_lea.vmem [#allocation0], 1
    %v76 = vld [vmem:[%s75] ss:$0 sm:$0xff]
    %v77 = vmul.f32 %v74, %v74
    %78 = vadd.xlane.f32.xlu0 %v77
    %v79 = vpop.xlane.xlu0 %78
    %v80 = vsub.f32 %v76, %v79
    %v81 = vrsqrt.pop %v80
    %v82 = vld [vmem:[#allocation0] sm:$0xff]
    %v83 = vld [vmem:[#allocation1] sm:$0xff]
    %v84 = vmul.f32 %v83, %v74
    %85 = vadd.xlane.f32.xlu0 %v84
    %v86 = vpop.xlane.xlu0 %85
    %v87 = vsub.f32 %v82, %v86
    %v88 = vmul.f32 %v87, %v81
    %vm89 = vcmask 1047553
    %vm90 = vmand %vm72, %vm89
    %v91 = vsel %vm90, %v88, 0.0
    %v92 = vadd.f32 %v83, %v91
    %93 = vst [vmem:[#allocation1] sm:$0xff] %v92
    %s94 = scalar_lea.vmem [#allocation0], 8
    %v95 = vld [vmem:[%s94] sm:$0xff]
    %s96 = scalar_lea.vmem [#allocation1], 8
    %v97 = vld [vmem:[%s96] sm:$0xff]
    %v98 = vmul.f32 %v97, %v74
    %99 = vadd.xlane.f32.xlu0 %v98
    %v100 = vpop.xlane.xlu0 %99
    %v101 = vsub.f32 %v95, %v100
    %v102 = vmul.f32 %v101, %v81
    %v103 = vsel %vm72, %v102, 0.0
    %v104 = vadd.f32 %v97, %v103
    %s105 = scalar_lea.vmem [#allocation1], 8
    %106 = vst [vmem:[%s105] sm:$0xff] %v104
    %vm107 = vcmask 23568
    %s108 = scalar_lea.vmem [#allocation1], 2
    %v109 = vld [vmem:[%s108] ss:$0 sm:$0xff]
    %s110 = scalar_lea.vmem [#allocation0], 2
    %v111 = vld [vmem:[%s110] ss:$0 sm:$0xff]
    %v112 = vmul.f32 %v109, %v109
    %113 = vadd.xlane.f32.xlu0 %v112
    %v114 = vpop.xlane.xlu0 %113
    %v115 = vsub.f32 %v111, %v114
    %v116 = vrsqrt.pop %v115
    %v117 = vld [vmem:[#allocation0] sm:$0xff]
    %v118 = vld [vmem:[#allocation1] sm:$0xff]
    %v119 = vmul.f32 %v118, %v109
    %120 = vadd.xlane.f32.xlu0 %v119
    %v121 = vpop.xlane.xlu0 %120
    %v122 = vsub.f32 %v117, %v121
    %v123 = vmul.f32 %v122, %v116
    %vm124 = vcmask 1047554
    %vm125 = vmand %vm107, %vm124
    %v126 = vsel %vm125, %v123, 0.0
    %v127 = vadd.f32 %v118, %v126
    %128 = vst [vmem:[#allocation1] sm:$0xff] %v127
    %s129 = scalar_lea.vmem [#allocation0], 8
    %v130 = vld [vmem:[%s129] sm:$0xff]
    %s131 = scalar_lea.vmem [#allocation1], 8
    %v132 = vld [vmem:[%s131] sm:$0xff]
    %v133 = vmul.f32 %v132, %v109
    %134 = vadd.xlane.f32.xlu0 %v133
    %v135 = vpop.xlane.xlu0 %134
    %v136 = vsub.f32 %v130, %v135
    %v137 = vmul.f32 %v136, %v116
    %v138 = vsel %vm107, %v137, 0.0
    %v139 = vadd.f32 %v132, %v138
    %s140 = scalar_lea.vmem [#allocation1], 8
    %141 = vst [vmem:[%s140] sm:$0xff] %v139
    %vm142 = vcmask 31768
    %s143 = scalar_lea.vmem [#allocation1], 3
    %v144 = vld [vmem:[%s143] ss:$0 sm:$0xff]
    %s145 = scalar_lea.vmem [#allocation0], 3
    %v146 = vld [vmem:[%s145] ss:$0 sm:$0xff]
    %v147 = vmul.f32 %v144, %v144
    %148 = vadd.xlane.f32.xlu0 %v147
    %v149 = vpop.xlane.xlu0 %148
    %v150 = vsub.f32 %v146, %v149
    %v151 = vrsqrt.pop %v150
    %v152 = vld [vmem:[#allocation0] sm:$0xff]
    %v153 = vld [vmem:[#allocation1] sm:$0xff]
    %v154 = vmul.f32 %v153, %v144
    %155 = vadd.xlane.f32.xlu0 %v154
    %v156 = vpop.xlane.xlu0 %155
    %v157 = vsub.f32 %v152, %v156
    %v158 = vmul.f32 %v157, %v151
    %vm159 = vcmask 1047555
    %vm160 = vmand %vm142, %vm159
    %v161 = vsel %vm160, %v158, 0.0
    %v162 = vadd.f32 %v153, %v161
    %163 = vst [vmem:[#allocation1] sm:$0xff] %v162
    %s164 = scalar_lea.vmem [#allocation0], 8
    %v165 = vld [vmem:[%s164] sm:$0xff]
    %s166 = scalar_lea.vmem [#allocation1], 8
    %v167 = vld [vmem:[%s166] sm:$0xff]
    %v168 = vmul.f32 %v167, %v144
    %169 = vadd.xlane.f32.xlu0 %v168
    %v170 = vpop.xlane.xlu0 %169
    %v171 = vsub.f32 %v165, %v170
    %v172 = vmul.f32 %v171, %v151
    %v173 = vsel %vm142, %v172, 0.0
    %v174 = vadd.f32 %v167, %v173
    %s175 = scalar_lea.vmem [#allocation1], 8
    %176 = vst [vmem:[%s175] sm:$0xff] %v174
    %vm177 = vcmask 39968
    %s178 = scalar_lea.vmem [#allocation1], 4
    %v179 = vld [vmem:[%s178] ss:$0 sm:$0xff]
    %s180 = scalar_lea.vmem [#allocation0], 4
    %v181 = vld [vmem:[%s180] ss:$0 sm:$0xff]
    %v182 = vmul.f32 %v179, %v179
    %183 = vadd.xlane.f32.xlu0 %v182
    %v184 = vpop.xlane.xlu0 %183
    %v185 = vsub.f32 %v181, %v184
    %v186 = vrsqrt.pop %v185
    %v187 = vld [vmem:[#allocation0] sm:$0xff]
    %v188 = vld [vmem:[#allocation1] sm:$0xff]
    %v189 = vmul.f32 %v188, %v179
    %190 = vadd.xlane.f32.xlu0 %v189
    %v191 = vpop.xlane.xlu0 %190
    %v192 = vsub.f32 %v187, %v191
    %v193 = vmul.f32 %v192, %v186
    %vm194 = vcmask 1047556
    %vm195 = vmand %vm177, %vm194
    %v196 = vsel %vm195, %v193, 0.0
    %v197 = vadd.f32 %v188, %v196
    %198 = vst [vmem:[#allocation1] sm:$0xff] %v197
    %s199 = scalar_lea.vmem [#allocation0], 8
    %v200 = vld [vmem:[%s199] sm:$0xff]
    %s201 = scalar_lea.vmem [#allocation1], 8
    %v202 = vld [vmem:[%s201] sm:$0xff]
    %v203 = vmul.f32 %v202, %v179
    %204 = vadd.xlane.f32.xlu0 %v203
    %v205 = vpop.xlane.xlu0 %204
    %v206 = vsub.f32 %v200, %v205
    %v207 = vmul.f32 %v206, %v186
    %v208 = vsel %vm177, %v207, 0.0
    %v209 = vadd.f32 %v202, %v208
    %s210 = scalar_lea.vmem [#allocation1], 8
    %211 = vst [vmem:[%s210] sm:$0xff] %v209
    %vm212 = vcmask 48168
    %s213 = scalar_lea.vmem [#allocation1], 5
    %v214 = vld [vmem:[%s213] ss:$0 sm:$0xff]
    %s215 = scalar_lea.vmem [#allocation0], 5
    %v216 = vld [vmem:[%s215] ss:$0 sm:$0xff]
    %v217 = vmul.f32 %v214, %v214
    %218 = vadd.xlane.f32.xlu0 %v217
    %v219 = vpop.xlane.xlu0 %218
    %v220 = vsub.f32 %v216, %v219
    %v221 = vrsqrt.pop %v220
    %v222 = vld [vmem:[#allocation0] sm:$0xff]
    %v223 = vld [vmem:[#allocation1] sm:$0xff]
    %v224 = vmul.f32 %v223, %v214
    %225 = vadd.xlane.f32.xlu0 %v224
    %v226 = vpop.xlane.xlu0 %225
    %v227 = vsub.f32 %v222, %v226
    %v228 = vmul.f32 %v227, %v221
    %vm229 = vcmask 1047557
    %vm230 = vmand %vm212, %vm229
    %v231 = vsel %vm230, %v228, 0.0
    %v232 = vadd.f32 %v223, %v231
    %233 = vst [vmem:[#allocation1] sm:$0xff] %v232
    %s234 = scalar_lea.vmem [#allocation0], 8
    %v235 = vld [vmem:[%s234] sm:$0xff]
    %s236 = scalar_lea.vmem [#allocation1], 8
    %v237 = vld [vmem:[%s236] sm:$0xff]
    %v238 = vmul.f32 %v237, %v214
    %239 = vadd.xlane.f32.xlu0 %v238
    %v240 = vpop.xlane.xlu0 %239
    %v241 = vsub.f32 %v235, %v240
    %v242 = vmul.f32 %v241, %v221
    %v243 = vsel %vm212, %v242, 0.0
    %v244 = vadd.f32 %v237, %v243
    %s245 = scalar_lea.vmem [#allocation1], 8
    %246 = vst [vmem:[%s245] sm:$0xff] %v244
    %vm247 = vcmask 56368
    %s248 = scalar_lea.vmem [#allocation1], 6
    %v249 = vld [vmem:[%s248] ss:$0 sm:$0xff]
    %s250 = scalar_lea.vmem [#allocation0], 6
    %v251 = vld [vmem:[%s250] ss:$0 sm:$0xff]
    %v252 = vmul.f32 %v249, %v249
    %253 = vadd.xlane.f32.xlu0 %v252
    %v254 = vpop.xlane.xlu0 %253
    %v255 = vsub.f32 %v251, %v254
    %v256 = vrsqrt.pop %v255
    %v257 = vld [vmem:[#allocation0] sm:$0xff]
    %v258 = vld [vmem:[#allocation1] sm:$0xff]
    %v259 = vmul.f32 %v258, %v249
    %260 = vadd.xlane.f32.xlu0 %v259
    %v261 = vpop.xlane.xlu0 %260
    %v262 = vsub.f32 %v257, %v261
    %v263 = vmul.f32 %v262, %v256
    %vm264 = vcmask 1047558
    %vm265 = vmand %vm247, %vm264
    %v266 = vsel %vm265, %v263, 0.0
    %v267 = vadd.f32 %v258, %v266
    %268 = vst [vmem:[#allocation1] sm:$0xff] %v267
    %s269 = scalar_lea.vmem [#allocation0], 8
    %v270 = vld [vmem:[%s269] sm:$0xff]
    %s271 = scalar_lea.vmem [#allocation1], 8
    %v272 = vld [vmem:[%s271] sm:$0xff]
    %v273 = vmul.f32 %v272, %v249
    %274 = vadd.xlane.f32.xlu0 %v273
    %v275 = vpop.xlane.xlu0 %274
    %v276 = vsub.f32 %v270, %v275
    %v277 = vmul.f32 %v276, %v256
    %v278 = vsel %vm247, %v277, 0.0
    %v279 = vadd.f32 %v272, %v278
    %s280 = scalar_lea.vmem [#allocation1], 8
    %281 = vst [vmem:[%s280] sm:$0xff] %v279
    %vm282 = vcmask 64568
    %s283 = scalar_lea.vmem [#allocation1], 7
    %v284 = vld [vmem:[%s283] ss:$0 sm:$0xff]
    %s285 = scalar_lea.vmem [#allocation0], 7
    %v286 = vld [vmem:[%s285] ss:$0 sm:$0xff]
    %v287 = vmul.f32 %v284, %v284
    %288 = vadd.xlane.f32.xlu0 %v287
    %v289 = vpop.xlane.xlu0 %288
    %v290 = vsub.f32 %v286, %v289
    %v291 = vrsqrt.pop %v290
    %v292 = vld [vmem:[#allocation0] sm:$0xff]
    %v293 = vld [vmem:[#allocation1] sm:$0xff]
    %v294 = vmul.f32 %v293, %v284
    %295 = vadd.xlane.f32.xlu0 %v294
    %v296 = vpop.xlane.xlu0 %295
    %v297 = vsub.f32 %v292, %v296
    %v298 = vmul.f32 %v297, %v291
    %vm299 = vcmask 1047559
    %vm300 = vmand %vm282, %vm299
    %v301 = vsel %vm300, %v298, 0.0
    %v302 = vadd.f32 %v293, %v301
    %303 = vst [vmem:[#allocation1] sm:$0xff] %v302
    %s304 = scalar_lea.vmem [#allocation0], 8
    %v305 = vld [vmem:[%s304] sm:$0xff]
    %s306 = scalar_lea.vmem [#allocation1], 8
    %v307 = vld [vmem:[%s306] sm:$0xff]
    %v308 = vmul.f32 %v307, %v284
    %309 = vadd.xlane.f32.xlu0 %v308
    %v310 = vpop.xlane.xlu0 %309
    %v311 = vsub.f32 %v305, %v310
    %v312 = vmul.f32 %v311, %v291
    %v313 = vsel %vm282, %v312, 0.0
    %v314 = vadd.f32 %v307, %v313
    %s315 = scalar_lea.vmem [#allocation1], 8
    %316 = vst [vmem:[%s315] sm:$0xff] %v314
    %vm317 = vcmask 72768
    %s318 = scalar_lea.vmem [#allocation1], 8
    %v319 = vld [vmem:[%s318] ss:$0 sm:$0xff]
    %s320 = scalar_lea.vmem [#allocation0], 8
    %v321 = vld [vmem:[%s320] ss:$0 sm:$0xff]
    %v322 = vmul.f32 %v319, %v319
    %323 = vadd.xlane.f32.xlu0 %v322
    %v324 = vpop.xlane.xlu0 %323
    %v325 = vsub.f32 %v321, %v324
    %v326 = vrsqrt.pop %v325
    %s327 = scalar_lea.vmem [#allocation0], 8
    %v328 = vld [vmem:[%s327] sm:$0xff]
    %s329 = scalar_lea.vmem [#allocation1], 8
    %v330 = vld [vmem:[%s329] sm:$0xff]
    %v331 = vmul.f32 %v330, %v319
    %332 = vadd.xlane.f32.xlu0 %v331
    %v333 = vpop.xlane.xlu0 %332
    %v334 = vsub.f32 %v328, %v333
    %v335 = vmul.f32 %v334, %v326
    %v336 = vsel %vm317, %v335, 0.0
    %v337 = vadd.f32 %v330, %v336
    %s338 = scalar_lea.vmem [#allocation1], 8
    %339 = vst [vmem:[%s338] sm:$0xff] %v337
    %vm340 = vcmask 80968
    %s341 = scalar_lea.vmem [#allocation1], 9
    %v342 = vld [vmem:[%s341] ss:$0 sm:$0xff]
    %s343 = scalar_lea.vmem [#allocation0], 9
    %v344 = vld [vmem:[%s343] ss:$0 sm:$0xff]
    %v345 = vmul.f32 %v342, %v342
    %346 = vadd.xlane.f32.xlu0 %v345
    %v347 = vpop.xlane.xlu0 %346
    %v348 = vsub.f32 %v344, %v347
    %v349 = vrsqrt.pop %v348
    %s350 = scalar_lea.vmem [#allocation0], 8
    %v351 = vld [vmem:[%s350] sm:$0xff]
    %s352 = scalar_lea.vmem [#allocation1], 8
    %v353 = vld [vmem:[%s352] sm:$0xff]
    %v354 = vmul.f32 %v353, %v342
    %355 = vadd.xlane.f32.xlu0 %v354
    %v356 = vpop.xlane.xlu0 %355
    %v357 = vsub.f32 %v351, %v356
    %v358 = vmul.f32 %v357, %v349
    %vm359 = vcmask 1047553
    %vm360 = vmand %vm340, %vm359
    %v361 = vsel %vm360, %v358, 0.0
    %v362 = vadd.f32 %v353, %v361
    %s363 = scalar_lea.vmem [#allocation1], 8
    %364 = vst [vmem:[%s363] sm:$0xff] %v362
    %vm365 = vcmask 89168
    %s366 = scalar_lea.vmem [#allocation1], 10
    %v367 = vld [vmem:[%s366] ss:$0 sm:$0xff]
    %s368 = scalar_lea.vmem [#allocation0], 10
    %v369 = vld [vmem:[%s368] ss:$0 sm:$0xff]
    %v370 = vmul.f32 %v367, %v367
    %371 = vadd.xlane.f32.xlu0 %v370
    %v372 = vpop.xlane.xlu0 %371
    %v373 = vsub.f32 %v369, %v372
    %v374 = vrsqrt.pop %v373
    %s375 = scalar_lea.vmem [#allocation0], 8
    %v376 = vld [vmem:[%s375] sm:$0xff]
    %s377 = scalar_lea.vmem [#allocation1], 8
    %v378 = vld [vmem:[%s377] sm:$0xff]
    %v379 = vmul.f32 %v378, %v367
    %380 = vadd.xlane.f32.xlu0 %v379
    %v381 = vpop.xlane.xlu0 %380
    %v382 = vsub.f32 %v376, %v381
    %v383 = vmul.f32 %v382, %v374
    %vm384 = vcmask 1047554
    %vm385 = vmand %vm365, %vm384
    %v386 = vsel %vm385, %v383, 0.0
    %v387 = vadd.f32 %v378, %v386
    %s388 = scalar_lea.vmem [#allocation1], 8
    %389 = vst [vmem:[%s388] sm:$0xff] %v387
    %vm390 = vcmask 97368
    %s391 = scalar_lea.vmem [#allocation1], 11
    %v392 = vld [vmem:[%s391] ss:$0 sm:$0xff]
    %s393 = scalar_lea.vmem [#allocation0], 11
    %v394 = vld [vmem:[%s393] ss:$0 sm:$0xff]
    %v395 = vmul.f32 %v392, %v392
    %396 = vadd.xlane.f32.xlu0 %v395
    %v397 = vpop.xlane.xlu0 %396
    %v398 = vsub.f32 %v394, %v397
    %v399 = vrsqrt.pop %v398
    %s400 = scalar_lea.vmem [#allocation0], 8
    %v401 = vld [vmem:[%s400] sm:$0xff]
    %s402 = scalar_lea.vmem [#allocation1], 8
    %v403 = vld [vmem:[%s402] sm:$0xff]
    %v404 = vmul.f32 %v403, %v392
    %405 = vadd.xlane.f32.xlu0 %v404
    %v406 = vpop.xlane.xlu0 %405
    %v407 = vsub.f32 %v401, %v406
    %v408 = vmul.f32 %v407, %v399
    %vm409 = vcmask 1047555
    %vm410 = vmand %vm390, %vm409
    %v411 = vsel %vm410, %v408, 0.0
    %v412 = vadd.f32 %v403, %v411
    %s413 = scalar_lea.vmem [#allocation1], 8
    %414 = vst [vmem:[%s413] sm:$0xff] %v412
    %vm415 = vcmask 105568
    %s416 = scalar_lea.vmem [#allocation1], 12
    %v417 = vld [vmem:[%s416] ss:$0 sm:$0xff]
    %s418 = scalar_lea.vmem [#allocation0], 12
    %v419 = vld [vmem:[%s418] ss:$0 sm:$0xff]
    %v420 = vmul.f32 %v417, %v417
    %421 = vadd.xlane.f32.xlu0 %v420
    %v422 = vpop.xlane.xlu0 %421
    %v423 = vsub.f32 %v419, %v422
    %v424 = vrsqrt.pop %v423
    %s425 = scalar_lea.vmem [#allocation0], 8
    %v426 = vld [vmem:[%s425] sm:$0xff]
    %s427 = scalar_lea.vmem [#allocation1], 8
    %v428 = vld [vmem:[%s427] sm:$0xff]
    %v429 = vmul.f32 %v428, %v417
    %430 = vadd.xlane.f32.xlu0 %v429
    %v431 = vpop.xlane.xlu0 %430
    %v432 = vsub.f32 %v426, %v431
    %v433 = vmul.f32 %v432, %v424
    %vm434 = vcmask 1047556
    %vm435 = vmand %vm415, %vm434
    %v436 = vsel %vm435, %v433, 0.0
    %v437 = vadd.f32 %v428, %v436
    %s438 = scalar_lea.vmem [#allocation1], 8
    %439 = vst [vmem:[%s438] sm:$0xff] %v437
    %vm440 = vcmask 113768
    %s441 = scalar_lea.vmem [#allocation1], 13
    %v442 = vld [vmem:[%s441] ss:$0 sm:$0xff]
    %s443 = scalar_lea.vmem [#allocation0], 13
    %v444 = vld [vmem:[%s443] ss:$0 sm:$0xff]
    %v445 = vmul.f32 %v442, %v442
    %446 = vadd.xlane.f32.xlu0 %v445
    %v447 = vpop.xlane.xlu0 %446
    %v448 = vsub.f32 %v444, %v447
    %v449 = vrsqrt.pop %v448
    %s450 = scalar_lea.vmem [#allocation0], 8
    %v451 = vld [vmem:[%s450] sm:$0xff]
    %s452 = scalar_lea.vmem [#allocation1], 8
    %v453 = vld [vmem:[%s452] sm:$0xff]
    %v454 = vmul.f32 %v453, %v442
    %455 = vadd.xlane.f32.xlu0 %v454
    %v456 = vpop.xlane.xlu0 %455
    %v457 = vsub.f32 %v451, %v456
    %v458 = vmul.f32 %v457, %v449
    %vm459 = vcmask 1047557
    %vm460 = vmand %vm440, %vm459
    %v461 = vsel %vm460, %v458, 0.0
    %v462 = vadd.f32 %v453, %v461
    %s463 = scalar_lea.vmem [#allocation1], 8
    %464 = vst [vmem:[%s463] sm:$0xff] %v462
    %vm465 = vcmask 121968
    %s466 = scalar_lea.vmem [#allocation1], 14
    %v467 = vld [vmem:[%s466] ss:$0 sm:$0xff]
    %s468 = scalar_lea.vmem [#allocation0], 14
    %v469 = vld [vmem:[%s468] ss:$0 sm:$0xff]
    %v470 = vmul.f32 %v467, %v467
    %471 = vadd.xlane.f32.xlu0 %v470
    %v472 = vpop.xlane.xlu0 %471
    %v473 = vsub.f32 %v469, %v472
    %v474 = vrsqrt.pop %v473
    %s475 = scalar_lea.vmem [#allocation0], 8
    %v476 = vld [vmem:[%s475] sm:$0xff]
    %s477 = scalar_lea.vmem [#allocation1], 8
    %v478 = vld [vmem:[%s477] sm:$0xff]
    %v479 = vmul.f32 %v478, %v467
    %480 = vadd.xlane.f32.xlu0 %v479
    %v481 = vpop.xlane.xlu0 %480
    %v482 = vsub.f32 %v476, %v481
    %v483 = vmul.f32 %v482, %v474
    %vm484 = vcmask 1047558
    %vm485 = vmand %vm465, %vm484
    %v486 = vsel %vm485, %v483, 0.0
    %v487 = vadd.f32 %v478, %v486
    %s488 = scalar_lea.vmem [#allocation1], 8
    %489 = vst [vmem:[%s488] sm:$0xff] %v487
    %vm490 = vcmask 130168
    %s491 = scalar_lea.vmem [#allocation1], 15
    %v492 = vld [vmem:[%s491] ss:$0 sm:$0xff]
    %s493 = scalar_lea.vmem [#allocation0], 15
    %v494 = vld [vmem:[%s493] ss:$0 sm:$0xff]
    %v495 = vmul.f32 %v492, %v492
    %496 = vadd.xlane.f32.xlu0 %v495
    %v497 = vpop.xlane.xlu0 %496
    %v498 = vsub.f32 %v494, %v497
    %v499 = vrsqrt.pop %v498
    %s500 = scalar_lea.vmem [#allocation0], 8
    %v501 = vld [vmem:[%s500] sm:$0xff]
    %s502 = scalar_lea.vmem [#allocation1], 8
    %v503 = vld [vmem:[%s502] sm:$0xff]
    %v504 = vmul.f32 %v503, %v492
    %505 = vadd.xlane.f32.xlu0 %v504
    %v506 = vpop.xlane.xlu0 %505
    %v507 = vsub.f32 %v501, %v506
    %v508 = vmul.f32 %v507, %v499
    %vm509 = vcmask 1047559
    %vm510 = vmand %vm490, %vm509
    %v511 = vsel %vm510, %v508, 0.0
    %v512 = vadd.f32 %v503, %v511
    %s513 = scalar_lea.vmem [#allocation1], 8
    %514 = vst [vmem:[%s513] sm:$0xff] %v512
    // Predicated region
    $region36: #{custom-call.8} parent=1 // pred_check
      _
    $region37: #{custom-call.8} parent=1 // pred_check_branch
      %516 = sbr.rel (0) target = $region39
    $region38: #{custom-call.8} parent=1 // pred_region
      // Predicated region
      $region40: #{custom-call.8} parent=38 // pred_check
        _
      $region41: #{custom-call.8} parent=38 // pred_check_branch
        %518 = sbr.rel (0) target = $region43
      $region42: #{custom-call.8} parent=38 // pred_region
        // Predicated region
        $region55: #{custom-call.8} parent=42 // pred_check
          _
        $region56: #{custom-call.8} parent=42 // pred_check_branch
          %535 = sbr.rel (0) target = $region58
        $region57: #{custom-call.8} parent=42 // pred_region
          loop: start=0, step=1, limit=1
          $region59: #{custom-call.8} parent=57 // loop_pre_header
            _
          $region60: #{custom-call.8} parent=57 // loop_header
            %s537 = sphi 0, %s541
            %p538 = scmp.ge.s32.totalorder %s537, 1
            %s542 = sphi [#allocation1], [#allocation1]
            %s543 = sphi %s1, %s1
          $region61: #{custom-call.8} parent=57 // loop_header_branch
            %540 = sbr.rel (%p538) target = $region65
          $region62: #{custom-call.8} parent=57 // loop_body
            %v544 = vld [vmem:[%s542] sm:$0xff]
            %545 = vst [vmem:[%s543] sm:$0xff] %v544
            %v546 = vld [vmem:[%s542 + $0x8] sm:$0xff]
            %547 = vst [vmem:[%s543 + $0x8] sm:$0xff] %v546
          $region63: #{custom-call.8} parent=57 // loop_footer
            %s541 = sadd.s32 1, %s537
          $region64: #{custom-call.8} parent=57 // loop_footer_branch
            %536 = sbr.rel target = $region60
          $region65: #{custom-call.8} parent=57 // loop_exit
            _
        $region58: #{custom-call.8} parent=42 // pred_fallthru
          _
        // Predicated region
        $region66: #{custom-call.8} parent=42 // pred_check
          _
        $region67: #{custom-call.8} parent=42 // pred_check_branch
          %549 = sbr.rel target = $region69
        $region68: #{custom-call.8} parent=42 // pred_region
          _
        $region69: #{custom-call.8} parent=42 // pred_fallthru
          _
      $region43: #{custom-call.8} parent=38 // pred_fallthru
        _
      // Predicated region
      $region44: #{custom-call.8} parent=38 // pred_check
        _
      $region45: #{custom-call.8} parent=38 // pred_check_branch
        %520 = sbr.rel target = $region47
      $region46: #{custom-call.8} parent=38 // pred_region
        loop: start=0, step=1, limit=1
        $region48: #{custom-call.8} parent=46 // loop_pre_header
          _
        $region49: #{custom-call.8} parent=46 // loop_header
          %s523 = sphi 0, %s527
          %p524 = scmp.ge.s32.totalorder %s523, 1
          %s528 = sphi [#allocation1], [#allocation1]
          %s529 = sphi %s1, %s1
        $region50: #{custom-call.8} parent=46 // loop_header_branch
          %526 = sbr.rel (%p524) target = $region54
        $region51: #{custom-call.8} parent=46 // loop_body
          %v530 = vld [vmem:[%s528] sm:$0xff]
          %531 = vst [vmem:[%s529] sm:$0xff] %v530
          %v532 = vld [vmem:[%s528 + $0x8] sm:$0xff]
          %533 = vst [vmem:[%s529 + $0x8] sm:$0xff] %v532
        $region52: #{custom-call.8} parent=46 // loop_footer
          %s527 = sadd.s32 1, %s523
        $region53: #{custom-call.8} parent=46 // loop_footer_branch
          %522 = sbr.rel target = $region49
        $region54: #{custom-call.8} parent=46 // loop_exit
          _
      $region47: #{custom-call.8} parent=38 // pred_fallthru
        _
    $region39: #{custom-call.8} parent=1 // pred_fallthru
      _
    %550 = vnop

// kernel: custom-call.9
$region0: #{custom-call.9}
  %s0 = inlined_call_operand.vmem [shape: f32[1,16,16], index: 0, kind: input, shape index: {}]
  %s1 = inlined_call_operand.vmem [shape: f32[1,16,16], index: 1, kind: output, shape index: {}]
  $region1: #{custom-call.9} parent=0
    #allocation0 [shape = 'u8[8192]{0}', space=vmem, size = 0x2000, scoped, tag = 'operand span for operand 0']
    #allocation1 [shape = 'u8[8192]{0}', space=vmem, size = 0x2000, scoped, tag = 'operand span for operand 1']
    #allocation2 [shape = 'f32[16,16]{1,0}', space=vmem, size = 0x2000, scoped, tag = 'rescaled input a']
    // Predicated region
    $region2: #{custom-call.9} parent=1 // pred_check
      _
    $region3: #{custom-call.9} parent=1 // pred_check_branch
      %3 = sbr.rel (0) target = $region5
    $region4: #{custom-call.9} parent=1 // pred_region
      // Predicated region
      $region6: #{custom-call.9} parent=4 // pred_check
        _
      $region7: #{custom-call.9} parent=4 // pred_check_branch
        %5 = sbr.rel (0) target = $region9
      $region8: #{custom-call.9} parent=4 // pred_region
        // Predicated region
        $region21: #{custom-call.9} parent=8 // pred_check
          _
        $region22: #{custom-call.9} parent=8 // pred_check_branch
          %22 = sbr.rel (0) target = $region24
        $region23: #{custom-call.9} parent=8 // pred_region
          loop: start=0, step=1, limit=1
          $region25: #{custom-call.9} parent=23 // loop_pre_header
            _
          $region26: #{custom-call.9} parent=23 // loop_header
            %s24 = sphi 0, %s28
            %p25 = scmp.ge.s32.totalorder %s24, 1
            %s29 = sphi %s0, %s0
            %s30 = sphi [#allocation0], [#allocation0]
          $region27: #{custom-call.9} parent=23 // loop_header_branch
            %27 = sbr.rel (%p25) target = $region31
          $region28: #{custom-call.9} parent=23 // loop_body
            %v31 = vld [vmem:[%s29] sm:$0xff]
            %32 = vst [vmem:[%s30] sm:$0xff] %v31
            %v33 = vld [vmem:[%s29 + $0x8] sm:$0xff]
            %34 = vst [vmem:[%s30 + $0x8] sm:$0xff] %v33
          $region29: #{custom-call.9} parent=23 // loop_footer
            %s28 = sadd.s32 1, %s24
          $region30: #{custom-call.9} parent=23 // loop_footer_branch
            %23 = sbr.rel target = $region26
          $region31: #{custom-call.9} parent=23 // loop_exit
            _
        $region24: #{custom-call.9} parent=8 // pred_fallthru
          _
        // Predicated region
        $region32: #{custom-call.9} parent=8 // pred_check
          _
        $region33: #{custom-call.9} parent=8 // pred_check_branch
          %36 = sbr.rel target = $region35
        $region34: #{custom-call.9} parent=8 // pred_region
          _
        $region35: #{custom-call.9} parent=8 // pred_fallthru
          _
      $region9: #{custom-call.9} parent=4 // pred_fallthru
        _
      // Predicated region
      $region10: #{custom-call.9} parent=4 // pred_check
        _
      $region11: #{custom-call.9} parent=4 // pred_check_branch
        %7 = sbr.rel target = $region13
      $region12: #{custom-call.9} parent=4 // pred_region
        loop: start=0, step=1, limit=1
        $region14: #{custom-call.9} parent=12 // loop_pre_header
          _
        $region15: #{custom-call.9} parent=12 // loop_header
          %s10 = sphi 0, %s14
          %p11 = scmp.ge.s32.totalorder %s10, 1
          %s15 = sphi %s0, %s0
          %s16 = sphi [#allocation0], [#allocation0]
        $region16: #{custom-call.9} parent=12 // loop_header_branch
          %13 = sbr.rel (%p11) target = $region20
        $region17: #{custom-call.9} parent=12 // loop_body
          %v17 = vld [vmem:[%s15] sm:$0xff]
          %18 = vst [vmem:[%s16] sm:$0xff] %v17
          %v19 = vld [vmem:[%s15 + $0x8] sm:$0xff]
          %20 = vst [vmem:[%s16 + $0x8] sm:$0xff] %v19
        $region18: #{custom-call.9} parent=12 // loop_footer
          %s14 = sadd.s32 1, %s10
        $region19: #{custom-call.9} parent=12 // loop_footer_branch
          %9 = sbr.rel target = $region15
        $region20: #{custom-call.9} parent=12 // loop_exit
          _
      $region13: #{custom-call.9} parent=4 // pred_fallthru
        _
    $region5: #{custom-call.9} parent=1 // pred_fallthru
      _
    %37 = vnop
    %v38 = vlaneseq
    %v39 = vand.u32 %v38, 127
    %vm40 = vcmp.lt.s32.totalorder %v39, 16
    %v41 = vlaneseq
    %v42 = vshrl.u32 %v41, 7
    %vm44 = vcmp.eq.s32.totalorder %v42, %v39
    %v45 = vld [vmem:[#allocation0] sm:$0xff]
    %v46 = vsel %vm44, %v45, 0.0
    %47 = vadd.xlane.f32.xlu0 %v46
    %v48 = vpop.xlane.xlu0 %47
    %vm49 = vcmp.ge.s32.totalorder %v42, %v39
    %vm50 = vmand %vm49, %vm40
    %v51 = vsel %vm50, %v45, 0.0
    %v52 = vrcp.pop %v48
    %v53 = vmul.f32 %v51, %v52
    %54 = vst [vmem:[#allocation2] sm:$0xff] %v53
    %s55 = scalar_lea.vmem [#allocation0], 8
    %s56 = scalar_lea.vmem [#allocation2], 8
    %v57 = vlaneseq
    %v58 = vshrl.u32 %v57, 7
    %v59 = vadd.s32 %v58, 8
    %vm60 = vcmp.eq.s32.totalorder %v59, %v39
    %v61 = vld [vmem:[%s55] sm:$0xff]
    %v62 = vsel %vm60, %v61, 0.0
    %63 = vadd.xlane.f32.xlu0 %v62
    %v64 = vpop.xlane.xlu0 %63
    %vm65 = vcmp.ge.s32.totalorder %v59, %v39
    %vm66 = vmand %vm65, %vm40
    %v67 = vsel %vm66, %v61, 0.0
    %v68 = vrcp.pop %v64
    %v69 = vmul.f32 %v67, %v68
    %70 = vst [vmem:[%s56] sm:$0xff] %v69
    %v71 = vlaneseq
    %v72 = vand.u32 %v71, 127
    %v73 = vlaneseq
    %v74 = vshrl.u32 %v73, 7
    %vm76 = vcmp.eq.s32.totalorder %v72, %v74
    %v77 = vlaneseq
    %v78 = vand.u32 %v77, 127
    %vm79 = vcmp.eq.s32.totalorder %v78, 0
    %v80 = vsel %vm79, 1.0, -1.0
    %v81 = vsel %vm76, %v80, 0.0
    %v82 = vlaneseq
    %v83 = vand.u32 %v82, 127
    %v84 = vlaneseq
    %v85 = vshrl.u32 %v84, 7
    %v86 = vadd.s32 %v85, 8
    %vm87 = vcmp.eq.s32.totalorder %v83, %v86
    %v88 = vsel %vm87, -1.0, 0.0
    %s89 = scalar_lea.vmem [#allocation2], 1
    %v90 = vld [vmem:[%s89] ss:$0 sm:$0xff]
    %v91 = vxor.u32 %v90, 2147483648
    %v92 = vlaneseq
    %v93 = vand.u32 %v92, 127
    %vm94 = vcmp.eq.s32.totalorder %v93, 1
    %v95 = vmul.f32 %v91, %v81
    %96 = vadd.xlane.f32.xlu0 %v95
    %v97 = vpop.xlane.xlu0 %96
    %v98 = vsel %vm94, %v97, %v81
    %s99 = scalar_lea.vmem [#allocation2], 2
    %v100 = vld [vmem:[%s99] ss:$0 sm:$0xff]
    %v101 = vxor.u32 %v100, 2147483648
    %v102 = vlaneseq
    %v103 = vand.u32 %v102, 127
    %vm104 = vcmp.eq.s32.totalorder %v103, 2
    %v105 = vmul.f32 %v101, %v98
    %106 = vadd.xlane.f32.xlu0 %v105
    %v107 = vpop.xlane.xlu0 %106
    %v108 = vsel %vm104, %v107, %v98
    %s109 = scalar_lea.vmem [#allocation2], 3
    %v110 = vld [vmem:[%s109] ss:$0 sm:$0xff]
    %v111 = vxor.u32 %v110, 2147483648
    %v112 = vlaneseq
    %v113 = vand.u32 %v112, 127
    %vm114 = vcmp.eq.s32.totalorder %v113, 3
    %v115 = vmul.f32 %v111, %v108
    %116 = vadd.xlane.f32.xlu0 %v115
    %v117 = vpop.xlane.xlu0 %116
    %v118 = vsel %vm114, %v117, %v108
    %s119 = scalar_lea.vmem [#allocation2], 4
    %v120 = vld [vmem:[%s119] ss:$0 sm:$0xff]
    %v121 = vxor.u32 %v120, 2147483648
    %v122 = vlaneseq
    %v123 = vand.u32 %v122, 127
    %vm124 = vcmp.eq.s32.totalorder %v123, 4
    %v125 = vmul.f32 %v121, %v118
    %126 = vadd.xlane.f32.xlu0 %v125
    %v127 = vpop.xlane.xlu0 %126
    %v128 = vsel %vm124, %v127, %v118
    %s129 = scalar_lea.vmem [#allocation2], 5
    %v130 = vld [vmem:[%s129] ss:$0 sm:$0xff]
    %v131 = vxor.u32 %v130, 2147483648
    %v132 = vlaneseq
    %v133 = vand.u32 %v132, 127
    %vm134 = vcmp.eq.s32.totalorder %v133, 5
    %v135 = vmul.f32 %v131, %v128
    %136 = vadd.xlane.f32.xlu0 %v135
    %v137 = vpop.xlane.xlu0 %136
    %v138 = vsel %vm134, %v137, %v128
    %s139 = scalar_lea.vmem [#allocation2], 6
    %v140 = vld [vmem:[%s139] ss:$0 sm:$0xff]
    %v141 = vxor.u32 %v140, 2147483648
    %v142 = vlaneseq
    %v143 = vand.u32 %v142, 127
    %vm144 = vcmp.eq.s32.totalorder %v143, 6
    %v145 = vmul.f32 %v141, %v138
    %146 = vadd.xlane.f32.xlu0 %v145
    %v147 = vpop.xlane.xlu0 %146
    %v148 = vsel %vm144, %v147, %v138
    %s149 = scalar_lea.vmem [#allocation2], 7
    %v150 = vld [vmem:[%s149] ss:$0 sm:$0xff]
    %v151 = vxor.u32 %v150, 2147483648
    %v152 = vlaneseq
    %v153 = vand.u32 %v152, 127
    %vm154 = vcmp.eq.s32.totalorder %v153, 7
    %v155 = vmul.f32 %v151, %v148
    %156 = vadd.xlane.f32.xlu0 %v155
    %v157 = vpop.xlane.xlu0 %156
    %v158 = vsel %vm154, %v157, %v148
    %s159 = scalar_lea.vmem [#allocation2], 8
    %v160 = vld [vmem:[%s159] ss:$0 sm:$0xff]
    %v161 = vxor.u32 %v160, 2147483648
    %v162 = vlaneseq
    %v163 = vand.u32 %v162, 127
    %vm164 = vcmp.eq.s32.totalorder %v163, 8
    %v165 = vmul.f32 %v161, %v158
    %166 = vadd.xlane.f32.xlu0 %v165
    %v167 = vpop.xlane.xlu0 %166
    %v168 = vsel %vm164, %v167, %v158
    %v169 = vmul.f32 %v161, %v88
    %170 = vadd.xlane.f32.xlu0 %v169
    %v171 = vpop.xlane.xlu0 %170
    %v172 = vsel %vm164, %v171, %v88
    %s173 = scalar_lea.vmem [#allocation2], 9
    %v174 = vld [vmem:[%s173] ss:$0 sm:$0xff]
    %v175 = vxor.u32 %v174, 2147483648
    %v176 = vlaneseq
    %v177 = vand.u32 %v176, 127
    %vm178 = vcmp.eq.s32.totalorder %v177, 9
    %v179 = vmul.f32 %v175, %v168
    %180 = vadd.xlane.f32.xlu0 %v179
    %v181 = vpop.xlane.xlu0 %180
    %v182 = vsel %vm178, %v181, %v168
    %v183 = vmul.f32 %v175, %v172
    %184 = vadd.xlane.f32.xlu0 %v183
    %v185 = vpop.xlane.xlu0 %184
    %v186 = vsel %vm178, %v185, %v172
    %s187 = scalar_lea.vmem [#allocation2], 10
    %v188 = vld [vmem:[%s187] ss:$0 sm:$0xff]
    %v189 = vxor.u32 %v188, 2147483648
    %v190 = vlaneseq
    %v191 = vand.u32 %v190, 127
    %vm192 = vcmp.eq.s32.totalorder %v191, 10
    %v193 = vmul.f32 %v189, %v182
    %194 = vadd.xlane.f32.xlu0 %v193
    %v195 = vpop.xlane.xlu0 %194
    %v196 = vsel %vm192, %v195, %v182
    %v197 = vmul.f32 %v189, %v186
    %198 = vadd.xlane.f32.xlu0 %v197
    %v199 = vpop.xlane.xlu0 %198
    %v200 = vsel %vm192, %v199, %v186
    %s201 = scalar_lea.vmem [#allocation2], 11
    %v202 = vld [vmem:[%s201] ss:$0 sm:$0xff]
    %v203 = vxor.u32 %v202, 2147483648
    %v204 = vlaneseq
    %v205 = vand.u32 %v204, 127
    %vm206 = vcmp.eq.s32.totalorder %v205, 11
    %v207 = vmul.f32 %v203, %v196
    %208 = vadd.xlane.f32.xlu0 %v207
    %v209 = vpop.xlane.xlu0 %208
    %v210 = vsel %vm206, %v209, %v196
    %v211 = vmul.f32 %v203, %v200
    %212 = vadd.xlane.f32.xlu0 %v211
    %v213 = vpop.xlane.xlu0 %212
    %v214 = vsel %vm206, %v213, %v200
    %s215 = scalar_lea.vmem [#allocation2], 12
    %v216 = vld [vmem:[%s215] ss:$0 sm:$0xff]
    %v217 = vxor.u32 %v216, 2147483648
    %v218 = vlaneseq
    %v219 = vand.u32 %v218, 127
    %vm220 = vcmp.eq.s32.totalorder %v219, 12
    %v221 = vmul.f32 %v217, %v210
    %222 = vadd.xlane.f32.xlu0 %v221
    %v223 = vpop.xlane.xlu0 %222
    %v224 = vsel %vm220, %v223, %v210
    %v225 = vmul.f32 %v217, %v214
    %226 = vadd.xlane.f32.xlu0 %v225
    %v227 = vpop.xlane.xlu0 %226
    %v228 = vsel %vm220, %v227, %v214
    %s229 = scalar_lea.vmem [#allocation2], 13
    %v230 = vld [vmem:[%s229] ss:$0 sm:$0xff]
    %v231 = vxor.u32 %v230, 2147483648
    %v232 = vlaneseq
    %v233 = vand.u32 %v232, 127
    %vm234 = vcmp.eq.s32.totalorder %v233, 13
    %v235 = vmul.f32 %v231, %v224
    %236 = vadd.xlane.f32.xlu0 %v235
    %v237 = vpop.xlane.xlu0 %236
    %v238 = vsel %vm234, %v237, %v224
    %v239 = vmul.f32 %v231, %v228
    %240 = vadd.xlane.f32.xlu0 %v239
    %v241 = vpop.xlane.xlu0 %240
    %v242 = vsel %vm234, %v241, %v228
    %s243 = scalar_lea.vmem [#allocation2], 14
    %v244 = vld [vmem:[%s243] ss:$0 sm:$0xff]
    %v245 = vxor.u32 %v244, 2147483648
    %v246 = vlaneseq
    %v247 = vand.u32 %v246, 127
    %vm248 = vcmp.eq.s32.totalorder %v247, 14
    %v249 = vmul.f32 %v245, %v238
    %250 = vadd.xlane.f32.xlu0 %v249
    %v251 = vpop.xlane.xlu0 %250
    %v252 = vsel %vm248, %v251, %v238
    %v253 = vmul.f32 %v245, %v242
    %254 = vadd.xlane.f32.xlu0 %v253
    %v255 = vpop.xlane.xlu0 %254
    %v256 = vsel %vm248, %v255, %v242
    %s257 = scalar_lea.vmem [#allocation2], 15
    %v258 = vld [vmem:[%s257] ss:$0 sm:$0xff]
    %v259 = vxor.u32 %v258, 2147483648
    %v260 = vlaneseq
    %v261 = vand.u32 %v260, 127
    %vm262 = vcmp.eq.s32.totalorder %v261, 15
    %v263 = vmul.f32 %v259, %v252
    %264 = vadd.xlane.f32.xlu0 %v263
    %v265 = vpop.xlane.xlu0 %264
    %v266 = vsel %vm262, %v265, %v252
    %v267 = vmul.f32 %v259, %v256
    %268 = vadd.xlane.f32.xlu0 %v267
    %v269 = vpop.xlane.xlu0 %268
    %v270 = vsel %vm262, %v269, %v256
    %v271 = vrcp.pop %v48
    %v272 = vmul.f32 %v266, %v271
    %vm273 = vweird.f32 %v48
    %v274 = vsel %vm273, %v266, %v272
    %275 = vst [vmem:[#allocation1] sm:$0xff] %v274
    %v276 = vrcp.pop %v64
    %v277 = vmul.f32 %v270, %v276
    %vm278 = vweird.f32 %v64
    %v279 = vsel %vm278, %v270, %v277
    %s280 = scalar_lea.vmem [#allocation1], 8
    %281 = vst [vmem:[%s280] sm:$0xff] %v279
    // Predicated region
    $region36: #{custom-call.9} parent=1 // pred_check
      _
    $region37: #{custom-call.9} parent=1 // pred_check_branch
      %283 = sbr.rel (0) target = $region39
    $region38: #{custom-call.9} parent=1 // pred_region
      // Predicated region
      $region40: #{custom-call.9} parent=38 // pred_check
        _
      $region41: #{custom-call.9} parent=38 // pred_check_branch
        %285 = sbr.rel (0) target = $region43
      $region42: #{custom-call.9} parent=38 // pred_region
        // Predicated region
        $region55: #{custom-call.9} parent=42 // pred_check
          _
        $region56: #{custom-call.9} parent=42 // pred_check_branch
          %302 = sbr.rel (0) target = $region58
        $region57: #{custom-call.9} parent=42 // pred_region
          loop: start=0, step=1, limit=1
          $region59: #{custom-call.9} parent=57 // loop_pre_header
            _
          $region60: #{custom-call.9} parent=57 // loop_header
            %s304 = sphi 0, %s308
            %p305 = scmp.ge.s32.totalorder %s304, 1
            %s309 = sphi [#allocation1], [#allocation1]
            %s310 = sphi %s1, %s1
          $region61: #{custom-call.9} parent=57 // loop_header_branch
            %307 = sbr.rel (%p305) target = $region65
          $region62: #{custom-call.9} parent=57 // loop_body
            %v311 = vld [vmem:[%s309] sm:$0xff]
            %312 = vst [vmem:[%s310] sm:$0xff] %v311
            %v313 = vld [vmem:[%s309 + $0x8] sm:$0xff]
            %314 = vst [vmem:[%s310 + $0x8] sm:$0xff] %v313
          $region63: #{custom-call.9} parent=57 // loop_footer
            %s308 = sadd.s32 1, %s304
          $region64: #{custom-call.9} parent=57 // loop_footer_branch
            %303 = sbr.rel target = $region60
          $region65: #{custom-call.9} parent=57 // loop_exit
            _
        $region58: #{custom-call.9} parent=42 // pred_fallthru
          _
        // Predicated region
        $region66: #{custom-call.9} parent=42 // pred_check
          _
        $region67: #{custom-call.9} parent=42 // pred_check_branch
          %316 = sbr.rel target = $region69
        $region68: #{custom-call.9} parent=42 // pred_region
          _
        $region69: #{custom-call.9} parent=42 // pred_fallthru
          _
      $region43: #{custom-call.9} parent=38 // pred_fallthru
        _
      // Predicated region
      $region44: #{custom-call.9} parent=38 // pred_check
        _
      $region45: #{custom-call.9} parent=38 // pred_check_branch
        %287 = sbr.rel target = $region47
      $region46: #{custom-call.9} parent=38 // pred_region
        loop: start=0, step=1, limit=1
        $region48: #{custom-call.9} parent=46 // loop_pre_header
          _
        $region49: #{custom-call.9} parent=46 // loop_header
          %s290 = sphi 0, %s294
          %p291 = scmp.ge.s32.totalorder %s290, 1
          %s295 = sphi [#allocation1], [#allocation1]
          %s296 = sphi %s1, %s1
        $region50: #{custom-call.9} parent=46 // loop_header_branch
          %293 = sbr.rel (%p291) target = $region54
        $region51: #{custom-call.9} parent=46 // loop_body
          %v297 = vld [vmem:[%s295] sm:$0xff]
          %298 = vst [vmem:[%s296] sm:$0xff] %v297
          %v299 = vld [vmem:[%s295 + $0x8] sm:$0xff]
          %300 = vst [vmem:[%s296 + $0x8] sm:$0xff] %v299
        $region52: #{custom-call.9} parent=46 // loop_footer
          %s294 = sadd.s32 1, %s290
        $region53: #{custom-call.9} parent=46 // loop_footer_branch
          %289 = sbr.rel target = $region49
        $region54: #{custom-call.9} parent=46 // loop_exit
          _
      $region47: #{custom-call.9} parent=38 // pred_fallthru
        _
    $region39: #{custom-call.9} parent=1 // pred_fallthru
      _
    %317 = vnop

// kernel: custom-call.11
$region0: #{custom-call.11}
  %s0 = inlined_call_operand.vmem [shape: f32[8,8], index: 0, kind: input, shape index: {}]
  %s1 = inlined_call_operand.vmem [shape: f32[8,8], index: 1, kind: output, shape index: {}]
  $region1: #{custom-call.11} parent=0
    #allocation0 [shape = 'u8[4096]{0}', space=vmem, size = 0x1000, scoped, tag = 'operand span for operand 0']
    #allocation1 [shape = 'u8[4096]{0}', space=vmem, size = 0x1000, scoped, tag = 'operand span for operand 1']
    // Predicated region
    $region2: #{custom-call.11} parent=1 // pred_check
      _
    $region3: #{custom-call.11} parent=1 // pred_check_branch
      %3 = sbr.rel (0) target = $region5
    $region4: #{custom-call.11} parent=1 // pred_region
      // Predicated region
      $region6: #{custom-call.11} parent=4 // pred_check
        _
      $region7: #{custom-call.11} parent=4 // pred_check_branch
        %5 = sbr.rel (0) target = $region9
      $region8: #{custom-call.11} parent=4 // pred_region
        // Predicated region
        $region21: #{custom-call.11} parent=8 // pred_check
          _
        $region22: #{custom-call.11} parent=8 // pred_check_branch
          %20 = sbr.rel (0) target = $region24
        $region23: #{custom-call.11} parent=8 // pred_region
          loop: start=0, step=1, limit=1
          $region25: #{custom-call.11} parent=23 // loop_pre_header
            _
          $region26: #{custom-call.11} parent=23 // loop_header
            %s22 = sphi 0, %s26
            %p23 = scmp.ge.s32.totalorder %s22, 1
            %s27 = sphi %s0, %s0
            %s28 = sphi [#allocation0], [#allocation0]
          $region27: #{custom-call.11} parent=23 // loop_header_branch
            %25 = sbr.rel (%p23) target = $region31
          $region28: #{custom-call.11} parent=23 // loop_body
            %v29 = vld [vmem:[%s27] sm:$0xff]
            %30 = vst [vmem:[%s28] sm:$0xff] %v29
          $region29: #{custom-call.11} parent=23 // loop_footer
            %s26 = sadd.s32 1, %s22
          $region30: #{custom-call.11} parent=23 // loop_footer_branch
            %21 = sbr.rel target = $region26
          $region31: #{custom-call.11} parent=23 // loop_exit
            _
        $region24: #{custom-call.11} parent=8 // pred_fallthru
          _
        // Predicated region
        $region32: #{custom-call.11} parent=8 // pred_check
          _
        $region33: #{custom-call.11} parent=8 // pred_check_branch
          %32 = sbr.rel target = $region35
        $region34: #{custom-call.11} parent=8 // pred_region
          _
        $region35: #{custom-call.11} parent=8 // pred_fallthru
          _
      $region9: #{custom-call.11} parent=4 // pred_fallthru
        _
      // Predicated region
      $region10: #{custom-call.11} parent=4 // pred_check
        _
      $region11: #{custom-call.11} parent=4 // pred_check_branch
        %7 = sbr.rel target = $region13
      $region12: #{custom-call.11} parent=4 // pred_region
        loop: start=0, step=1, limit=1
        $region14: #{custom-call.11} parent=12 // loop_pre_header
          _
        $region15: #{custom-call.11} parent=12 // loop_header
          %s10 = sphi 0, %s14
          %p11 = scmp.ge.s32.totalorder %s10, 1
          %s15 = sphi %s0, %s0
          %s16 = sphi [#allocation0], [#allocation0]
        $region16: #{custom-call.11} parent=12 // loop_header_branch
          %13 = sbr.rel (%p11) target = $region20
        $region17: #{custom-call.11} parent=12 // loop_body
          %v17 = vld [vmem:[%s15] sm:$0xff]
          %18 = vst [vmem:[%s16] sm:$0xff] %v17
        $region18: #{custom-call.11} parent=12 // loop_footer
          %s14 = sadd.s32 1, %s10
        $region19: #{custom-call.11} parent=12 // loop_footer_branch
          %9 = sbr.rel target = $region15
        $region20: #{custom-call.11} parent=12 // loop_exit
          _
      $region13: #{custom-call.11} parent=4 // pred_fallthru
        _
    $region5: #{custom-call.11} parent=1 // pred_fallthru
      _
    %33 = vnop
    %34 = vst [vmem:[#allocation1] sm:$0xff] 0.0
    %vm35 = vcmask 7168
    %v36 = vld [vmem:[#allocation1] ss:$0 sm:$0xff]
    %v37 = vld [vmem:[#allocation0] ss:$0 sm:$0xff]
    %v38 = vmul.f32 %v36, %v36
    %39 = vadd.xlane.f32.xlu0 %v38
    %v40 = vpop.xlane.xlu0 %39
    %v41 = vsub.f32 %v37, %v40
    %v42 = vrsqrt.pop %v41
    %v43 = vld [vmem:[#allocation0] sm:$0xff]
    %v44 = vld [vmem:[#allocation1] sm:$0xff]
    %v45 = vmul.f32 %v44, %v36
    %46 = vadd.xlane.f32.xlu0 %v45
    %v47 = vpop.xlane.xlu0 %46
    %v48 = vsub.f32 %v43, %v47
    %v49 = vmul.f32 %v48, %v42
    %v50 = vsel %vm35, %v49, 0.0
    %v51 = vadd.f32 %v44, %v50
    %52 = vst [vmem:[#allocation1] sm:$0xff] %v51
    %vm53 = vcmask 15368
    %s54 = scalar_lea.vmem [#allocation1], 1
    %v55 = vld [vmem:[%s54] ss:$0 sm:$0xff]
    %s56 = scalar_lea.vmem [#allocation0], 1
    %v57 = vld [vmem:[%s56] ss:$0 sm:$0xff]
    %v58 = vmul.f32 %v55, %v55
    %59 = vadd.xlane.f32.xlu0 %v58
    %v60 = vpop.xlane.xlu0 %59
    %v61 = vsub.f32 %v57, %v60
    %v62 = vrsqrt.pop %v61
    %v63 = vld [vmem:[#allocation0] sm:$0xff]
    %v64 = vld [vmem:[#allocation1] sm:$0xff]
    %v65 = vmul.f32 %v64, %v55
    %66 = vadd.xlane.f32.xlu0 %v65
    %v67 = vpop.xlane.xlu0 %66
    %v68 = vsub.f32 %v63, %v67
    %v69 = vmul.f32 %v68, %v62
    %vm70 = vcmask 1047553
    %vm71 = vmand %vm53, %vm70
    %v72 = vsel %vm71, %v69, 0.0
    %v73 = vadd.f32 %v64, %v72
    %74 = vst [vmem:[#allocation1] sm:$0xff] %v73
    %vm75 = vcmask 23568
    %s76 = scalar_lea.vmem [#allocation1], 2
    %v77 = vld [vmem:[%s76] ss:$0 sm:$0xff]
    %s78 = scalar_lea.vmem [#allocation0], 2
    %v79 = vld [vmem:[%s78] ss:$0 sm:$0xff]
    %v80 = vmul.f32 %v77, %v77
    %81 = vadd.xlane.f32.xlu0 %v80
    %v82 = vpop.xlane.xlu0 %81
    %v83 = vsub.f32 %v79, %v82
    %v84 = vrsqrt.pop %v83
    %v85 = vld [vmem:[#allocation0] sm:$0xff]
    %v86 = vld [vmem:[#allocation1] sm:$0xff]
    %v87 = vmul.f32 %v86, %v77
    %88 = vadd.xlane.f32.xlu0 %v87
    %v89 = vpop.xlane.xlu0 %88
    %v90 = vsub.f32 %v85, %v89
    %v91 = vmul.f32 %v90, %v84
    %vm92 = vcmask 1047554
    %vm93 = vmand %vm75, %vm92
    %v94 = vsel %vm93, %v91, 0.0
    %v95 = vadd.f32 %v86, %v94
    %96 = vst [vmem:[#allocation1] sm:$0xff] %v95
    %vm97 = vcmask 31768
    %s98 = scalar_lea.vmem [#allocation1], 3
    %v99 = vld [vmem:[%s98] ss:$0 sm:$0xff]
    %s100 = scalar_lea.vmem [#allocation0], 3
    %v101 = vld [vmem:[%s100] ss:$0 sm:$0xff]
    %v102 = vmul.f32 %v99, %v99
    %103 = vadd.xlane.f32.xlu0 %v102
    %v104 = vpop.xlane.xlu0 %103
    %v105 = vsub.f32 %v101, %v104
    %v106 = vrsqrt.pop %v105
    %v107 = vld [vmem:[#allocation0] sm:$0xff]
    %v108 = vld [vmem:[#allocation1] sm:$0xff]
    %v109 = vmul.f32 %v108, %v99
    %110 = vadd.xlane.f32.xlu0 %v109
    %v111 = vpop.xlane.xlu0 %110
    %v112 = vsub.f32 %v107, %v111
    %v113 = vmul.f32 %v112, %v106
    %vm114 = vcmask 1047555
    %vm115 = vmand %vm97, %vm114
    %v116 = vsel %vm115, %v113, 0.0
    %v117 = vadd.f32 %v108, %v116
    %118 = vst [vmem:[#allocation1] sm:$0xff] %v117
    %vm119 = vcmask 39968
    %s120 = scalar_lea.vmem [#allocation1], 4
    %v121 = vld [vmem:[%s120] ss:$0 sm:$0xff]
    %s122 = scalar_lea.vmem [#allocation0], 4
    %v123 = vld [vmem:[%s122] ss:$0 sm:$0xff]
    %v124 = vmul.f32 %v121, %v121
    %125 = vadd.xlane.f32.xlu0 %v124
    %v126 = vpop.xlane.xlu0 %125
    %v127 = vsub.f32 %v123, %v126
    %v128 = vrsqrt.pop %v127
    %v129 = vld [vmem:[#allocation0] sm:$0xff]
    %v130 = vld [vmem:[#allocation1] sm:$0xff]
    %v131 = vmul.f32 %v130, %v121
    %132 = vadd.xlane.f32.xlu0 %v131
    %v133 = vpop.xlane.xlu0 %132
    %v134 = vsub.f32 %v129, %v133
    %v135 = vmul.f32 %v134, %v128
    %vm136 = vcmask 1047556
    %vm137 = vmand %vm119, %vm136
    %v138 = vsel %vm137, %v135, 0.0
    %v139 = vadd.f32 %v130, %v138
    %140 = vst [vmem:[#allocation1] sm:$0xff] %v139
    %vm141 = vcmask 48168
    %s142 = scalar_lea.vmem [#allocation1], 5
    %v143 = vld [vmem:[%s142] ss:$0 sm:$0xff]
    %s144 = scalar_lea.vmem [#allocation0], 5
    %v145 = vld [vmem:[%s144] ss:$0 sm:$0xff]
    %v146 = vmul.f32 %v143, %v143
    %147 = vadd.xlane.f32.xlu0 %v146
    %v148 = vpop.xlane.xlu0 %147
    %v149 = vsub.f32 %v145, %v148
    %v150 = vrsqrt.pop %v149
    %v151 = vld [vmem:[#allocation0] sm:$0xff]
    %v152 = vld [vmem:[#allocation1] sm:$0xff]
    %v153 = vmul.f32 %v152, %v143
    %154 = vadd.xlane.f32.xlu0 %v153
    %v155 = vpop.xlane.xlu0 %154
    %v156 = vsub.f32 %v151, %v155
    %v157 = vmul.f32 %v156, %v150
    %vm158 = vcmask 1047557
    %vm159 = vmand %vm141, %vm158
    %v160 = vsel %vm159, %v157, 0.0
    %v161 = vadd.f32 %v152, %v160
    %162 = vst [vmem:[#allocation1] sm:$0xff] %v161
    %vm163 = vcmask 56368
    %s164 = scalar_lea.vmem [#allocation1], 6
    %v165 = vld [vmem:[%s164] ss:$0 sm:$0xff]
    %s166 = scalar_lea.vmem [#allocation0], 6
    %v167 = vld [vmem:[%s166] ss:$0 sm:$0xff]
    %v168 = vmul.f32 %v165, %v165
    %169 = vadd.xlane.f32.xlu0 %v168
    %v170 = vpop.xlane.xlu0 %169
    %v171 = vsub.f32 %v167, %v170
    %v172 = vrsqrt.pop %v171
    %v173 = vld [vmem:[#allocation0] sm:$0xff]
    %v174 = vld [vmem:[#allocation1] sm:$0xff]
    %v175 = vmul.f32 %v174, %v165
    %176 = vadd.xlane.f32.xlu0 %v175
    %v177 = vpop.xlane.xlu0 %176
    %v178 = vsub.f32 %v173, %v177
    %v179 = vmul.f32 %v178, %v172
    %vm180 = vcmask 1047558
    %vm181 = vmand %vm163, %vm180
    %v182 = vsel %vm181, %v179, 0.0
    %v183 = vadd.f32 %v174, %v182
    %184 = vst [vmem:[#allocation1] sm:$0xff] %v183
    %vm185 = vcmask 64568
    %s186 = scalar_lea.vmem [#allocation1], 7
    %v187 = vld [vmem:[%s186] ss:$0 sm:$0xff]
    %s188 = scalar_lea.vmem [#allocation0], 7
    %v189 = vld [vmem:[%s188] ss:$0 sm:$0xff]
    %v190 = vmul.f32 %v187, %v187
    %191 = vadd.xlane.f32.xlu0 %v190
    %v192 = vpop.xlane.xlu0 %191
    %v193 = vsub.f32 %v189, %v192
    %v194 = vrsqrt.pop %v193
    %v195 = vld [vmem:[#allocation0] sm:$0xff]
    %v196 = vld [vmem:[#allocation1] sm:$0xff]
    %v197 = vmul.f32 %v196, %v187
    %198 = vadd.xlane.f32.xlu0 %v197
    %v199 = vpop.xlane.xlu0 %198
    %v200 = vsub.f32 %v195, %v199
    %v201 = vmul.f32 %v200, %v194
    %vm202 = vcmask 1047559
    %vm203 = vmand %vm185, %vm202
    %v204 = vsel %vm203, %v201, 0.0
    %v205 = vadd.f32 %v196, %v204
    %206 = vst [vmem:[#allocation1] sm:$0xff] %v205
    // Predicated region
    $region36: #{custom-call.11} parent=1 // pred_check
      _
    $region37: #{custom-call.11} parent=1 // pred_check_branch
      %208 = sbr.rel (0) target = $region39
    $region38: #{custom-call.11} parent=1 // pred_region
      // Predicated region
      $region40: #{custom-call.11} parent=38 // pred_check
        _
      $region41: #{custom-call.11} parent=38 // pred_check_branch
        %210 = sbr.rel (0) target = $region43
      $region42: #{custom-call.11} parent=38 // pred_region
        // Predicated region
        $region55: #{custom-call.11} parent=42 // pred_check
          _
        $region56: #{custom-call.11} parent=42 // pred_check_branch
          %225 = sbr.rel (0) target = $region58
        $region57: #{custom-call.11} parent=42 // pred_region
          loop: start=0, step=1, limit=1
          $region59: #{custom-call.11} parent=57 // loop_pre_header
            _
          $region60: #{custom-call.11} parent=57 // loop_header
            %s227 = sphi 0, %s231
            %p228 = scmp.ge.s32.totalorder %s227, 1
            %s232 = sphi [#allocation1], [#allocation1]
            %s233 = sphi %s1, %s1
          $region61: #{custom-call.11} parent=57 // loop_header_branch
            %230 = sbr.rel (%p228) target = $region65
          $region62: #{custom-call.11} parent=57 // loop_body
            %v234 = vld [vmem:[%s232] sm:$0xff]
            %235 = vst [vmem:[%s233] sm:$0xff] %v234
          $region63: #{custom-call.11} parent=57 // loop_footer
            %s231 = sadd.s32 1, %s227
          $region64: #{custom-call.11} parent=57 // loop_footer_branch
            %226 = sbr.rel target = $region60
          $region65: #{custom-call.11} parent=57 // loop_exit
            _
        $region58: #{custom-call.11} parent=42 // pred_fallthru
          _
        // Predicated region
        $region66: #{custom-call.11} parent=42 // pred_check
          _
        $region67: #{custom-call.11} parent=42 // pred_check_branch
          %237 = sbr.rel target = $region69
        $region68: #{custom-call.11} parent=42 // pred_region
          _
        $region69: #{custom-call.11} parent=42 // pred_fallthru
          _
      $region43: #{custom-call.11} parent=38 // pred_fallthru
        _
      // Predicated region
      $region44: #{custom-call.11} parent=38 // pred_check
        _
      $region45: #{custom-call.11} parent=38 // pred_check_branch
        %212 = sbr.rel target = $region47
      $region46: #{custom-call.11} parent=38 // pred_region
        loop: start=0, step=1, limit=1
        $region48: #{custom-call.11} parent=46 // loop_pre_header
          _
        $region49: #{custom-call.11} parent=46 // loop_header
          %s215 = sphi 0, %s219
          %p216 = scmp.ge.s32.totalorder %s215, 1
          %s220 = sphi [#allocation1], [#allocation1]
          %s221 = sphi %s1, %s1
        $region50: #{custom-call.11} parent=46 // loop_header_branch
          %218 = sbr.rel (%p216) target = $region54
        $region51: #{custom-call.11} parent=46 // loop_body
          %v222 = vld [vmem:[%s220] sm:$0xff]
          %223 = vst [vmem:[%s221] sm:$0xff] %v222
        $region52: #{custom-call.11} parent=46 // loop_footer
          %s219 = sadd.s32 1, %s215
        $region53: #{custom-call.11} parent=46 // loop_footer_branch
          %214 = sbr.rel target = $region49
        $region54: #{custom-call.11} parent=46 // loop_exit
          _
      $region47: #{custom-call.11} parent=38 // pred_fallthru
        _
    $region39: #{custom-call.11} parent=1 // pred_fallthru
      _
    %238 = vnop

// kernel: _train_forward.2
$region0: #{_train_forward.2}
  #allocation0 [shape = 'u32[]', space=smem, size = 0x4, offset = 0x4, fixed_abs, tag = 'smem constant byte address 0x4 - core index']
  #allocation1 [shape = 'u32[144,128]{1,0:T(1,128)}', space=vmem, size = 0x12000, scoped, tag = 'internal scratch']
  %s0 = inlined_call_operand.vmem [shape: f32[2], index: 0, kind: input, shape index: {}]
  %s1 = inlined_call_operand.vmem [shape: f32[256,128], index: 1, kind: input, shape index: {}]
  %s2 = inlined_call_operand.vmem [shape: f32[256,8], index: 2, kind: input, shape index: {}]
  %s3 = inlined_call_operand.vmem [shape: f32[128,128], index: 3, kind: input, shape index: {}]
  %s4 = inlined_call_operand.vmem [shape: f32[8,128], index: 4, kind: input, shape index: {}]
  %s5 = inlined_call_operand.vmem [shape: f32[256,128], index: 5, kind: output, shape index: {}]
  %s6 = sld [smem:[#allocation0]]
  $region34: #{_train_forward.2} parent=0
    _
  %s8 = ssub.s32 1, %s6
  %s9 = scalar_select 0, %s8, %s6
  $region1: #{_train_forward.2} parent=0
    #allocation2 [shape = 'u8[512]{0}', space=smem, size = 0x200, scoped, tag = 'input window, operand 0, single buffered']
    #allocation3 [shape = 's32[1]{0}', space=sflag, size = 0x4, scoped, tag = 'scoped memory for _train_forward.2']
    %10 = vsyncpa [#allocation3], 0
    // Predicated region
    $region2: #{_train_forward.2} parent=1 // pred_check
      _
    $region3: #{_train_forward.2} parent=1 // pred_check_branch
      %12 = sbr.rel (0) target = $region5
    $region4: #{_train_forward.2} parent=1 // pred_region
      %s14 = ssub.s32 16, 16
      %15 = vsyncadd [#allocation3], %s14
      %s17 = sshll.u32 %s0, 4
      %s18 = int_to_ptr.vmem [resolvable:$true] %s17
      %20 = dma.vmem_to_smem %s18, 16, [#allocation2], [#allocation3]
    $region5: #{_train_forward.2} parent=1 // pred_fallthru
      _
    // Predicated region
    $region6: #{_train_forward.2} parent=1 // pred_check
      _
    $region7: #{_train_forward.2} parent=1 // pred_check_branch
      %22 = sbr.rel (0) target = $region9
    $region8: #{_train_forward.2} parent=1 // pred_region
      _
    $region9: #{_train_forward.2} parent=1 // pred_fallthru
      _
    // Predicated region
    $region10: #{_train_forward.2} parent=1 // pred_check
      _
    $region11: #{_train_forward.2} parent=1 // pred_check_branch
      %24 = sbr.rel (0) target = $region13
    $region12: #{_train_forward.2} parent=1 // pred_region
      _
    $region13: #{_train_forward.2} parent=1 // pred_fallthru
      _
    // Predicated region
    $region14: #{_train_forward.2} parent=1 // pred_check
      _
    $region15: #{_train_forward.2} parent=1 // pred_check_branch
      %26 = sbr.rel (0) target = $region17
    $region16: #{_train_forward.2} parent=1 // pred_region
      _
    $region17: #{_train_forward.2} parent=1 // pred_fallthru
      _
    // Predicated region
    $region18: #{_train_forward.2} parent=1 // pred_check
      _
    $region19: #{_train_forward.2} parent=1 // pred_check_branch
      %28 = sbr.rel (0) target = $region21
    $region20: #{_train_forward.2} parent=1 // pred_region
      _
    $region21: #{_train_forward.2} parent=1 // pred_fallthru
      _
    // Predicated region
    $region22: #{_train_forward.2} parent=1 // pred_check
      _
    $region23: #{_train_forward.2} parent=1 // pred_check_branch
      %30 = sbr.rel (0) target = $region25
    $region24: #{_train_forward.2} parent=1 // pred_region
      %31 = dma.done [#allocation3], 16
    $region25: #{_train_forward.2} parent=1 // pred_fallthru
      _
    %32 = sfence
    %s33 = sld [smem:[#allocation2]]
    %v34 = vld [vmem:[%s1] sm:$0xff]
    %v35 = vld [vmem:[%s1 + $0x8] sm:$0xff]
    %v36 = vld [vmem:[%s1 + $0x10] sm:$0xff]
    %v37 = vld [vmem:[%s1 + $0x18] sm:$0xff]
    %v38 = vld [vmem:[%s1 + $0x20] sm:$0xff]
    %v39 = vld [vmem:[%s1 + $0x28] sm:$0xff]
    %v40 = vld [vmem:[%s1 + $0x30] sm:$0xff]
    %v41 = vld [vmem:[%s1 + $0x38] sm:$0xff]
    %v42 = vld [vmem:[%s1 + $0x40] sm:$0xff]
    %v43 = vld [vmem:[%s1 + $0x48] sm:$0xff]
    %v44 = vld [vmem:[%s1 + $0x50] sm:$0xff]
    %v45 = vld [vmem:[%s1 + $0x58] sm:$0xff]
    %v46 = vld [vmem:[%s1 + $0x60] sm:$0xff]
    %v47 = vld [vmem:[%s1 + $0x68] sm:$0xff]
    %v48 = vld [vmem:[%s1 + $0x70] sm:$0xff]
    %v49 = vld [vmem:[%s1 + $0x78] sm:$0xff]
    %v50 = vld [vmem:[%s1 + $0x80] sm:$0xff]
    %v51 = vld [vmem:[%s1 + $0x88] sm:$0xff]
    %v52 = vld [vmem:[%s1 + $0x90] sm:$0xff]
    %v53 = vld [vmem:[%s1 + $0x98] sm:$0xff]
    %v54 = vld [vmem:[%s1 + $0xa0] sm:$0xff]
    %v55 = vld [vmem:[%s1 + $0xa8] sm:$0xff]
    %v56 = vld [vmem:[%s1 + $0xb0] sm:$0xff]
    %v57 = vld [vmem:[%s1 + $0xb8] sm:$0xff]
    %v58 = vld [vmem:[%s1 + $0xc0] sm:$0xff]
    %v59 = vld [vmem:[%s1 + $0xc8] sm:$0xff]
    %v60 = vld [vmem:[%s1 + $0xd0] sm:$0xff]
    %v61 = vld [vmem:[%s1 + $0xd8] sm:$0xff]
    %v62 = vld [vmem:[%s1 + $0xe0] sm:$0xff]
    %v63 = vld [vmem:[%s1 + $0xe8] sm:$0xff]
    %v64 = vld [vmem:[%s1 + $0xf0] sm:$0xff]
    %v65 = vld [vmem:[%s1 + $0xf8] sm:$0xff]
    %v66 = vld [vmem:[%s3] sm:$0xff]
    %v67 = vld [vmem:[%s3 + $0x8] sm:$0xff]
    %v68 = vld [vmem:[%s3 + $0x10] sm:$0xff]
    %v69 = vld [vmem:[%s3 + $0x18] sm:$0xff]
    %v70 = vld [vmem:[%s3 + $0x20] sm:$0xff]
    %v71 = vld [vmem:[%s3 + $0x28] sm:$0xff]
    %v72 = vld [vmem:[%s3 + $0x30] sm:$0xff]
    %v73 = vld [vmem:[%s3 + $0x38] sm:$0xff]
    %v74 = vld [vmem:[%s3 + $0x40] sm:$0xff]
    %v75 = vld [vmem:[%s3 + $0x48] sm:$0xff]
    %v76 = vld [vmem:[%s3 + $0x50] sm:$0xff]
    %v77 = vld [vmem:[%s3 + $0x58] sm:$0xff]
    %v78 = vld [vmem:[%s3 + $0x60] sm:$0xff]
    %v79 = vld [vmem:[%s3 + $0x68] sm:$0xff]
    %v80 = vld [vmem:[%s3 + $0x70] sm:$0xff]
    %v81 = vld [vmem:[%s3 + $0x78] sm:$0xff]
    %v82 = vld [vmem:[%s2] sm:$0xff]
    %v83 = vld [vmem:[%s2 + $0x8] sm:$0xff]
    %v84 = vld [vmem:[%s2 + $0x10] sm:$0xff]
    %v85 = vld [vmem:[%s2 + $0x18] sm:$0xff]
    %v86 = vld [vmem:[%s2 + $0x20] sm:$0xff]
    %v87 = vld [vmem:[%s2 + $0x28] sm:$0xff]
    %v88 = vld [vmem:[%s2 + $0x30] sm:$0xff]
    %v89 = vld [vmem:[%s2 + $0x38] sm:$0xff]
    %v90 = vld [vmem:[%s2 + $0x40] sm:$0xff]
    %v91 = vld [vmem:[%s2 + $0x48] sm:$0xff]
    %v92 = vld [vmem:[%s2 + $0x50] sm:$0xff]
    %v93 = vld [vmem:[%s2 + $0x58] sm:$0xff]
    %v94 = vld [vmem:[%s2 + $0x60] sm:$0xff]
    %v95 = vld [vmem:[%s2 + $0x68] sm:$0xff]
    %v96 = vld [vmem:[%s2 + $0x70] sm:$0xff]
    %v97 = vld [vmem:[%s2 + $0x78] sm:$0xff]
    %v98 = vld [vmem:[%s2 + $0x80] sm:$0xff]
    %v99 = vld [vmem:[%s2 + $0x88] sm:$0xff]
    %v100 = vld [vmem:[%s2 + $0x90] sm:$0xff]
    %v101 = vld [vmem:[%s2 + $0x98] sm:$0xff]
    %v102 = vld [vmem:[%s2 + $0xa0] sm:$0xff]
    %v103 = vld [vmem:[%s2 + $0xa8] sm:$0xff]
    %v104 = vld [vmem:[%s2 + $0xb0] sm:$0xff]
    %v105 = vld [vmem:[%s2 + $0xb8] sm:$0xff]
    %v106 = vld [vmem:[%s2 + $0xc0] sm:$0xff]
    %v107 = vld [vmem:[%s2 + $0xc8] sm:$0xff]
    %v108 = vld [vmem:[%s2 + $0xd0] sm:$0xff]
    %v109 = vld [vmem:[%s2 + $0xd8] sm:$0xff]
    %v110 = vld [vmem:[%s2 + $0xe0] sm:$0xff]
    %v111 = vld [vmem:[%s2 + $0xe8] sm:$0xff]
    %v112 = vld [vmem:[%s2 + $0xf0] sm:$0xff]
    %v113 = vld [vmem:[%s2 + $0xf8] sm:$0xff]
    %v114 = vld [vmem:[%s4] sm:$0xff]
    %115 = vmatprep.subr.mxu0 0.0
    %116 = vmatpush1.xpose.msra.mxu0 %v66
    %117 = vmatprep.subr.mxu0 0.0
    %118 = vmatpush1.xpose.msra.mxu0 %v67
    %119 = vmatprep.subr.mxu0 0.0
    %120 = vmatpush1.xpose.msra.mxu0 %v68
    %121 = vmatprep.subr.mxu0 0.0
    %122 = vmatpush1.xpose.msra.mxu0 %v69
    %123 = vmatprep.subr.mxu0 0.0
    %124 = vmatpush1.xpose.msra.mxu0 %v70
    %125 = vmatprep.subr.mxu0 0.0
    %126 = vmatpush1.xpose.msra.mxu0 %v71
    %127 = vmatprep.subr.mxu0 0.0
    %128 = vmatpush1.xpose.msra.mxu0 %v72
    %129 = vmatprep.subr.mxu0 0.0
    %130 = vmatpush1.xpose.msra.mxu0 %v73
    %131 = vmatprep.subr.mxu0 0.0
    %132 = vmatpush1.xpose.msra.mxu0 %v74
    %133 = vmatprep.subr.mxu0 0.0
    %134 = vmatpush1.xpose.msra.mxu0 %v75
    %135 = vmatprep.subr.mxu0 0.0
    %136 = vmatpush1.xpose.msra.mxu0 %v76
    %137 = vmatprep.subr.mxu0 0.0
    %138 = vmatpush1.xpose.msra.mxu0 %v77
    %139 = vmatprep.subr.mxu0 0.0
    %140 = vmatpush1.xpose.msra.mxu0 %v78
    %141 = vmatprep.subr.mxu0 0.0
    %142 = vmatpush1.xpose.msra.mxu0 %v79
    %143 = vmatprep.subr.mxu0 0.0
    %144 = vmatpush1.xpose.msra.mxu0 %v80
    %145 = vmatprep.subr.mxu0 0.0
    %146 = vmatpush1.xpose.msra.mxu0 %v81
    %147 = vmatprep.subr.mxu0 0.0
    %148 = vmatpush1.xpose.msra.mxu0 0.0
    %149 = vmatprep.subr.mxu0 0.0
    %150 = vmatpush1.xpose.msra.mxu0 0.0
    %151 = vmatprep.subr.mxu0 0.0
    %152 = vmatpush1.xpose.msra.mxu0 0.0
    %153 = vmatprep.subr.mxu0 0.0
    %154 = vmatpush1.xpose.msra.mxu0 0.0
    %155 = vmatprep.subr.mxu0 0.0
    %156 = vmatpush1.xpose.msra.mxu0 0.0
    %157 = vmatprep.subr.mxu0 0.0
    %158 = vmatpush1.xpose.msra.mxu0 0.0
    %159 = vmatprep.subr.mxu0 0.0
    %160 = vmatpush1.xpose.msra.mxu0 0.0
    %161 = vmatprep.subr.mxu0 0.0
    %162 = vmatpush1.xpose.msra.mxu0 0.0
    %163 = vmatprep.subr.mxu0 0.0
    %164 = vmatpush1.xpose.msra.mxu0 0.0
    %165 = vmatprep.subr.mxu0 0.0
    %166 = vmatpush1.xpose.msra.mxu0 0.0
    %167 = vmatprep.subr.mxu0 0.0
    %168 = vmatpush1.xpose.msra.mxu0 0.0
    %169 = vmatprep.subr.mxu0 0.0
    %170 = vmatpush1.xpose.msra.mxu0 0.0
    %171 = vmatprep.subr.mxu0 0.0
    %172 = vmatpush1.xpose.msra.mxu0 0.0
    %173 = vmatprep.subr.mxu0 0.0
    %174 = vmatpush1.xpose.msra.mxu0 0.0
    %175 = vmatprep.subr.mxu0 0.0
    %176 = vmatpush1.xpose.msra.mxu0 0.0
    %177 = vmatprep.subr.mxu0 0.0
    %178 = vmatpush1.xpose.msra.mxu0 0.0
    %179 = vmatprep.mubr.f32.mxu0 0.0
    %180 = vmatmul.mubr.f32.gmra.mrb[0].mxu0 %v34
    %v181 = vpop.f32.mrb[0].mxu0
    %v182 = vadd.f32 0.0, %v181
    %v183 = vpop.f32.mrb[0].mxu0
    %184 = vmatprep.mubr.f32.mxu0 0.0
    %185 = vmatmul.mubr.f32.gmra.mrb[0].mxu0 %v35
    %v186 = vpop.f32.mrb[0].mxu0
    %v187 = vadd.f32 0.0, %v186
    %v188 = vpop.f32.mrb[0].mxu0
    %189 = vmatprep.mubr.f32.mxu0 0.0
    %190 = vmatmul.mubr.f32.gmra.mrb[0].mxu0 %v36
    %v191 = vpop.f32.mrb[0].mxu0
    %v192 = vadd.f32 0.0, %v191
    %v193 = vpop.f32.mrb[0].mxu0
    %194 = vmatprep.mubr.f32.mxu0 0.0
    %195 = vmatmul.mubr.f32.gmra.mrb[0].mxu0 %v37
    %v196 = vpop.f32.mrb[0].mxu0
    %v197 = vadd.f32 0.0, %v196
    %v198 = vpop.f32.mrb[0].mxu0
    %199 = vmatprep.mubr.f32.mxu0 0.0
    %200 = vmatmul.mubr.f32.gmra.mrb[0].mxu0 %v38
    %v201 = vpop.f32.mrb[0].mxu0
    %v202 = vadd.f32 0.0, %v201
    %v203 = vpop.f32.mrb[0].mxu0
    %204 = vmatprep.mubr.f32.mxu0 0.0
    %205 = vmatmul.mubr.f32.gmra.mrb[0].mxu0 %v39
    %v206 = vpop.f32.mrb[0].mxu0
    %v207 = vadd.f32 0.0, %v206
    %v208 = vpop.f32.mrb[0].mxu0
    %209 = vmatprep.mubr.f32.mxu0 0.0
    %210 = vmatmul.mubr.f32.gmra.mrb[0].mxu0 %v40
    %v211 = vpop.f32.mrb[0].mxu0
    %v212 = vadd.f32 0.0, %v211
    %v213 = vpop.f32.mrb[0].mxu0
    %214 = vmatprep.mubr.f32.mxu0 0.0
    %215 = vmatmul.mubr.f32.gmra.mrb[0].mxu0 %v41
    %v216 = vpop.f32.mrb[0].mxu0
    %v217 = vadd.f32 0.0, %v216
    %v218 = vpop.f32.mrb[0].mxu0
    %219 = vmatprep.mubr.f32.mxu0 0.0
    %220 = vmatmul.mubr.f32.gmra.mrb[0].mxu0 %v42
    %v221 = vpop.f32.mrb[0].mxu0
    %v222 = vadd.f32 0.0, %v221
    %v223 = vpop.f32.mrb[0].mxu0
    %224 = vmatprep.mubr.f32.mxu0 0.0
    %225 = vmatmul.mubr.f32.gmra.mrb[0].mxu0 %v43
    %v226 = vpop.f32.mrb[0].mxu0
    %v227 = vadd.f32 0.0, %v226
    %v228 = vpop.f32.mrb[0].mxu0
    %229 = vmatprep.mubr.f32.mxu0 0.0
    %230 = vmatmul.mubr.f32.gmra.mrb[0].mxu0 %v44
    %v231 = vpop.f32.mrb[0].mxu0
    %v232 = vadd.f32 0.0, %v231
    %v233 = vpop.f32.mrb[0].mxu0
    %234 = vmatprep.mubr.f32.mxu0 0.0
    %235 = vmatmul.mubr.f32.gmra.mrb[0].mxu0 %v45
    %v236 = vpop.f32.mrb[0].mxu0
    %v237 = vadd.f32 0.0, %v236
    %v238 = vpop.f32.mrb[0].mxu0
    %239 = vmatprep.mubr.f32.mxu0 0.0
    %240 = vmatmul.mubr.f32.gmra.mrb[0].mxu0 %v46
    %v241 = vpop.f32.mrb[0].mxu0
    %v242 = vadd.f32 0.0, %v241
    %v243 = vpop.f32.mrb[0].mxu0
    %244 = vmatprep.mubr.f32.mxu0 0.0
    %245 = vmatmul.mubr.f32.gmra.mrb[0].mxu0 %v47
    %v246 = vpop.f32.mrb[0].mxu0
    %v247 = vadd.f32 0.0, %v246
    %v248 = vpop.f32.mrb[0].mxu0
    %249 = vmatprep.mubr.f32.mxu0 0.0
    %250 = vmatmul.mubr.f32.gmra.mrb[0].mxu0 %v48
    %v251 = vpop.f32.mrb[0].mxu0
    %v252 = vadd.f32 0.0, %v251
    %v253 = vpop.f32.mrb[0].mxu0
    %254 = vmatprep.mubr.f32.mxu0 0.0
    %255 = vmatmul.mubr.f32.gmra.mrb[0].mxu0 %v49
    %v256 = vpop.f32.mrb[0].mxu0
    %v257 = vadd.f32 0.0, %v256
    %v258 = vpop.f32.mrb[0].mxu0
    %259 = vmatprep.mubr.f32.mxu0 0.0
    %260 = vmatmul.mubr.f32.gmra.mrb[0].mxu0 %v50
    %v261 = vpop.f32.mrb[0].mxu0
    %v262 = vadd.f32 0.0, %v261
    %v263 = vpop.f32.mrb[0].mxu0
    %264 = vmatprep.mubr.f32.mxu0 0.0
    %265 = vmatmul.mubr.f32.gmra.mrb[0].mxu0 %v51
    %v266 = vpop.f32.mrb[0].mxu0
    %v267 = vadd.f32 0.0, %v266
    %v268 = vpop.f32.mrb[0].mxu0
    %269 = vmatprep.mubr.f32.mxu0 0.0
    %270 = vmatmul.mubr.f32.gmra.mrb[0].mxu0 %v52
    %v271 = vpop.f32.mrb[0].mxu0
    %v272 = vadd.f32 0.0, %v271
    %v273 = vpop.f32.mrb[0].mxu0
    %274 = vmatprep.mubr.f32.mxu0 0.0
    %275 = vmatmul.mubr.f32.gmra.mrb[0].mxu0 %v53
    %v276 = vpop.f32.mrb[0].mxu0
    %v277 = vadd.f32 0.0, %v276
    %v278 = vpop.f32.mrb[0].mxu0
    %279 = vmatprep.mubr.f32.mxu0 0.0
    %280 = vmatmul.mubr.f32.gmra.mrb[0].mxu0 %v54
    %v281 = vpop.f32.mrb[0].mxu0
    %v282 = vadd.f32 0.0, %v281
    %v283 = vpop.f32.mrb[0].mxu0
    %284 = vmatprep.mubr.f32.mxu0 0.0
    %285 = vmatmul.mubr.f32.gmra.mrb[0].mxu0 %v55
    %v286 = vpop.f32.mrb[0].mxu0
    %v287 = vadd.f32 0.0, %v286
    %v288 = vpop.f32.mrb[0].mxu0
    %289 = vmatprep.mubr.f32.mxu0 0.0
    %290 = vmatmul.mubr.f32.gmra.mrb[0].mxu0 %v56
    %v291 = vpop.f32.mrb[0].mxu0
    %v292 = vadd.f32 0.0, %v291
    %v293 = vpop.f32.mrb[0].mxu0
    %294 = vmatprep.mubr.f32.mxu0 0.0
    %295 = vmatmul.mubr.f32.gmra.mrb[0].mxu0 %v57
    %v296 = vpop.f32.mrb[0].mxu0
    %v297 = vadd.f32 0.0, %v296
    %v298 = vpop.f32.mrb[0].mxu0
    %299 = vmatprep.mubr.f32.mxu0 0.0
    %300 = vmatmul.mubr.f32.gmra.mrb[0].mxu0 %v58
    %v301 = vpop.f32.mrb[0].mxu0
    %v302 = vadd.f32 0.0, %v301
    %v303 = vpop.f32.mrb[0].mxu0
    %304 = vmatprep.mubr.f32.mxu0 0.0
    %305 = vmatmul.mubr.f32.gmra.mrb[0].mxu0 %v59
    %v306 = vpop.f32.mrb[0].mxu0
    %v307 = vadd.f32 0.0, %v306
    %v308 = vpop.f32.mrb[0].mxu0
    %309 = vmatprep.mubr.f32.mxu0 0.0
    %310 = vmatmul.mubr.f32.gmra.mrb[0].mxu0 %v60
    %v311 = vpop.f32.mrb[0].mxu0
    %v312 = vadd.f32 0.0, %v311
    %v313 = vpop.f32.mrb[0].mxu0
    %314 = vmatprep.mubr.f32.mxu0 0.0
    %315 = vmatmul.mubr.f32.gmra.mrb[0].mxu0 %v61
    %v316 = vpop.f32.mrb[0].mxu0
    %v317 = vadd.f32 0.0, %v316
    %v318 = vpop.f32.mrb[0].mxu0
    %319 = vmatprep.mubr.f32.mxu0 0.0
    %320 = vmatmul.mubr.f32.gmra.mrb[0].mxu0 %v62
    %v321 = vpop.f32.mrb[0].mxu0
    %v322 = vadd.f32 0.0, %v321
    %v323 = vpop.f32.mrb[0].mxu0
    %324 = vmatprep.mubr.f32.mxu0 0.0
    %325 = vmatmul.mubr.f32.gmra.mrb[0].mxu0 %v63
    %v326 = vpop.f32.mrb[0].mxu0
    %v327 = vadd.f32 0.0, %v326
    %v328 = vpop.f32.mrb[0].mxu0
    %329 = vmatprep.mubr.f32.mxu0 0.0
    %330 = vmatmul.mubr.f32.gmra.mrb[0].mxu0 %v64
    %v331 = vpop.f32.mrb[0].mxu0
    %v332 = vadd.f32 0.0, %v331
    %v333 = vpop.f32.mrb[0].mxu0
    %334 = vmatprep.mubr.f32.mxu0 0.0
    %335 = vmatmul.mubr.f32.gmra.mrb[0].mxu0 %v65
    %v336 = vpop.f32.mrb[0].mxu0
    %v337 = vadd.f32 0.0, %v336
    %v338 = vpop.f32.mrb[0].mxu0
    %339 = vdwg.mxu0
    %341 = vset.pattern.permute.xlu0 3
    %342 = vperm.xlu0 %341, %v82
    %v343 = vpop.permute.xlu0 %342
    %346 = vset.pattern.permute.xlu0 3
    %347 = vperm.xlu0 %346, %v83
    %v348 = vpop.permute.xlu0 %347
    %351 = vset.pattern.permute.xlu0 3
    %352 = vperm.xlu0 %351, %v84
    %v353 = vpop.permute.xlu0 %352
    %356 = vset.pattern.permute.xlu0 3
    %357 = vperm.xlu0 %356, %v85
    %v358 = vpop.permute.xlu0 %357
    %361 = vset.pattern.permute.xlu0 3
    %362 = vperm.xlu0 %361, %v86
    %v363 = vpop.permute.xlu0 %362
    %366 = vset.pattern.permute.xlu0 3
    %367 = vperm.xlu0 %366, %v87
    %v368 = vpop.permute.xlu0 %367
    %371 = vset.pattern.permute.xlu0 3
    %372 = vperm.xlu0 %371, %v88
    %v373 = vpop.permute.xlu0 %372
    %376 = vset.pattern.permute.xlu0 3
    %377 = vperm.xlu0 %376, %v89
    %v378 = vpop.permute.xlu0 %377
    %381 = vset.pattern.permute.xlu0 3
    %382 = vperm.xlu0 %381, %v90
    %v383 = vpop.permute.xlu0 %382
    %386 = vset.pattern.permute.xlu0 3
    %387 = vperm.xlu0 %386, %v91
    %v388 = vpop.permute.xlu0 %387
    %391 = vset.pattern.permute.xlu0 3
    %392 = vperm.xlu0 %391, %v92
    %v393 = vpop.permute.xlu0 %392
    %396 = vset.pattern.permute.xlu0 3
    %397 = vperm.xlu0 %396, %v93
    %v398 = vpop.permute.xlu0 %397
    %401 = vset.pattern.permute.xlu0 3
    %402 = vperm.xlu0 %401, %v94
    %v403 = vpop.permute.xlu0 %402
    %406 = vset.pattern.permute.xlu0 3
    %407 = vperm.xlu0 %406, %v95
    %v408 = vpop.permute.xlu0 %407
    %411 = vset.pattern.permute.xlu0 3
    %412 = vperm.xlu0 %411, %v96
    %v413 = vpop.permute.xlu0 %412
    %416 = vset.pattern.permute.xlu0 3
    %417 = vperm.xlu0 %416, %v97
    %v418 = vpop.permute.xlu0 %417
    %421 = vset.pattern.permute.xlu0 3
    %422 = vperm.xlu0 %421, %v98
    %v423 = vpop.permute.xlu0 %422
    %426 = vset.pattern.permute.xlu0 3
    %427 = vperm.xlu0 %426, %v99
    %v428 = vpop.permute.xlu0 %427
    %431 = vset.pattern.permute.xlu0 3
    %432 = vperm.xlu0 %431, %v100
    %v433 = vpop.permute.xlu0 %432
    %436 = vset.pattern.permute.xlu0 3
    %437 = vperm.xlu0 %436, %v101
    %v438 = vpop.permute.xlu0 %437
    %441 = vset.pattern.permute.xlu0 3
    %442 = vperm.xlu0 %441, %v102
    %v443 = vpop.permute.xlu0 %442
    %446 = vset.pattern.permute.xlu0 3
    %447 = vperm.xlu0 %446, %v103
    %v448 = vpop.permute.xlu0 %447
    %451 = vset.pattern.permute.xlu0 3
    %452 = vperm.xlu0 %451, %v104
    %v453 = vpop.permute.xlu0 %452
    %456 = vset.pattern.permute.xlu0 3
    %457 = vperm.xlu0 %456, %v105
    %v458 = vpop.permute.xlu0 %457
    %461 = vset.pattern.permute.xlu0 3
    %462 = vperm.xlu0 %461, %v106
    %v463 = vpop.permute.xlu0 %462
    %466 = vset.pattern.permute.xlu0 3
    %467 = vperm.xlu0 %466, %v107
    %v468 = vpop.permute.xlu0 %467
    %471 = vset.pattern.permute.xlu0 3
    %472 = vperm.xlu0 %471, %v108
    %v473 = vpop.permute.xlu0 %472
    %476 = vset.pattern.permute.xlu0 3
    %477 = vperm.xlu0 %476, %v109
    %v478 = vpop.permute.xlu0 %477
    %481 = vset.pattern.permute.xlu0 3
    %482 = vperm.xlu0 %481, %v110
    %v483 = vpop.permute.xlu0 %482
    %486 = vset.pattern.permute.xlu0 3
    %487 = vperm.xlu0 %486, %v111
    %v488 = vpop.permute.xlu0 %487
    %491 = vset.pattern.permute.xlu0 3
    %492 = vperm.xlu0 %491, %v112
    %v493 = vpop.permute.xlu0 %492
    %496 = vset.pattern.permute.xlu0 3
    %497 = vperm.xlu0 %496, %v113
    %v498 = vpop.permute.xlu0 %497
    %v500 = vlaneseq
    %v501 = vshrl.u32 %v500, 7
    %v502 = vsub.s32 3, %v501
    %v503 = vrot.slane %v114, %v502
    %v504 = vadd.f32 %v343, %v503
    %v505 = vadd.f32 %v348, %v503
    %v506 = vadd.f32 %v353, %v503
    %v507 = vadd.f32 %v358, %v503
    %v508 = vadd.f32 %v363, %v503
    %v509 = vadd.f32 %v368, %v503
    %v510 = vadd.f32 %v373, %v503
    %v511 = vadd.f32 %v378, %v503
    %v512 = vadd.f32 %v383, %v503
    %v513 = vadd.f32 %v388, %v503
    %v514 = vadd.f32 %v393, %v503
    %v515 = vadd.f32 %v398, %v503
    %v516 = vadd.f32 %v403, %v503
    %v517 = vadd.f32 %v408, %v503
    %v518 = vadd.f32 %v413, %v503
    %v519 = vadd.f32 %v418, %v503
    %v520 = vadd.f32 %v423, %v503
    %v521 = vadd.f32 %v428, %v503
    %v522 = vadd.f32 %v433, %v503
    %v523 = vadd.f32 %v438, %v503
    %v524 = vadd.f32 %v443, %v503
    %v525 = vadd.f32 %v448, %v503
    %v526 = vadd.f32 %v453, %v503
    %v527 = vadd.f32 %v458, %v503
    %v528 = vadd.f32 %v463, %v503
    %v529 = vadd.f32 %v468, %v503
    %v530 = vadd.f32 %v473, %v503
    %v531 = vadd.f32 %v478, %v503
    %v532 = vadd.f32 %v483, %v503
    %v533 = vadd.f32 %v488, %v503
    %v534 = vadd.f32 %v493, %v503
    %v535 = vadd.f32 %v498, %v503
    %v536 = vmul.f32 %v182, 2.0
    %v537 = vmul.f32 %v187, 2.0
    %v538 = vmul.f32 %v192, 2.0
    %v539 = vmul.f32 %v197, 2.0
    %v540 = vmul.f32 %v202, 2.0
    %v541 = vmul.f32 %v207, 2.0
    %v542 = vmul.f32 %v212, 2.0
    %v543 = vmul.f32 %v217, 2.0
    %v544 = vmul.f32 %v222, 2.0
    %v545 = vmul.f32 %v227, 2.0
    %v546 = vmul.f32 %v232, 2.0
    %v547 = vmul.f32 %v237, 2.0
    %v548 = vmul.f32 %v242, 2.0
    %v549 = vmul.f32 %v247, 2.0
    %v550 = vmul.f32 %v252, 2.0
    %v551 = vmul.f32 %v257, 2.0
    %v552 = vmul.f32 %v262, 2.0
    %v553 = vmul.f32 %v267, 2.0
    %v554 = vmul.f32 %v272, 2.0
    %v555 = vmul.f32 %v277, 2.0
    %v556 = vmul.f32 %v282, 2.0
    %v557 = vmul.f32 %v287, 2.0
    %v558 = vmul.f32 %v292, 2.0
    %v559 = vmul.f32 %v297, 2.0
    %v560 = vmul.f32 %v302, 2.0
    %v561 = vmul.f32 %v307, 2.0
    %v562 = vmul.f32 %v312, 2.0
    %v563 = vmul.f32 %v317, 2.0
    %v564 = vmul.f32 %v322, 2.0
    %v565 = vmul.f32 %v327, 2.0
    %v566 = vmul.f32 %v332, 2.0
    %v567 = vmul.f32 %v337, 2.0
    %v568 = vsub.f32 %v504, %v536
    %v569 = vsub.f32 %v505, %v537
    %v570 = vsub.f32 %v506, %v538
    %v571 = vsub.f32 %v507, %v539
    %v572 = vsub.f32 %v508, %v540
    %v573 = vsub.f32 %v509, %v541
    %v574 = vsub.f32 %v510, %v542
    %v575 = vsub.f32 %v511, %v543
    %v576 = vsub.f32 %v512, %v544
    %v577 = vsub.f32 %v513, %v545
    %v578 = vsub.f32 %v514, %v546
    %v579 = vsub.f32 %v515, %v547
    %v580 = vsub.f32 %v516, %v548
    %v581 = vsub.f32 %v517, %v549
    %v582 = vsub.f32 %v518, %v550
    %v583 = vsub.f32 %v519, %v551
    %v584 = vsub.f32 %v520, %v552
    %v585 = vsub.f32 %v521, %v553
    %v586 = vsub.f32 %v522, %v554
    %v587 = vsub.f32 %v523, %v555
    %v588 = vsub.f32 %v524, %v556
    %v589 = vsub.f32 %v525, %v557
    %v590 = vsub.f32 %v526, %v558
    %v591 = vsub.f32 %v527, %v559
    %v592 = vsub.f32 %v528, %v560
    %v593 = vsub.f32 %v529, %v561
    %v594 = vsub.f32 %v530, %v562
    %v595 = vsub.f32 %v531, %v563
    %v596 = vsub.f32 %v532, %v564
    %v597 = vsub.f32 %v533, %v565
    %v598 = vsub.f32 %v534, %v566
    %v599 = vsub.f32 %v535, %v567
    %v600 = vmax.f32 %v568, 0.0
    %v601 = vmax.f32 %v569, 0.0
    %v602 = vmax.f32 %v570, 0.0
    %v603 = vmax.f32 %v571, 0.0
    %v604 = vmax.f32 %v572, 0.0
    %v605 = vmax.f32 %v573, 0.0
    %v606 = vmax.f32 %v574, 0.0
    %v607 = vmax.f32 %v575, 0.0
    %v608 = vmax.f32 %v576, 0.0
    %v609 = vmax.f32 %v577, 0.0
    %v610 = vmax.f32 %v578, 0.0
    %v611 = vmax.f32 %v579, 0.0
    %v612 = vmax.f32 %v580, 0.0
    %v613 = vmax.f32 %v581, 0.0
    %v614 = vmax.f32 %v582, 0.0
    %v615 = vmax.f32 %v583, 0.0
    %v616 = vmax.f32 %v584, 0.0
    %v617 = vmax.f32 %v585, 0.0
    %v618 = vmax.f32 %v586, 0.0
    %v619 = vmax.f32 %v587, 0.0
    %v620 = vmax.f32 %v588, 0.0
    %v621 = vmax.f32 %v589, 0.0
    %v622 = vmax.f32 %v590, 0.0
    %v623 = vmax.f32 %v591, 0.0
    %v624 = vmax.f32 %v592, 0.0
    %v625 = vmax.f32 %v593, 0.0
    %v626 = vmax.f32 %v594, 0.0
    %v627 = vmax.f32 %v595, 0.0
    %v628 = vmax.f32 %v596, 0.0
    %v629 = vmax.f32 %v597, 0.0
    %v630 = vmax.f32 %v598, 0.0
    %v631 = vmax.f32 %v599, 0.0
    %632 = vset.pattern.permute.xlu0 0
    %633 = vperm.xlu0 %632, %v82
    %v634 = vpop.permute.xlu0 %633
    %636 = vset.pattern.permute.xlu0 0
    %637 = vperm.xlu0 %636, %v83
    %v638 = vpop.permute.xlu0 %637
    %640 = vset.pattern.permute.xlu0 0
    %641 = vperm.xlu0 %640, %v84
    %v642 = vpop.permute.xlu0 %641
    %644 = vset.pattern.permute.xlu0 0
    %645 = vperm.xlu0 %644, %v85
    %v646 = vpop.permute.xlu0 %645
    %648 = vset.pattern.permute.xlu0 0
    %649 = vperm.xlu0 %648, %v86
    %v650 = vpop.permute.xlu0 %649
    %652 = vset.pattern.permute.xlu0 0
    %653 = vperm.xlu0 %652, %v87
    %v654 = vpop.permute.xlu0 %653
    %656 = vset.pattern.permute.xlu0 0
    %657 = vperm.xlu0 %656, %v88
    %v658 = vpop.permute.xlu0 %657
    %660 = vset.pattern.permute.xlu0 0
    %661 = vperm.xlu0 %660, %v89
    %v662 = vpop.permute.xlu0 %661
    %664 = vset.pattern.permute.xlu0 0
    %665 = vperm.xlu0 %664, %v90
    %v666 = vpop.permute.xlu0 %665
    %668 = vset.pattern.permute.xlu0 0
    %669 = vperm.xlu0 %668, %v91
    %v670 = vpop.permute.xlu0 %669
    %672 = vset.pattern.permute.xlu0 0
    %673 = vperm.xlu0 %672, %v92
    %v674 = vpop.permute.xlu0 %673
    %676 = vset.pattern.permute.xlu0 0
    %677 = vperm.xlu0 %676, %v93
    %v678 = vpop.permute.xlu0 %677
    %680 = vset.pattern.permute.xlu0 0
    %681 = vperm.xlu0 %680, %v94
    %v682 = vpop.permute.xlu0 %681
    %684 = vset.pattern.permute.xlu0 0
    %685 = vperm.xlu0 %684, %v95
    %v686 = vpop.permute.xlu0 %685
    %688 = vset.pattern.permute.xlu0 0
    %689 = vperm.xlu0 %688, %v96
    %v690 = vpop.permute.xlu0 %689
    %692 = vset.pattern.permute.xlu0 0
    %693 = vperm.xlu0 %692, %v97
    %v694 = vpop.permute.xlu0 %693
    %696 = vset.pattern.permute.xlu0 0
    %697 = vperm.xlu0 %696, %v98
    %v698 = vpop.permute.xlu0 %697
    %700 = vset.pattern.permute.xlu0 0
    %701 = vperm.xlu0 %700, %v99
    %v702 = vpop.permute.xlu0 %701
    %704 = vset.pattern.permute.xlu0 0
    %705 = vperm.xlu0 %704, %v100
    %v706 = vpop.permute.xlu0 %705
    %708 = vset.pattern.permute.xlu0 0
    %709 = vperm.xlu0 %708, %v101
    %v710 = vpop.permute.xlu0 %709
    %712 = vset.pattern.permute.xlu0 0
    %713 = vperm.xlu0 %712, %v102
    %v714 = vpop.permute.xlu0 %713
    %716 = vset.pattern.permute.xlu0 0
    %717 = vperm.xlu0 %716, %v103
    %v718 = vpop.permute.xlu0 %717
    %720 = vset.pattern.permute.xlu0 0
    %721 = vperm.xlu0 %720, %v104
    %v722 = vpop.permute.xlu0 %721
    %724 = vset.pattern.permute.xlu0 0
    %725 = vperm.xlu0 %724, %v105
    %v726 = vpop.permute.xlu0 %725
    %728 = vset.pattern.permute.xlu0 0
    %729 = vperm.xlu0 %728, %v106
    %v730 = vpop.permute.xlu0 %729
    %732 = vset.pattern.permute.xlu0 0
    %733 = vperm.xlu0 %732, %v107
    %v734 = vpop.permute.xlu0 %733
    %736 = vset.pattern.permute.xlu0 0
    %737 = vperm.xlu0 %736, %v108
    %v738 = vpop.permute.xlu0 %737
    %740 = vset.pattern.permute.xlu0 0
    %741 = vperm.xlu0 %740, %v109
    %v742 = vpop.permute.xlu0 %741
    %744 = vset.pattern.permute.xlu0 0
    %745 = vperm.xlu0 %744, %v110
    %v746 = vpop.permute.xlu0 %745
    %748 = vset.pattern.permute.xlu0 0
    %749 = vperm.xlu0 %748, %v111
    %v750 = vpop.permute.xlu0 %749
    %752 = vset.pattern.permute.xlu0 0
    %753 = vperm.xlu0 %752, %v112
    %v754 = vpop.permute.xlu0 %753
    %756 = vset.pattern.permute.xlu0 0
    %757 = vperm.xlu0 %756, %v113
    %v758 = vpop.permute.xlu0 %757
    %v760 = vlaneseq
    %v761 = vshrl.u32 %v760, 7
    %v762 = vsub.s32 0, %v761
    %v763 = vrot.slane %v114, %v762
    %v764 = vmul.f32 %v634, %v763
    %v765 = vmul.f32 %v638, %v763
    %v766 = vmul.f32 %v642, %v763
    %v767 = vmul.f32 %v646, %v763
    %v768 = vmul.f32 %v650, %v763
    %v769 = vmul.f32 %v654, %v763
    %v770 = vmul.f32 %v658, %v763
    %v771 = vmul.f32 %v662, %v763
    %v772 = vmul.f32 %v666, %v763
    %v773 = vmul.f32 %v670, %v763
    %v774 = vmul.f32 %v674, %v763
    %v775 = vmul.f32 %v678, %v763
    %v776 = vmul.f32 %v682, %v763
    %v777 = vmul.f32 %v686, %v763
    %v778 = vmul.f32 %v690, %v763
    %v779 = vmul.f32 %v694, %v763
    %v780 = vmul.f32 %v698, %v763
    %v781 = vmul.f32 %v702, %v763
    %v782 = vmul.f32 %v706, %v763
    %v783 = vmul.f32 %v710, %v763
    %v784 = vmul.f32 %v714, %v763
    %v785 = vmul.f32 %v718, %v763
    %v786 = vmul.f32 %v722, %v763
    %v787 = vmul.f32 %v726, %v763
    %v788 = vmul.f32 %v730, %v763
    %v789 = vmul.f32 %v734, %v763
    %v790 = vmul.f32 %v738, %v763
    %v791 = vmul.f32 %v742, %v763
    %v792 = vmul.f32 %v746, %v763
    %v793 = vmul.f32 %v750, %v763
    %v794 = vmul.f32 %v754, %v763
    %v795 = vmul.f32 %v758, %v763
    %796 = vset.pattern.permute.xlu0 2
    %797 = vperm.xlu0 %796, %v82
    %v798 = vpop.permute.xlu0 %797
    %800 = vset.pattern.permute.xlu0 2
    %801 = vperm.xlu0 %800, %v83
    %v802 = vpop.permute.xlu0 %801
    %804 = vset.pattern.permute.xlu0 2
    %805 = vperm.xlu0 %804, %v84
    %v806 = vpop.permute.xlu0 %805
    %808 = vset.pattern.permute.xlu0 2
    %809 = vperm.xlu0 %808, %v85
    %v810 = vpop.permute.xlu0 %809
    %812 = vset.pattern.permute.xlu0 2
    %813 = vperm.xlu0 %812, %v86
    %v814 = vpop.permute.xlu0 %813
    %816 = vset.pattern.permute.xlu0 2
    %817 = vperm.xlu0 %816, %v87
    %v818 = vpop.permute.xlu0 %817
    %820 = vset.pattern.permute.xlu0 2
    %821 = vperm.xlu0 %820, %v88
    %v822 = vpop.permute.xlu0 %821
    %824 = vset.pattern.permute.xlu0 2
    %825 = vperm.xlu0 %824, %v89
    %v826 = vpop.permute.xlu0 %825
    %828 = vset.pattern.permute.xlu0 2
    %829 = vperm.xlu0 %828, %v90
    %v830 = vpop.permute.xlu0 %829
    %832 = vset.pattern.permute.xlu0 2
    %833 = vperm.xlu0 %832, %v91
    %v834 = vpop.permute.xlu0 %833
    %836 = vset.pattern.permute.xlu0 2
    %837 = vperm.xlu0 %836, %v92
    %v838 = vpop.permute.xlu0 %837
    %840 = vset.pattern.permute.xlu0 2
    %841 = vperm.xlu0 %840, %v93
    %v842 = vpop.permute.xlu0 %841
    %844 = vset.pattern.permute.xlu0 2
    %845 = vperm.xlu0 %844, %v94
    %v846 = vpop.permute.xlu0 %845
    %848 = vset.pattern.permute.xlu0 2
    %849 = vperm.xlu0 %848, %v95
    %v850 = vpop.permute.xlu0 %849
    %852 = vset.pattern.permute.xlu0 2
    %853 = vperm.xlu0 %852, %v96
    %v854 = vpop.permute.xlu0 %853
    %856 = vset.pattern.permute.xlu0 2
    %857 = vperm.xlu0 %856, %v97
    %v858 = vpop.permute.xlu0 %857
    %860 = vset.pattern.permute.xlu0 2
    %861 = vperm.xlu0 %860, %v98
    %v862 = vpop.permute.xlu0 %861
    %864 = vset.pattern.permute.xlu0 2
    %865 = vperm.xlu0 %864, %v99
    %v866 = vpop.permute.xlu0 %865
    %868 = vset.pattern.permute.xlu0 2
    %869 = vperm.xlu0 %868, %v100
    %v870 = vpop.permute.xlu0 %869
    %872 = vset.pattern.permute.xlu0 2
    %873 = vperm.xlu0 %872, %v101
    %v874 = vpop.permute.xlu0 %873
    %876 = vset.pattern.permute.xlu0 2
    %877 = vperm.xlu0 %876, %v102
    %v878 = vpop.permute.xlu0 %877
    %880 = vset.pattern.permute.xlu0 2
    %881 = vperm.xlu0 %880, %v103
    %v882 = vpop.permute.xlu0 %881
    %884 = vset.pattern.permute.xlu0 2
    %885 = vperm.xlu0 %884, %v104
    %v886 = vpop.permute.xlu0 %885
    %888 = vset.pattern.permute.xlu0 2
    %889 = vperm.xlu0 %888, %v105
    %v890 = vpop.permute.xlu0 %889
    %892 = vset.pattern.permute.xlu0 2
    %893 = vperm.xlu0 %892, %v106
    %v894 = vpop.permute.xlu0 %893
    %896 = vset.pattern.permute.xlu0 2
    %897 = vperm.xlu0 %896, %v107
    %v898 = vpop.permute.xlu0 %897
    %900 = vset.pattern.permute.xlu0 2
    %901 = vperm.xlu0 %900, %v108
    %v902 = vpop.permute.xlu0 %901
    %904 = vset.pattern.permute.xlu0 2
    %905 = vperm.xlu0 %904, %v109
    %v906 = vpop.permute.xlu0 %905
    %908 = vset.pattern.permute.xlu0 2
    %909 = vperm.xlu0 %908, %v110
    %v910 = vpop.permute.xlu0 %909
    %912 = vset.pattern.permute.xlu0 2
    %913 = vperm.xlu0 %912, %v111
    %v914 = vpop.permute.xlu0 %913
    %916 = vset.pattern.permute.xlu0 2
    %917 = vperm.xlu0 %916, %v112
    %v918 = vpop.permute.xlu0 %917
    %920 = vset.pattern.permute.xlu0 2
    %921 = vperm.xlu0 %920, %v113
    %v922 = vpop.permute.xlu0 %921
    %v924 = vlaneseq
    %v925 = vshrl.u32 %v924, 7
    %v926 = vsub.s32 2, %v925
    %v927 = vrot.slane %v114, %v926
    %vm928 = vcmp.eq.f32.partialorder %v798, %v927
    %vm929 = vcmp.eq.f32.partialorder %v802, %v927
    %vm930 = vcmp.eq.f32.partialorder %v806, %v927
    %vm931 = vcmp.eq.f32.partialorder %v810, %v927
    %vm932 = vcmp.eq.f32.partialorder %v814, %v927
    %vm933 = vcmp.eq.f32.partialorder %v818, %v927
    %vm934 = vcmp.eq.f32.partialorder %v822, %v927
    %vm935 = vcmp.eq.f32.partialorder %v826, %v927
    %vm936 = vcmp.eq.f32.partialorder %v830, %v927
    %vm937 = vcmp.eq.f32.partialorder %v834, %v927
    %vm938 = vcmp.eq.f32.partialorder %v838, %v927
    %vm939 = vcmp.eq.f32.partialorder %v842, %v927
    %vm940 = vcmp.eq.f32.partialorder %v846, %v927
    %vm941 = vcmp.eq.f32.partialorder %v850, %v927
    %vm942 = vcmp.eq.f32.partialorder %v854, %v927
    %vm943 = vcmp.eq.f32.partialorder %v858, %v927
    %vm944 = vcmp.eq.f32.partialorder %v862, %v927
    %vm945 = vcmp.eq.f32.partialorder %v866, %v927
    %vm946 = vcmp.eq.f32.partialorder %v870, %v927
    %vm947 = vcmp.eq.f32.partialorder %v874, %v927
    %vm948 = vcmp.eq.f32.partialorder %v878, %v927
    %vm949 = vcmp.eq.f32.partialorder %v882, %v927
    %vm950 = vcmp.eq.f32.partialorder %v886, %v927
    %vm951 = vcmp.eq.f32.partialorder %v890, %v927
    %vm952 = vcmp.eq.f32.partialorder %v894, %v927
    %vm953 = vcmp.eq.f32.partialorder %v898, %v927
    %vm954 = vcmp.eq.f32.partialorder %v902, %v927
    %vm955 = vcmp.eq.f32.partialorder %v906, %v927
    %vm956 = vcmp.eq.f32.partialorder %v910, %v927
    %vm957 = vcmp.eq.f32.partialorder %v914, %v927
    %vm958 = vcmp.eq.f32.partialorder %v918, %v927
    %vm959 = vcmp.eq.f32.partialorder %v922, %v927
    %960 = vset.pattern.permute.xlu0 1
    %961 = vperm.xlu0 %960, %v82
    %v962 = vpop.permute.xlu0 %961
    %964 = vset.pattern.permute.xlu0 1
    %965 = vperm.xlu0 %964, %v83
    %v966 = vpop.permute.xlu0 %965
    %968 = vset.pattern.permute.xlu0 1
    %969 = vperm.xlu0 %968, %v84
    %v970 = vpop.permute.xlu0 %969
    %972 = vset.pattern.permute.xlu0 1
    %973 = vperm.xlu0 %972, %v85
    %v974 = vpop.permute.xlu0 %973
    %976 = vset.pattern.permute.xlu0 1
    %977 = vperm.xlu0 %976, %v86
    %v978 = vpop.permute.xlu0 %977
    %980 = vset.pattern.permute.xlu0 1
    %981 = vperm.xlu0 %980, %v87
    %v982 = vpop.permute.xlu0 %981
    %984 = vset.pattern.permute.xlu0 1
    %985 = vperm.xlu0 %984, %v88
    %v986 = vpop.permute.xlu0 %985
    %988 = vset.pattern.permute.xlu0 1
    %989 = vperm.xlu0 %988, %v89
    %v990 = vpop.permute.xlu0 %989
    %992 = vset.pattern.permute.xlu0 1
    %993 = vperm.xlu0 %992, %v90
    %v994 = vpop.permute.xlu0 %993
    %996 = vset.pattern.permute.xlu0 1
    %997 = vperm.xlu0 %996, %v91
    %v998 = vpop.permute.xlu0 %997
    %1000 = vset.pattern.permute.xlu0 1
    %1001 = vperm.xlu0 %1000, %v92
    %v1002 = vpop.permute.xlu0 %1001
    %1004 = vset.pattern.permute.xlu0 1
    %1005 = vperm.xlu0 %1004, %v93
    %v1006 = vpop.permute.xlu0 %1005
    %1008 = vset.pattern.permute.xlu0 1
    %1009 = vperm.xlu0 %1008, %v94
    %v1010 = vpop.permute.xlu0 %1009
    %1012 = vset.pattern.permute.xlu0 1
    %1013 = vperm.xlu0 %1012, %v95
    %v1014 = vpop.permute.xlu0 %1013
    %1016 = vset.pattern.permute.xlu0 1
    %1017 = vperm.xlu0 %1016, %v96
    %v1018 = vpop.permute.xlu0 %1017
    %1020 = vset.pattern.permute.xlu0 1
    %1021 = vperm.xlu0 %1020, %v97
    %v1022 = vpop.permute.xlu0 %1021
    %1024 = vset.pattern.permute.xlu0 1
    %1025 = vperm.xlu0 %1024, %v98
    %v1026 = vpop.permute.xlu0 %1025
    %1028 = vset.pattern.permute.xlu0 1
    %1029 = vperm.xlu0 %1028, %v99
    %v1030 = vpop.permute.xlu0 %1029
    %1032 = vset.pattern.permute.xlu0 1
    %1033 = vperm.xlu0 %1032, %v100
    %v1034 = vpop.permute.xlu0 %1033
    %1036 = vset.pattern.permute.xlu0 1
    %1037 = vperm.xlu0 %1036, %v101
    %v1038 = vpop.permute.xlu0 %1037
    %1040 = vset.pattern.permute.xlu0 1
    %1041 = vperm.xlu0 %1040, %v102
    %v1042 = vpop.permute.xlu0 %1041
    %1044 = vset.pattern.permute.xlu0 1
    %1045 = vperm.xlu0 %1044, %v103
    %v1046 = vpop.permute.xlu0 %1045
    %1048 = vset.pattern.permute.xlu0 1
    %1049 = vperm.xlu0 %1048, %v104
    %v1050 = vpop.permute.xlu0 %1049
    %1052 = vset.pattern.permute.xlu0 1
    %1053 = vperm.xlu0 %1052, %v105
    %v1054 = vpop.permute.xlu0 %1053
    %1056 = vset.pattern.permute.xlu0 1
    %1057 = vperm.xlu0 %1056, %v106
    %v1058 = vpop.permute.xlu0 %1057
    %1060 = vset.pattern.permute.xlu0 1
    %1061 = vperm.xlu0 %1060, %v107
    %v1062 = vpop.permute.xlu0 %1061
    %1064 = vset.pattern.permute.xlu0 1
    %1065 = vperm.xlu0 %1064, %v108
    %v1066 = vpop.permute.xlu0 %1065
    %1068 = vset.pattern.permute.xlu0 1
    %1069 = vperm.xlu0 %1068, %v109
    %v1070 = vpop.permute.xlu0 %1069
    %1072 = vset.pattern.permute.xlu0 1
    %1073 = vperm.xlu0 %1072, %v110
    %v1074 = vpop.permute.xlu0 %1073
    %1076 = vset.pattern.permute.xlu0 1
    %1077 = vperm.xlu0 %1076, %v111
    %v1078 = vpop.permute.xlu0 %1077
    %1080 = vset.pattern.permute.xlu0 1
    %1081 = vperm.xlu0 %1080, %v112
    %v1082 = vpop.permute.xlu0 %1081
    %1084 = vset.pattern.permute.xlu0 1
    %1085 = vperm.xlu0 %1084, %v113
    %v1086 = vpop.permute.xlu0 %1085
    %v1088 = vlaneseq
    %v1089 = vshrl.u32 %v1088, 7
    %v1090 = vsub.s32 1, %v1089
    %v1091 = vrot.slane %v114, %v1090
    %v1092 = vmul.f32 %v962, %v1091
    %v1093 = vmul.f32 %v966, %v1091
    %v1094 = vmul.f32 %v970, %v1091
    %v1095 = vmul.f32 %v974, %v1091
    %v1096 = vmul.f32 %v978, %v1091
    %v1097 = vmul.f32 %v982, %v1091
    %v1098 = vmul.f32 %v986, %v1091
    %v1099 = vmul.f32 %v990, %v1091
    %v1100 = vmul.f32 %v994, %v1091
    %v1101 = vmul.f32 %v998, %v1091
    %v1102 = vmul.f32 %v1002, %v1091
    %v1103 = vmul.f32 %v1006, %v1091
    %v1104 = vmul.f32 %v1010, %v1091
    %v1105 = vmul.f32 %v1014, %v1091
    %v1106 = vmul.f32 %v1018, %v1091
    %v1107 = vmul.f32 %v1022, %v1091
    %v1108 = vmul.f32 %v1026, %v1091
    %v1109 = vmul.f32 %v1030, %v1091
    %v1110 = vmul.f32 %v1034, %v1091
    %v1111 = vmul.f32 %v1038, %v1091
    %v1112 = vmul.f32 %v1042, %v1091
    %v1113 = vmul.f32 %v1046, %v1091
    %v1114 = vmul.f32 %v1050, %v1091
    %v1115 = vmul.f32 %v1054, %v1091
    %v1116 = vmul.f32 %v1058, %v1091
    %v1117 = vmul.f32 %v1062, %v1091
    %v1118 = vmul.f32 %v1066, %v1091
    %v1119 = vmul.f32 %v1070, %v1091
    %v1120 = vmul.f32 %v1074, %v1091
    %v1121 = vmul.f32 %v1078, %v1091
    %v1122 = vmul.f32 %v1082, %v1091
    %v1123 = vmul.f32 %v1086, %v1091
    %v1124 = vsel %vm928, %v1092, 0.0
    %v1125 = vsel %vm929, %v1093, 0.0
    %v1126 = vsel %vm930, %v1094, 0.0
    %v1127 = vsel %vm931, %v1095, 0.0
    %v1128 = vsel %vm932, %v1096, 0.0
    %v1129 = vsel %vm933, %v1097, 0.0
    %v1130 = vsel %vm934, %v1098, 0.0
    %v1131 = vsel %vm935, %v1099, 0.0
    %v1132 = vsel %vm936, %v1100, 0.0
    %v1133 = vsel %vm937, %v1101, 0.0
    %v1134 = vsel %vm938, %v1102, 0.0
    %v1135 = vsel %vm939, %v1103, 0.0
    %v1136 = vsel %vm940, %v1104, 0.0
    %v1137 = vsel %vm941, %v1105, 0.0
    %v1138 = vsel %vm942, %v1106, 0.0
    %v1139 = vsel %vm943, %v1107, 0.0
    %v1140 = vsel %vm944, %v1108, 0.0
    %v1141 = vsel %vm945, %v1109, 0.0
    %v1142 = vsel %vm946, %v1110, 0.0
    %v1143 = vsel %vm947, %v1111, 0.0
    %v1144 = vsel %vm948, %v1112, 0.0
    %v1145 = vsel %vm949, %v1113, 0.0
    %v1146 = vsel %vm950, %v1114, 0.0
    %v1147 = vsel %vm951, %v1115, 0.0
    %v1148 = vsel %vm952, %v1116, 0.0
    %v1149 = vsel %vm953, %v1117, 0.0
    %v1150 = vsel %vm954, %v1118, 0.0
    %v1151 = vsel %vm955, %v1119, 0.0
    %v1152 = vsel %vm956, %v1120, 0.0
    %v1153 = vsel %vm957, %v1121, 0.0
    %v1154 = vsel %vm958, %v1122, 0.0
    %v1155 = vsel %vm959, %v1123, 0.0
    %v1156 = vadd.f32 %v764, %v1124
    %v1157 = vadd.f32 %v765, %v1125
    %v1158 = vadd.f32 %v766, %v1126
    %v1159 = vadd.f32 %v767, %v1127
    %v1160 = vadd.f32 %v768, %v1128
    %v1161 = vadd.f32 %v769, %v1129
    %v1162 = vadd.f32 %v770, %v1130
    %v1163 = vadd.f32 %v771, %v1131
    %v1164 = vadd.f32 %v772, %v1132
    %v1165 = vadd.f32 %v773, %v1133
    %v1166 = vadd.f32 %v774, %v1134
    %v1167 = vadd.f32 %v775, %v1135
    %v1168 = vadd.f32 %v776, %v1136
    %v1169 = vadd.f32 %v777, %v1137
    %v1170 = vadd.f32 %v778, %v1138
    %v1171 = vadd.f32 %v779, %v1139
    %v1172 = vadd.f32 %v780, %v1140
    %v1173 = vadd.f32 %v781, %v1141
    %v1174 = vadd.f32 %v782, %v1142
    %v1175 = vadd.f32 %v783, %v1143
    %v1176 = vadd.f32 %v784, %v1144
    %v1177 = vadd.f32 %v785, %v1145
    %v1178 = vadd.f32 %v786, %v1146
    %v1179 = vadd.f32 %v787, %v1147
    %v1180 = vadd.f32 %v788, %v1148
    %v1181 = vadd.f32 %v789, %v1149
    %v1182 = vadd.f32 %v790, %v1150
    %v1183 = vadd.f32 %v791, %v1151
    %v1184 = vadd.f32 %v792, %v1152
    %v1185 = vadd.f32 %v793, %v1153
    %v1186 = vadd.f32 %v794, %v1154
    %v1187 = vadd.f32 %v795, %v1155
    %s1188 = ssub.f32 0.0, %s33
    %v1189 = vstv %s1188
    %v1190 = vmul.f32 %v1189, %v600
    %v1191 = vmul.f32 %v1189, %v601
    %v1192 = vmul.f32 %v1189, %v602
    %v1193 = vmul.f32 %v1189, %v603
    %v1194 = vmul.f32 %v1189, %v604
    %v1195 = vmul.f32 %v1189, %v605
    %v1196 = vmul.f32 %v1189, %v606
    %v1197 = vmul.f32 %v1189, %v607
    %v1198 = vmul.f32 %v1189, %v608
    %v1199 = vmul.f32 %v1189, %v609
    %v1200 = vmul.f32 %v1189, %v610
    %v1201 = vmul.f32 %v1189, %v611
    %v1202 = vmul.f32 %v1189, %v612
    %v1203 = vmul.f32 %v1189, %v613
    %v1204 = vmul.f32 %v1189, %v614
    %v1205 = vmul.f32 %v1189, %v615
    %v1206 = vmul.f32 %v1189, %v616
    %v1207 = vmul.f32 %v1189, %v617
    %v1208 = vmul.f32 %v1189, %v618
    %v1209 = vmul.f32 %v1189, %v619
    %v1210 = vmul.f32 %v1189, %v620
    %v1211 = vmul.f32 %v1189, %v621
    %v1212 = vmul.f32 %v1189, %v622
    %v1213 = vmul.f32 %v1189, %v623
    %v1214 = vmul.f32 %v1189, %v624
    %v1215 = vmul.f32 %v1189, %v625
    %v1216 = vmul.f32 %v1189, %v626
    %v1217 = vmul.f32 %v1189, %v627
    %v1218 = vmul.f32 %v1189, %v628
    %v1219 = vmul.f32 %v1189, %v629
    %v1220 = vmul.f32 %v1189, %v630
    %v1221 = vmul.f32 %v1189, %v631
    %v1222 = vmul.f32 %v1190, 1.442695
    %v1223 = vpow.pop %v1222
    %v1224 = vmul.f32 %v1191, 1.442695
    %v1225 = vpow.pop %v1224
    %v1226 = vmul.f32 %v1192, 1.442695
    %v1227 = vpow.pop %v1226
    %v1228 = vmul.f32 %v1193, 1.442695
    %v1229 = vpow.pop %v1228
    %v1230 = vmul.f32 %v1194, 1.442695
    %v1231 = vpow.pop %v1230
    %v1232 = vmul.f32 %v1195, 1.442695
    %v1233 = vpow.pop %v1232
    %v1234 = vmul.f32 %v1196, 1.442695
    %v1235 = vpow.pop %v1234
    %v1236 = vmul.f32 %v1197, 1.442695
    %v1237 = vpow.pop %v1236
    %v1238 = vmul.f32 %v1198, 1.442695
    %v1239 = vpow.pop %v1238
    %v1240 = vmul.f32 %v1199, 1.442695
    %v1241 = vpow.pop %v1240
    %v1242 = vmul.f32 %v1200, 1.442695
    %v1243 = vpow.pop %v1242
    %v1244 = vmul.f32 %v1201, 1.442695
    %v1245 = vpow.pop %v1244
    %v1246 = vmul.f32 %v1202, 1.442695
    %v1247 = vpow.pop %v1246
    %v1248 = vmul.f32 %v1203, 1.442695
    %v1249 = vpow.pop %v1248
    %v1250 = vmul.f32 %v1204, 1.442695
    %v1251 = vpow.pop %v1250
    %v1252 = vmul.f32 %v1205, 1.442695
    %v1253 = vpow.pop %v1252
    %v1254 = vmul.f32 %v1206, 1.442695
    %v1255 = vpow.pop %v1254
    %v1256 = vmul.f32 %v1207, 1.442695
    %v1257 = vpow.pop %v1256
    %v1258 = vmul.f32 %v1208, 1.442695
    %v1259 = vpow.pop %v1258
    %v1260 = vmul.f32 %v1209, 1.442695
    %v1261 = vpow.pop %v1260
    %v1262 = vmul.f32 %v1210, 1.442695
    %v1263 = vpow.pop %v1262
    %v1264 = vmul.f32 %v1211, 1.442695
    %v1265 = vpow.pop %v1264
    %v1266 = vmul.f32 %v1212, 1.442695
    %v1267 = vpow.pop %v1266
    %v1268 = vmul.f32 %v1213, 1.442695
    %v1269 = vpow.pop %v1268
    %v1270 = vmul.f32 %v1214, 1.442695
    %v1271 = vpow.pop %v1270
    %v1272 = vmul.f32 %v1215, 1.442695
    %v1273 = vpow.pop %v1272
    %v1274 = vmul.f32 %v1216, 1.442695
    %v1275 = vpow.pop %v1274
    %v1276 = vmul.f32 %v1217, 1.442695
    %v1277 = vpow.pop %v1276
    %v1278 = vmul.f32 %v1218, 1.442695
    %v1279 = vpow.pop %v1278
    %v1280 = vmul.f32 %v1219, 1.442695
    %v1281 = vpow.pop %v1280
    %v1282 = vmul.f32 %v1220, 1.442695
    %v1283 = vpow.pop %v1282
    %v1284 = vmul.f32 %v1221, 1.442695
    %v1285 = vpow.pop %v1284
    %v1286 = vmul.f32 %v1156, %v1223
    %v1287 = vmul.f32 %v1157, %v1225
    %v1288 = vmul.f32 %v1158, %v1227
    %v1289 = vmul.f32 %v1159, %v1229
    %v1290 = vmul.f32 %v1160, %v1231
    %v1291 = vmul.f32 %v1161, %v1233
    %v1292 = vmul.f32 %v1162, %v1235
    %v1293 = vmul.f32 %v1163, %v1237
    %v1294 = vmul.f32 %v1164, %v1239
    %v1295 = vmul.f32 %v1165, %v1241
    %v1296 = vmul.f32 %v1166, %v1243
    %v1297 = vmul.f32 %v1167, %v1245
    %v1298 = vmul.f32 %v1168, %v1247
    %v1299 = vmul.f32 %v1169, %v1249
    %v1300 = vmul.f32 %v1170, %v1251
    %v1301 = vmul.f32 %v1171, %v1253
    %v1302 = vmul.f32 %v1172, %v1255
    %v1303 = vmul.f32 %v1173, %v1257
    %v1304 = vmul.f32 %v1174, %v1259
    %v1305 = vmul.f32 %v1175, %v1261
    %v1306 = vmul.f32 %v1176, %v1263
    %v1307 = vmul.f32 %v1177, %v1265
    %v1308 = vmul.f32 %v1178, %v1267
    %v1309 = vmul.f32 %v1179, %v1269
    %v1310 = vmul.f32 %v1180, %v1271
    %v1311 = vmul.f32 %v1181, %v1273
    %v1312 = vmul.f32 %v1182, %v1275
    %v1313 = vmul.f32 %v1183, %v1277
    %v1314 = vmul.f32 %v1184, %v1279
    %v1315 = vmul.f32 %v1185, %v1281
    %v1316 = vmul.f32 %v1186, %v1283
    %v1317 = vmul.f32 %v1187, %v1285
    %1318 = vst [vmem:[%s5] sm:$0xff] %v1286
    %1319 = vst [vmem:[%s5 + $0x8] sm:$0xff] %v1287
    %1320 = vst [vmem:[%s5 + $0x10] sm:$0xff] %v1288
    %1321 = vst [vmem:[%s5 + $0x18] sm:$0xff] %v1289
    %1322 = vst [vmem:[%s5 + $0x20] sm:$0xff] %v1290
    %1323 = vst [vmem:[%s5 + $0x28] sm:$0xff] %v1291
    %1324 = vst [vmem:[%s5 + $0x30] sm:$0xff] %v1292
    %1325 = vst [vmem:[%s5 + $0x38] sm:$0xff] %v1293
    %1326 = vst [vmem:[%s5 + $0x40] sm:$0xff] %v1294
    %1327 = vst [vmem:[%s5 + $0x48] sm:$0xff] %v1295
    %1328 = vst [vmem:[%s5 + $0x50] sm:$0xff] %v1296
    %1329 = vst [vmem:[%s5 + $0x58] sm:$0xff] %v1297
    %1330 = vst [vmem:[%s5 + $0x60] sm:$0xff] %v1298
    %1331 = vst [vmem:[%s5 + $0x68] sm:$0xff] %v1299
    %1332 = vst [vmem:[%s5 + $0x70] sm:$0xff] %v1300
    %1333 = vst [vmem:[%s5 + $0x78] sm:$0xff] %v1301
    %1334 = vst [vmem:[%s5 + $0x80] sm:$0xff] %v1302
    %1335 = vst [vmem:[%s5 + $0x88] sm:$0xff] %v1303
    %1336 = vst [vmem:[%s5 + $0x90] sm:$0xff] %v1304
    %1337 = vst [vmem:[%s5 + $0x98] sm:$0xff] %v1305
    %1338 = vst [vmem:[%s5 + $0xa0] sm:$0xff] %v1306
    %1339 = vst [vmem:[%s5 + $0xa8] sm:$0xff] %v1307
    %1340 = vst [vmem:[%s5 + $0xb0] sm:$0xff] %v1308
    %1341 = vst [vmem:[%s5 + $0xb8] sm:$0xff] %v1309
    %1342 = vst [vmem:[%s5 + $0xc0] sm:$0xff] %v1310
    %1343 = vst [vmem:[%s5 + $0xc8] sm:$0xff] %v1311
    %1344 = vst [vmem:[%s5 + $0xd0] sm:$0xff] %v1312
    %1345 = vst [vmem:[%s5 + $0xd8] sm:$0xff] %v1313
    %1346 = vst [vmem:[%s5 + $0xe0] sm:$0xff] %v1314
    %1347 = vst [vmem:[%s5 + $0xe8] sm:$0xff] %v1315
    %1348 = vst [vmem:[%s5 + $0xf0] sm:$0xff] %v1316
    %1349 = vst [vmem:[%s5 + $0xf8] sm:$0xff] %v1317
    // Predicated region
    $region26: #{_train_forward.2} parent=1 // pred_check
      _
    $region27: #{_train_forward.2} parent=1 // pred_check_branch
      %1351 = sbr.rel (0) target = $region29
    $region28: #{_train_forward.2} parent=1 // pred_region
      _
    $region29: #{_train_forward.2} parent=1 // pred_fallthru
      _
    // Predicated region
    $region30: #{_train_forward.2} parent=1 // pred_check
      _
    $region31: #{_train_forward.2} parent=1 // pred_check_branch
      %1353 = sbr.rel (0) target = $region33
    $region32: #{_train_forward.2} parent=1 // pred_region
      _
    $region33: #{_train_forward.2} parent=1 // pred_fallthru
      _
    %1354 = vsyncpa [#allocation3], 1

// kernel: _train_forward.3
$region0: #{_train_forward.3}
  #allocation0 [shape = 'u32[]', space=smem, size = 0x4, offset = 0x4, fixed_abs, tag = 'smem constant byte address 0x4 - core index']
  #allocation1 [shape = 'u32[144,128]{1,0:T(1,128)}', space=vmem, size = 0x12000, scoped, tag = 'internal scratch']
  #allocation2 [shape = 'f32[128,256]{1,0:T(8,128)}', space=vmem, size = 0x20000, scoped, tag = 'scratch operand']
  %s0 = inlined_call_operand.vmem [shape: f32[2], index: 0, kind: input, shape index: {}]
  %s1 = inlined_call_operand.vmem [shape: f32[128,128], index: 1, kind: input, shape index: {}]
  %s2 = inlined_call_operand.vmem [shape: bf16[256,128], index: 2, kind: input, shape index: {}]
  %s3 = inlined_call_operand.vmem [shape: f32[128,128], index: 3, kind: output, shape index: {0}]
  %s4 = inlined_call_operand.vmem [shape: f32[128,128], index: 4, kind: output, shape index: {1}]
  %5 = xla_tuple %s3, %s4
  %s6 = sld [smem:[#allocation0]]
  $region42: #{_train_forward.3} parent=0
    _
  %s8 = ssub.s32 1, %s6
  %s9 = scalar_select 0, %s8, %s6
  $region1: #{_train_forward.3} parent=0
    #allocation3 [shape = 'u8[512]{0}', space=smem, size = 0x200, scoped, tag = 'input window, operand 0, single buffered']
    #allocation4 [shape = 's32[1]{0}', space=sflag, size = 0x4, scoped, tag = 'scoped memory for _train_forward.3']
    %10 = vsyncpa [#allocation4], 0
    // Predicated region
    $region2: #{_train_forward.3} parent=1 // pred_check
      _
    $region3: #{_train_forward.3} parent=1 // pred_check_branch
      %12 = sbr.rel (0) target = $region5
    $region4: #{_train_forward.3} parent=1 // pred_region
      %s14 = ssub.s32 16, 16
      %15 = vsyncadd [#allocation4], %s14
      %s17 = sshll.u32 %s0, 4
      %s18 = int_to_ptr.vmem [resolvable:$true] %s17
      %20 = dma.vmem_to_smem %s18, 16, [#allocation3], [#allocation4]
    $region5: #{_train_forward.3} parent=1 // pred_fallthru
      _
    // Predicated region
    $region6: #{_train_forward.3} parent=1 // pred_check
      _
    $region7: #{_train_forward.3} parent=1 // pred_check_branch
      %22 = sbr.rel (0) target = $region9
    $region8: #{_train_forward.3} parent=1 // pred_region
      _
    $region9: #{_train_forward.3} parent=1 // pred_fallthru
      _
    // Predicated region
    $region10: #{_train_forward.3} parent=1 // pred_check
      _
    $region11: #{_train_forward.3} parent=1 // pred_check_branch
      %24 = sbr.rel (0) target = $region13
    $region12: #{_train_forward.3} parent=1 // pred_region
      _
    $region13: #{_train_forward.3} parent=1 // pred_fallthru
      _
    // Predicated region
    $region14: #{_train_forward.3} parent=1 // pred_check
      _
    $region15: #{_train_forward.3} parent=1 // pred_check_branch
      %26 = sbr.rel (0) target = $region17
    $region16: #{_train_forward.3} parent=1 // pred_region
      %27 = dma.done [#allocation4], 16
    $region17: #{_train_forward.3} parent=1 // pred_fallthru
      _
    %28 = sfence
    %p30 = scmp.eq.s32.totalorder 0, 0
    // Predicated region
    $region18: #{_train_forward.3} parent=1 // pred_check
      %p31 = pneg %p30
    $region19: #{_train_forward.3} parent=1 // pred_check_branch
      %33 = sbr.rel (%p31) target = $region21
    $region20: #{_train_forward.3} parent=1 // pred_region
      %34 = vst [vmem:[#allocation2] sm:$0xff] 0.0
      %35 = vst [vmem:[#allocation2 + $0x8] sm:$0xff] 0.0
      %36 = vst [vmem:[#allocation2 + $0x10] sm:$0xff] 0.0
      %37 = vst [vmem:[#allocation2 + $0x18] sm:$0xff] 0.0
      %38 = vst [vmem:[#allocation2 + $0x20] sm:$0xff] 0.0
      %39 = vst [vmem:[#allocation2 + $0x28] sm:$0xff] 0.0
      %40 = vst [vmem:[#allocation2 + $0x30] sm:$0xff] 0.0
      %41 = vst [vmem:[#allocation2 + $0x38] sm:$0xff] 0.0
      %42 = vst [vmem:[#allocation2 + $0x40] sm:$0xff] 0.0
      %43 = vst [vmem:[#allocation2 + $0x48] sm:$0xff] 0.0
      %44 = vst [vmem:[#allocation2 + $0x50] sm:$0xff] 0.0
      %45 = vst [vmem:[#allocation2 + $0x58] sm:$0xff] 0.0
      %46 = vst [vmem:[#allocation2 + $0x60] sm:$0xff] 0.0
      %47 = vst [vmem:[#allocation2 + $0x68] sm:$0xff] 0.0
      %48 = vst [vmem:[#allocation2 + $0x70] sm:$0xff] 0.0
      %49 = vst [vmem:[#allocation2 + $0x78] sm:$0xff] 0.0
      %50 = vst [vmem:[#allocation2 + $0x80] sm:$0xff] 0.0
      %51 = vst [vmem:[#allocation2 + $0x88] sm:$0xff] 0.0
      %52 = vst [vmem:[#allocation2 + $0x90] sm:$0xff] 0.0
      %53 = vst [vmem:[#allocation2 + $0x98] sm:$0xff] 0.0
      %54 = vst [vmem:[#allocation2 + $0xa0] sm:$0xff] 0.0
      %55 = vst [vmem:[#allocation2 + $0xa8] sm:$0xff] 0.0
      %56 = vst [vmem:[#allocation2 + $0xb0] sm:$0xff] 0.0
      %57 = vst [vmem:[#allocation2 + $0xb8] sm:$0xff] 0.0
      %58 = vst [vmem:[#allocation2 + $0xc0] sm:$0xff] 0.0
      %59 = vst [vmem:[#allocation2 + $0xc8] sm:$0xff] 0.0
      %60 = vst [vmem:[#allocation2 + $0xd0] sm:$0xff] 0.0
      %61 = vst [vmem:[#allocation2 + $0xd8] sm:$0xff] 0.0
      %62 = vst [vmem:[#allocation2 + $0xe0] sm:$0xff] 0.0
      %63 = vst [vmem:[#allocation2 + $0xe8] sm:$0xff] 0.0
      %64 = vst [vmem:[#allocation2 + $0xf0] sm:$0xff] 0.0
      %65 = vst [vmem:[#allocation2 + $0xf8] sm:$0xff] 0.0
      %s66 = sld [smem:[#allocation3]]
      %s67 = sld [smem:[#allocation3 + $0x1]]
      %v68 = vld [vmem:[%s1] sm:$0xff]
      %v69 = vld [vmem:[%s1 + $0x8] sm:$0xff]
      %v70 = vld [vmem:[%s1 + $0x10] sm:$0xff]
      %v71 = vld [vmem:[%s1 + $0x18] sm:$0xff]
      %v72 = vld [vmem:[%s1 + $0x20] sm:$0xff]
      %v73 = vld [vmem:[%s1 + $0x28] sm:$0xff]
      %v74 = vld [vmem:[%s1 + $0x30] sm:$0xff]
      %v75 = vld [vmem:[%s1 + $0x38] sm:$0xff]
      %v76 = vld [vmem:[%s1 + $0x40] sm:$0xff]
      %v77 = vld [vmem:[%s1 + $0x48] sm:$0xff]
      %v78 = vld [vmem:[%s1 + $0x50] sm:$0xff]
      %v79 = vld [vmem:[%s1 + $0x58] sm:$0xff]
      %v80 = vld [vmem:[%s1 + $0x60] sm:$0xff]
      %v81 = vld [vmem:[%s1 + $0x68] sm:$0xff]
      %v82 = vld [vmem:[%s1 + $0x70] sm:$0xff]
      %v83 = vld [vmem:[%s1 + $0x78] sm:$0xff]
      %v84 = vmul.f32 %v68, %v68
      %v85 = vmul.f32 %v69, %v69
      %v86 = vmul.f32 %v70, %v70
      %v87 = vmul.f32 %v71, %v71
      %v88 = vmul.f32 %v72, %v72
      %v89 = vmul.f32 %v73, %v73
      %v90 = vmul.f32 %v74, %v74
      %v91 = vmul.f32 %v75, %v75
      %v92 = vmul.f32 %v76, %v76
      %v93 = vmul.f32 %v77, %v77
      %v94 = vmul.f32 %v78, %v78
      %v95 = vmul.f32 %v79, %v79
      %v96 = vmul.f32 %v80, %v80
      %v97 = vmul.f32 %v81, %v81
      %v98 = vmul.f32 %v82, %v82
      %v99 = vmul.f32 %v83, %v83
      %100 = vadd.xlane.f32.xlu0 %v84
      %v101 = vpop.xlane.xlu0 %100
      %102 = vadd.xlane.f32.xlu0 %v85
      %v103 = vpop.xlane.xlu0 %102
      %104 = vadd.xlane.f32.xlu0 %v86
      %v105 = vpop.xlane.xlu0 %104
      %106 = vadd.xlane.f32.xlu0 %v87
      %v107 = vpop.xlane.xlu0 %106
      %108 = vadd.xlane.f32.xlu0 %v88
      %v109 = vpop.xlane.xlu0 %108
      %110 = vadd.xlane.f32.xlu0 %v89
      %v111 = vpop.xlane.xlu0 %110
      %112 = vadd.xlane.f32.xlu0 %v90
      %v113 = vpop.xlane.xlu0 %112
      %114 = vadd.xlane.f32.xlu0 %v91
      %v115 = vpop.xlane.xlu0 %114
      %116 = vadd.xlane.f32.xlu0 %v92
      %v117 = vpop.xlane.xlu0 %116
      %118 = vadd.xlane.f32.xlu0 %v93
      %v119 = vpop.xlane.xlu0 %118
      %120 = vadd.xlane.f32.xlu0 %v94
      %v121 = vpop.xlane.xlu0 %120
      %122 = vadd.xlane.f32.xlu0 %v95
      %v123 = vpop.xlane.xlu0 %122
      %124 = vadd.xlane.f32.xlu0 %v96
      %v125 = vpop.xlane.xlu0 %124
      %126 = vadd.xlane.f32.xlu0 %v97
      %v127 = vpop.xlane.xlu0 %126
      %128 = vadd.xlane.f32.xlu0 %v98
      %v129 = vpop.xlane.xlu0 %128
      %130 = vadd.xlane.f32.xlu0 %v99
      %v131 = vpop.xlane.xlu0 %130
      %132 = vmatprep.subr.mxu0 0.0
      %133 = vmatpush1.xpose.msra.mxu0 %v68
      %134 = vmatprep.subr.mxu0 0.0
      %135 = vmatpush1.xpose.msra.mxu0 %v69
      %136 = vmatprep.subr.mxu0 0.0
      %137 = vmatpush1.xpose.msra.mxu0 %v70
      %138 = vmatprep.subr.mxu0 0.0
      %139 = vmatpush1.xpose.msra.mxu0 %v71
      %140 = vmatprep.subr.mxu0 0.0
      %141 = vmatpush1.xpose.msra.mxu0 %v72
      %142 = vmatprep.subr.mxu0 0.0
      %143 = vmatpush1.xpose.msra.mxu0 %v73
      %144 = vmatprep.subr.mxu0 0.0
      %145 = vmatpush1.xpose.msra.mxu0 %v74
      %146 = vmatprep.subr.mxu0 0.0
      %147 = vmatpush1.xpose.msra.mxu0 %v75
      %148 = vmatprep.subr.mxu0 0.0
      %149 = vmatpush1.xpose.msra.mxu0 %v76
      %150 = vmatprep.subr.mxu0 0.0
      %151 = vmatpush1.xpose.msra.mxu0 %v77
      %152 = vmatprep.subr.mxu0 0.0
      %153 = vmatpush1.xpose.msra.mxu0 %v78
      %154 = vmatprep.subr.mxu0 0.0
      %155 = vmatpush1.xpose.msra.mxu0 %v79
      %156 = vmatprep.subr.mxu0 0.0
      %157 = vmatpush1.xpose.msra.mxu0 %v80
      %158 = vmatprep.subr.mxu0 0.0
      %159 = vmatpush1.xpose.msra.mxu0 %v81
      %160 = vmatprep.subr.mxu0 0.0
      %161 = vmatpush1.xpose.msra.mxu0 %v82
      %162 = vmatprep.subr.mxu0 0.0
      %163 = vmatpush1.xpose.msra.mxu0 %v83
      %164 = vmatprep.subr.mxu0 0.0
      %165 = vmatpush1.xpose.msra.mxu0 0.0
      %166 = vmatprep.subr.mxu0 0.0
      %167 = vmatpush1.xpose.msra.mxu0 0.0
      %168 = vmatprep.subr.mxu0 0.0
      %169 = vmatpush1.xpose.msra.mxu0 0.0
      %170 = vmatprep.subr.mxu0 0.0
      %171 = vmatpush1.xpose.msra.mxu0 0.0
      %172 = vmatprep.subr.mxu0 0.0
      %173 = vmatpush1.xpose.msra.mxu0 0.0
      %174 = vmatprep.subr.mxu0 0.0
      %175 = vmatpush1.xpose.msra.mxu0 0.0
      %176 = vmatprep.subr.mxu0 0.0
      %177 = vmatpush1.xpose.msra.mxu0 0.0
      %178 = vmatprep.subr.mxu0 0.0
      %179 = vmatpush1.xpose.msra.mxu0 0.0
      %180 = vmatprep.subr.mxu0 0.0
      %181 = vmatpush1.xpose.msra.mxu0 0.0
      %182 = vmatprep.subr.mxu0 0.0
      %183 = vmatpush1.xpose.msra.mxu0 0.0
      %184 = vmatprep.subr.mxu0 0.0
      %185 = vmatpush1.xpose.msra.mxu0 0.0
      %186 = vmatprep.subr.mxu0 0.0
      %187 = vmatpush1.xpose.msra.mxu0 0.0
      %188 = vmatprep.subr.mxu0 0.0
      %189 = vmatpush1.xpose.msra.mxu0 0.0
      %190 = vmatprep.subr.mxu0 0.0
      %191 = vmatpush1.xpose.msra.mxu0 0.0
      %192 = vmatprep.subr.mxu0 0.0
      %193 = vmatpush1.xpose.msra.mxu0 0.0
      %194 = vmatprep.subr.mxu0 0.0
      %195 = vmatpush1.xpose.msra.mxu0 0.0
      %196 = vmatprep.mubr.f32.mxu0 0.0
      %197 = vmatmul.mubr.f32.gmra.mrb[0].mxu0 %v68
      %v198 = vpop.f32.mrb[0].mxu0
      %v199 = vadd.f32 0.0, %v198
      %v200 = vpop.f32.mrb[0].mxu0
      %201 = vmatprep.mubr.f32.mxu0 0.0
      %202 = vmatmul.mubr.f32.gmra.mrb[0].mxu0 %v69
      %v203 = vpop.f32.mrb[0].mxu0
      %v204 = vadd.f32 0.0, %v203
      %v205 = vpop.f32.mrb[0].mxu0
      %206 = vmatprep.mubr.f32.mxu0 0.0
      %207 = vmatmul.mubr.f32.gmra.mrb[0].mxu0 %v70
      %v208 = vpop.f32.mrb[0].mxu0
      %v209 = vadd.f32 0.0, %v208
      %v210 = vpop.f32.mrb[0].mxu0
      %211 = vmatprep.mubr.f32.mxu0 0.0
      %212 = vmatmul.mubr.f32.gmra.mrb[0].mxu0 %v71
      %v213 = vpop.f32.mrb[0].mxu0
      %v214 = vadd.f32 0.0, %v213
      %v215 = vpop.f32.mrb[0].mxu0
      %216 = vmatprep.mubr.f32.mxu0 0.0
      %217 = vmatmul.mubr.f32.gmra.mrb[0].mxu0 %v72
      %v218 = vpop.f32.mrb[0].mxu0
      %v219 = vadd.f32 0.0, %v218
      %v220 = vpop.f32.mrb[0].mxu0
      %221 = vmatprep.mubr.f32.mxu0 0.0
      %222 = vmatmul.mubr.f32.gmra.mrb[0].mxu0 %v73
      %v223 = vpop.f32.mrb[0].mxu0
      %v224 = vadd.f32 0.0, %v223
      %v225 = vpop.f32.mrb[0].mxu0
      %226 = vmatprep.mubr.f32.mxu0 0.0
      %227 = vmatmul.mubr.f32.gmra.mrb[0].mxu0 %v74
      %v228 = vpop.f32.mrb[0].mxu0
      %v229 = vadd.f32 0.0, %v228
      %v230 = vpop.f32.mrb[0].mxu0
      %231 = vmatprep.mubr.f32.mxu0 0.0
      %232 = vmatmul.mubr.f32.gmra.mrb[0].mxu0 %v75
      %v233 = vpop.f32.mrb[0].mxu0
      %v234 = vadd.f32 0.0, %v233
      %v235 = vpop.f32.mrb[0].mxu0
      %236 = vmatprep.mubr.f32.mxu0 0.0
      %237 = vmatmul.mubr.f32.gmra.mrb[0].mxu0 %v76
      %v238 = vpop.f32.mrb[0].mxu0
      %v239 = vadd.f32 0.0, %v238
      %v240 = vpop.f32.mrb[0].mxu0
      %241 = vmatprep.mubr.f32.mxu0 0.0
      %242 = vmatmul.mubr.f32.gmra.mrb[0].mxu0 %v77
      %v243 = vpop.f32.mrb[0].mxu0
      %v244 = vadd.f32 0.0, %v243
      %v245 = vpop.f32.mrb[0].mxu0
      %246 = vmatprep.mubr.f32.mxu0 0.0
      %247 = vmatmul.mubr.f32.gmra.mrb[0].mxu0 %v78
      %v248 = vpop.f32.mrb[0].mxu0
      %v249 = vadd.f32 0.0, %v248
      %v250 = vpop.f32.mrb[0].mxu0
      %251 = vmatprep.mubr.f32.mxu0 0.0
      %252 = vmatmul.mubr.f32.gmra.mrb[0].mxu0 %v79
      %v253 = vpop.f32.mrb[0].mxu0
      %v254 = vadd.f32 0.0, %v253
      %v255 = vpop.f32.mrb[0].mxu0
      %256 = vmatprep.mubr.f32.mxu0 0.0
      %257 = vmatmul.mubr.f32.gmra.mrb[0].mxu0 %v80
      %v258 = vpop.f32.mrb[0].mxu0
      %v259 = vadd.f32 0.0, %v258
      %v260 = vpop.f32.mrb[0].mxu0
      %261 = vmatprep.mubr.f32.mxu0 0.0
      %262 = vmatmul.mubr.f32.gmra.mrb[0].mxu0 %v81
      %v263 = vpop.f32.mrb[0].mxu0
      %v264 = vadd.f32 0.0, %v263
      %v265 = vpop.f32.mrb[0].mxu0
      %266 = vmatprep.mubr.f32.mxu0 0.0
      %267 = vmatmul.mubr.f32.gmra.mrb[0].mxu0 %v82
      %v268 = vpop.f32.mrb[0].mxu0
      %v269 = vadd.f32 0.0, %v268
      %v270 = vpop.f32.mrb[0].mxu0
      %271 = vmatprep.mubr.f32.mxu0 0.0
      %272 = vmatmul.mubr.f32.gmra.mrb[0].mxu0 %v83
      %v273 = vpop.f32.mrb[0].mxu0
      %v274 = vadd.f32 0.0, %v273
      %v275 = vpop.f32.mrb[0].mxu0
      %276 = vdwg.mxu0
      %277 = vxpose.xlu0.b32.start [1/16] %v101, 128
      %278 = vxpose.xlu0.b32.cont [2/16] %v103, 128
      %279 = vxpose.xlu0.b32.cont [3/16] %v105, 128
      %280 = vxpose.xlu0.b32.cont [4/16] %v107, 128
      %281 = vxpose.xlu0.b32.cont [5/16] %v109, 128
      %282 = vxpose.xlu0.b32.cont [6/16] %v111, 128
      %283 = vxpose.xlu0.b32.cont [7/16] %v113, 128
      %284 = vxpose.xlu0.b32.cont [8/16] %v115, 128
      %285 = vxpose.xlu0.b32.cont [9/16] %v117, 128
      %286 = vxpose.xlu0.b32.cont [10/16] %v119, 128
      %287 = vxpose.xlu0.b32.cont [11/16] %v121, 128
      %288 = vxpose.xlu0.b32.cont [12/16] %v123, 128
      %289 = vxpose.xlu0.b32.cont [13/16] %v125, 128
      %290 = vxpose.xlu0.b32.cont [14/16] %v127, 128
      %291 = vxpose.xlu0.b32.cont [15/16] %v129, 128
      %292 = vxpose.xlu0.b32.end [16/16] %v131, 128
      %v293 = vpop.trf.xlu0
      %v294 = vpop.trf.xlu0
      %v295 = vpop.trf.xlu0
      %v296 = vpop.trf.xlu0
      %v297 = vpop.trf.xlu0
      %v298 = vpop.trf.xlu0
      %v299 = vpop.trf.xlu0
      %v300 = vpop.trf.xlu0
      %v301 = vpop.trf.xlu0
      %v302 = vpop.trf.xlu0
      %v303 = vpop.trf.xlu0
      %v304 = vpop.trf.xlu0
      %v305 = vpop.trf.xlu0
      %v306 = vpop.trf.xlu0
      %v307 = vpop.trf.xlu0
      %v308 = vpop.trf.xlu0
      %v309 = vlaneseq
      %v310 = vshrl.u32 %v309, 7
      %v311 = vsub.s32 0, %v310
      %v312 = vrot.slane %v293, %v311
      %v313 = vadd.f32 %v101, %v312
      %v314 = vadd.f32 %v103, %v312
      %v315 = vadd.f32 %v105, %v312
      %v316 = vadd.f32 %v107, %v312
      %v317 = vadd.f32 %v109, %v312
      %v318 = vadd.f32 %v111, %v312
      %v319 = vadd.f32 %v113, %v312
      %v320 = vadd.f32 %v115, %v312
      %v321 = vadd.f32 %v117, %v312
      %v322 = vadd.f32 %v119, %v312
      %v323 = vadd.f32 %v121, %v312
      %v324 = vadd.f32 %v123, %v312
      %v325 = vadd.f32 %v125, %v312
      %v326 = vadd.f32 %v127, %v312
      %v327 = vadd.f32 %v129, %v312
      %v328 = vadd.f32 %v131, %v312
      %v329 = vmul.f32 %v199, 2.0
      %v330 = vmul.f32 %v204, 2.0
      %v331 = vmul.f32 %v209, 2.0
      %v332 = vmul.f32 %v214, 2.0
      %v333 = vmul.f32 %v219, 2.0
      %v334 = vmul.f32 %v224, 2.0
      %v335 = vmul.f32 %v229, 2.0
      %v336 = vmul.f32 %v234, 2.0
      %v337 = vmul.f32 %v239, 2.0
      %v338 = vmul.f32 %v244, 2.0
      %v339 = vmul.f32 %v249, 2.0
      %v340 = vmul.f32 %v254, 2.0
      %v341 = vmul.f32 %v259, 2.0
      %v342 = vmul.f32 %v264, 2.0
      %v343 = vmul.f32 %v269, 2.0
      %v344 = vmul.f32 %v274, 2.0
      %v345 = vsub.f32 %v313, %v329
      %v346 = vsub.f32 %v314, %v330
      %v347 = vsub.f32 %v315, %v331
      %v348 = vsub.f32 %v316, %v332
      %v349 = vsub.f32 %v317, %v333
      %v350 = vsub.f32 %v318, %v334
      %v351 = vsub.f32 %v319, %v335
      %v352 = vsub.f32 %v320, %v336
      %v353 = vsub.f32 %v321, %v337
      %v354 = vsub.f32 %v322, %v338
      %v355 = vsub.f32 %v323, %v339
      %v356 = vsub.f32 %v324, %v340
      %v357 = vsub.f32 %v325, %v341
      %v358 = vsub.f32 %v326, %v342
      %v359 = vsub.f32 %v327, %v343
      %v360 = vsub.f32 %v328, %v344
      %v361 = vmax.f32 %v345, 0.0
      %v362 = vmax.f32 %v346, 0.0
      %v363 = vmax.f32 %v347, 0.0
      %v364 = vmax.f32 %v348, 0.0
      %v365 = vmax.f32 %v349, 0.0
      %v366 = vmax.f32 %v350, 0.0
      %v367 = vmax.f32 %v351, 0.0
      %v368 = vmax.f32 %v352, 0.0
      %v369 = vmax.f32 %v353, 0.0
      %v370 = vmax.f32 %v354, 0.0
      %v371 = vmax.f32 %v355, 0.0
      %v372 = vmax.f32 %v356, 0.0
      %v373 = vmax.f32 %v357, 0.0
      %v374 = vmax.f32 %v358, 0.0
      %v375 = vmax.f32 %v359, 0.0
      %v376 = vmax.f32 %v360, 0.0
      %s377 = ssub.f32 0.0, %s66
      %v378 = vstv %s377
      %v379 = vmul.f32 %v378, %v361
      %v380 = vmul.f32 %v378, %v362
      %v381 = vmul.f32 %v378, %v363
      %v382 = vmul.f32 %v378, %v364
      %v383 = vmul.f32 %v378, %v365
      %v384 = vmul.f32 %v378, %v366
      %v385 = vmul.f32 %v378, %v367
      %v386 = vmul.f32 %v378, %v368
      %v387 = vmul.f32 %v378, %v369
      %v388 = vmul.f32 %v378, %v370
      %v389 = vmul.f32 %v378, %v371
      %v390 = vmul.f32 %v378, %v372
      %v391 = vmul.f32 %v378, %v373
      %v392 = vmul.f32 %v378, %v374
      %v393 = vmul.f32 %v378, %v375
      %v394 = vmul.f32 %v378, %v376
      %v395 = vmul.f32 %v379, 1.442695
      %v396 = vpow.pop %v395
      %v397 = vmul.f32 %v380, 1.442695
      %v398 = vpow.pop %v397
      %v399 = vmul.f32 %v381, 1.442695
      %v400 = vpow.pop %v399
      %v401 = vmul.f32 %v382, 1.442695
      %v402 = vpow.pop %v401
      %v403 = vmul.f32 %v383, 1.442695
      %v404 = vpow.pop %v403
      %v405 = vmul.f32 %v384, 1.442695
      %v406 = vpow.pop %v405
      %v407 = vmul.f32 %v385, 1.442695
      %v408 = vpow.pop %v407
      %v409 = vmul.f32 %v386, 1.442695
      %v410 = vpow.pop %v409
      %v411 = vmul.f32 %v387, 1.442695
      %v412 = vpow.pop %v411
      %v413 = vmul.f32 %v388, 1.442695
      %v414 = vpow.pop %v413
      %v415 = vmul.f32 %v389, 1.442695
      %v416 = vpow.pop %v415
      %v417 = vmul.f32 %v390, 1.442695
      %v418 = vpow.pop %v417
      %v419 = vmul.f32 %v391, 1.442695
      %v420 = vpow.pop %v419
      %v421 = vmul.f32 %v392, 1.442695
      %v422 = vpow.pop %v421
      %v423 = vmul.f32 %v393, 1.442695
      %v424 = vpow.pop %v423
      %v425 = vmul.f32 %v394, 1.442695
      %v426 = vpow.pop %v425
      %v427 = vstv %s67
      %v428 = vmul.f32 %v427, %v396
      %v429 = vmul.f32 %v427, %v398
      %v430 = vmul.f32 %v427, %v400
      %v431 = vmul.f32 %v427, %v402
      %v432 = vmul.f32 %v427, %v404
      %v433 = vmul.f32 %v427, %v406
      %v434 = vmul.f32 %v427, %v408
      %v435 = vmul.f32 %v427, %v410
      %v436 = vmul.f32 %v427, %v412
      %v437 = vmul.f32 %v427, %v414
      %v438 = vmul.f32 %v427, %v416
      %v439 = vmul.f32 %v427, %v418
      %v440 = vmul.f32 %v427, %v420
      %v441 = vmul.f32 %v427, %v422
      %v442 = vmul.f32 %v427, %v424
      %v443 = vmul.f32 %v427, %v426
      %444 = vst [vmem:[%s3] sm:$0xff] %v428
      %445 = vst [vmem:[%s3 + $0x8] sm:$0xff] %v429
      %446 = vst [vmem:[%s3 + $0x10] sm:$0xff] %v430
      %447 = vst [vmem:[%s3 + $0x18] sm:$0xff] %v431
      %448 = vst [vmem:[%s3 + $0x20] sm:$0xff] %v432
      %449 = vst [vmem:[%s3 + $0x28] sm:$0xff] %v433
      %450 = vst [vmem:[%s3 + $0x30] sm:$0xff] %v434
      %451 = vst [vmem:[%s3 + $0x38] sm:$0xff] %v435
      %452 = vst [vmem:[%s3 + $0x40] sm:$0xff] %v436
      %453 = vst [vmem:[%s3 + $0x48] sm:$0xff] %v437
      %454 = vst [vmem:[%s3 + $0x50] sm:$0xff] %v438
      %455 = vst [vmem:[%s3 + $0x58] sm:$0xff] %v439
      %456 = vst [vmem:[%s3 + $0x60] sm:$0xff] %v440
      %457 = vst [vmem:[%s3 + $0x68] sm:$0xff] %v441
      %458 = vst [vmem:[%s3 + $0x70] sm:$0xff] %v442
      %459 = vst [vmem:[%s3 + $0x78] sm:$0xff] %v443
    $region21: #{_train_forward.3} parent=1 // pred_fallthru
      _
    %v460 = vld [vmem:[%s2] sm:$0xf]
    %v461 = vld [vmem:[%s2 + $0x4] sm:$0xf]
    %v462 = vld [vmem:[%s2 + $0x8] sm:$0xf]
    %v463 = vld [vmem:[%s2 + $0xc] sm:$0xf]
    %v464 = vld [vmem:[%s2 + $0x10] sm:$0xf]
    %v465 = vld [vmem:[%s2 + $0x14] sm:$0xf]
    %v466 = vld [vmem:[%s2 + $0x18] sm:$0xf]
    %v467 = vld [vmem:[%s2 + $0x1c] sm:$0xf]
    %v468 = vld [vmem:[%s2 + $0x20] sm:$0xf]
    %v469 = vld [vmem:[%s2 + $0x24] sm:$0xf]
    %v470 = vld [vmem:[%s2 + $0x28] sm:$0xf]
    %v471 = vld [vmem:[%s2 + $0x2c] sm:$0xf]
    %v472 = vld [vmem:[%s2 + $0x30] sm:$0xf]
    %v473 = vld [vmem:[%s2 + $0x34] sm:$0xf]
    %v474 = vld [vmem:[%s2 + $0x38] sm:$0xf]
    %v475 = vld [vmem:[%s2 + $0x3c] sm:$0xf]
    %v476 = vld [vmem:[%s2 + $0x40] sm:$0xf]
    %v477 = vld [vmem:[%s2 + $0x44] sm:$0xf]
    %v478 = vld [vmem:[%s2 + $0x48] sm:$0xf]
    %v479 = vld [vmem:[%s2 + $0x4c] sm:$0xf]
    %v480 = vld [vmem:[%s2 + $0x50] sm:$0xf]
    %v481 = vld [vmem:[%s2 + $0x54] sm:$0xf]
    %v482 = vld [vmem:[%s2 + $0x58] sm:$0xf]
    %v483 = vld [vmem:[%s2 + $0x5c] sm:$0xf]
    %v484 = vld [vmem:[%s2 + $0x60] sm:$0xf]
    %v485 = vld [vmem:[%s2 + $0x64] sm:$0xf]
    %v486 = vld [vmem:[%s2 + $0x68] sm:$0xf]
    %v487 = vld [vmem:[%s2 + $0x6c] sm:$0xf]
    %v488 = vld [vmem:[%s2 + $0x70] sm:$0xf]
    %v489 = vld [vmem:[%s2 + $0x74] sm:$0xf]
    %v490 = vld [vmem:[%s2 + $0x78] sm:$0xf]
    %v491 = vld [vmem:[%s2 + $0x7c] sm:$0xf]
    %v492 = vld [vmem:[#allocation2] sm:$0xff]
    %v493 = vld [vmem:[#allocation2 + $0x8] sm:$0xff]
    %v494 = vld [vmem:[#allocation2 + $0x10] sm:$0xff]
    %v495 = vld [vmem:[#allocation2 + $0x18] sm:$0xff]
    %v496 = vld [vmem:[#allocation2 + $0x20] sm:$0xff]
    %v497 = vld [vmem:[#allocation2 + $0x28] sm:$0xff]
    %v498 = vld [vmem:[#allocation2 + $0x30] sm:$0xff]
    %v499 = vld [vmem:[#allocation2 + $0x38] sm:$0xff]
    %v500 = vld [vmem:[#allocation2 + $0x40] sm:$0xff]
    %v501 = vld [vmem:[#allocation2 + $0x48] sm:$0xff]
    %v502 = vld [vmem:[#allocation2 + $0x50] sm:$0xff]
    %v503 = vld [vmem:[#allocation2 + $0x58] sm:$0xff]
    %v504 = vld [vmem:[#allocation2 + $0x60] sm:$0xff]
    %v505 = vld [vmem:[#allocation2 + $0x68] sm:$0xff]
    %v506 = vld [vmem:[#allocation2 + $0x70] sm:$0xff]
    %v507 = vld [vmem:[#allocation2 + $0x78] sm:$0xff]
    %v508 = vld [vmem:[#allocation2 + $0x80] sm:$0xff]
    %v509 = vld [vmem:[#allocation2 + $0x88] sm:$0xff]
    %v510 = vld [vmem:[#allocation2 + $0x90] sm:$0xff]
    %v511 = vld [vmem:[#allocation2 + $0x98] sm:$0xff]
    %v512 = vld [vmem:[#allocation2 + $0xa0] sm:$0xff]
    %v513 = vld [vmem:[#allocation2 + $0xa8] sm:$0xff]
    %v514 = vld [vmem:[#allocation2 + $0xb0] sm:$0xff]
    %v515 = vld [vmem:[#allocation2 + $0xb8] sm:$0xff]
    %v516 = vld [vmem:[#allocation2 + $0xc0] sm:$0xff]
    %v517 = vld [vmem:[#allocation2 + $0xc8] sm:$0xff]
    %v518 = vld [vmem:[#allocation2 + $0xd0] sm:$0xff]
    %v519 = vld [vmem:[#allocation2 + $0xd8] sm:$0xff]
    %v520 = vld [vmem:[#allocation2 + $0xe0] sm:$0xff]
    %v521 = vld [vmem:[#allocation2 + $0xe8] sm:$0xff]
    %v522 = vld [vmem:[#allocation2 + $0xf0] sm:$0xff]
    %v523 = vld [vmem:[#allocation2 + $0xf8] sm:$0xff]
    %v540 = vunpack.c.l.b16 %v460
    %v541 = vunpack.c.l.b16 %v461
    %v542 = vunpack.c.l.b16 %v462
    %v543 = vunpack.c.l.b16 %v463
    %v544 = vunpack.c.l.b16 %v464
    %v545 = vunpack.c.l.b16 %v465
    %v546 = vunpack.c.l.b16 %v466
    %v547 = vunpack.c.l.b16 %v467
    %v548 = vunpack.c.l.b16 %v468
    %v549 = vunpack.c.l.b16 %v469
    %v550 = vunpack.c.l.b16 %v470
    %v551 = vunpack.c.l.b16 %v471
    %v552 = vunpack.c.l.b16 %v472
    %v553 = vunpack.c.l.b16 %v473
    %v554 = vunpack.c.l.b16 %v474
    %v555 = vunpack.c.l.b16 %v475
    %v556 = vpack.c.b16 %v541, %v540
    %v557 = vpack.c.b16 %v543, %v542
    %v558 = vpack.c.b16 %v545, %v544
    %v559 = vpack.c.b16 %v547, %v546
    %v560 = vpack.c.b16 %v549, %v548
    %v561 = vpack.c.b16 %v551, %v550
    %v562 = vpack.c.b16 %v553, %v552
    %v563 = vpack.c.b16 %v555, %v554
    %v588 = vunpack.c.l.b16 %v476
    %v589 = vunpack.c.l.b16 %v477
    %v590 = vunpack.c.l.b16 %v478
    %v591 = vunpack.c.l.b16 %v479
    %v592 = vunpack.c.l.b16 %v480
    %v593 = vunpack.c.l.b16 %v481
    %v594 = vunpack.c.l.b16 %v482
    %v595 = vunpack.c.l.b16 %v483
    %v596 = vunpack.c.l.b16 %v484
    %v597 = vunpack.c.l.b16 %v485
    %v598 = vunpack.c.l.b16 %v486
    %v599 = vunpack.c.l.b16 %v487
    %v600 = vunpack.c.l.b16 %v488
    %v601 = vunpack.c.l.b16 %v489
    %v602 = vunpack.c.l.b16 %v490
    %v603 = vunpack.c.l.b16 %v491
    %v604 = vpack.c.b16 %v589, %v588
    %v605 = vpack.c.b16 %v591, %v590
    %v606 = vpack.c.b16 %v593, %v592
    %v607 = vpack.c.b16 %v595, %v594
    %v608 = vpack.c.b16 %v597, %v596
    %v609 = vpack.c.b16 %v599, %v598
    %v610 = vpack.c.b16 %v601, %v600
    %v611 = vpack.c.b16 %v603, %v602
    %620 = vmatprep.subr.bf16.mxu0 0
    %621 = vmatpush1.bf16.xpose.msra.mxu0 %v556
    %622 = vmatprep.subr.bf16.mxu0 0
    %623 = vmatpush1.bf16.xpose.msra.mxu0 %v557
    %624 = vmatprep.subr.bf16.mxu0 0
    %625 = vmatpush1.bf16.xpose.msra.mxu0 %v558
    %626 = vmatprep.subr.bf16.mxu0 0
    %627 = vmatpush1.bf16.xpose.msra.mxu0 %v559
    %628 = vmatprep.subr.bf16.mxu0 0
    %629 = vmatpush1.bf16.xpose.msra.mxu0 %v560
    %630 = vmatprep.subr.bf16.mxu0 0
    %631 = vmatpush1.bf16.xpose.msra.mxu0 %v561
    %632 = vmatprep.subr.bf16.mxu0 0
    %633 = vmatpush1.bf16.xpose.msra.mxu0 %v562
    %634 = vmatprep.subr.bf16.mxu0 0
    %635 = vmatpush1.bf16.xpose.msra.mxu0 %v563
    %636 = vmatprep.subr.bf16.mxu0 0
    %637 = vmatpush1.bf16.xpose.msra.mxu0 %v604
    %638 = vmatprep.subr.bf16.mxu0 0
    %639 = vmatpush1.bf16.xpose.msra.mxu0 %v605
    %640 = vmatprep.subr.bf16.mxu0 0
    %641 = vmatpush1.bf16.xpose.msra.mxu0 %v606
    %642 = vmatprep.subr.bf16.mxu0 0
    %643 = vmatpush1.bf16.xpose.msra.mxu0 %v607
    %644 = vmatprep.subr.bf16.mxu0 0
    %645 = vmatpush1.bf16.xpose.msra.mxu0 %v608
    %646 = vmatprep.subr.bf16.mxu0 0
    %647 = vmatpush1.bf16.xpose.msra.mxu0 %v609
    %648 = vmatprep.subr.bf16.mxu0 0
    %649 = vmatpush1.bf16.xpose.msra.mxu0 %v610
    %650 = vmatprep.subr.bf16.mxu0 0
    %651 = vmatpush1.bf16.xpose.msra.mxu0 %v611
    %652 = vmatprep.mubr.bf16.mxu0 0
    %653 = vmatmul.mubr.bf16.gmra.mrb[0].mxu0 %v556
    %v654 = vpop.f32.mrb[0].mxu0
    %v655 = vadd.f32 0.0, %v654
    %v656 = vpop.f32.mrb[0].mxu0
    %v657 = vadd.f32 0.0, %v656
    %v658 = vpop.f32.mrb[0].mxu0
    %v659 = vadd.f32 0.0, %v658
    %v660 = vpop.f32.mrb[0].mxu0
    %v661 = vadd.f32 0.0, %v660
    %662 = vmatprep.mubr.bf16.mxu0 0
    %663 = vmatmul.mubr.bf16.gmra.mrb[0].mxu0 %v557
    %v664 = vpop.f32.mrb[0].mxu0
    %v665 = vadd.f32 0.0, %v664
    %v666 = vpop.f32.mrb[0].mxu0
    %v667 = vadd.f32 0.0, %v666
    %v668 = vpop.f32.mrb[0].mxu0
    %v669 = vadd.f32 0.0, %v668
    %v670 = vpop.f32.mrb[0].mxu0
    %v671 = vadd.f32 0.0, %v670
    %672 = vmatprep.mubr.bf16.mxu0 0
    %673 = vmatmul.mubr.bf16.gmra.mrb[0].mxu0 %v558
    %v674 = vpop.f32.mrb[0].mxu0
    %v675 = vadd.f32 0.0, %v674
    %v676 = vpop.f32.mrb[0].mxu0
    %v677 = vadd.f32 0.0, %v676
    %v678 = vpop.f32.mrb[0].mxu0
    %v679 = vadd.f32 0.0, %v678
    %v680 = vpop.f32.mrb[0].mxu0
    %v681 = vadd.f32 0.0, %v680
    %682 = vmatprep.mubr.bf16.mxu0 0
    %683 = vmatmul.mubr.bf16.gmra.mrb[0].mxu0 %v559
    %v684 = vpop.f32.mrb[0].mxu0
    %v685 = vadd.f32 0.0, %v684
    %v686 = vpop.f32.mrb[0].mxu0
    %v687 = vadd.f32 0.0, %v686
    %v688 = vpop.f32.mrb[0].mxu0
    %v689 = vadd.f32 0.0, %v688
    %v690 = vpop.f32.mrb[0].mxu0
    %v691 = vadd.f32 0.0, %v690
    %692 = vmatprep.mubr.bf16.mxu0 0
    %693 = vmatmul.mubr.bf16.gmra.mrb[0].mxu0 %v560
    %v694 = vpop.f32.mrb[0].mxu0
    %v695 = vadd.f32 0.0, %v694
    %v696 = vpop.f32.mrb[0].mxu0
    %v697 = vadd.f32 0.0, %v696
    %v698 = vpop.f32.mrb[0].mxu0
    %v699 = vadd.f32 0.0, %v698
    %v700 = vpop.f32.mrb[0].mxu0
    %v701 = vadd.f32 0.0, %v700
    %702 = vmatprep.mubr.bf16.mxu0 0
    %703 = vmatmul.mubr.bf16.gmra.mrb[0].mxu0 %v561
    %v704 = vpop.f32.mrb[0].mxu0
    %v705 = vadd.f32 0.0, %v704
    %v706 = vpop.f32.mrb[0].mxu0
    %v707 = vadd.f32 0.0, %v706
    %v708 = vpop.f32.mrb[0].mxu0
    %v709 = vadd.f32 0.0, %v708
    %v710 = vpop.f32.mrb[0].mxu0
    %v711 = vadd.f32 0.0, %v710
    %712 = vmatprep.mubr.bf16.mxu0 0
    %713 = vmatmul.mubr.bf16.gmra.mrb[0].mxu0 %v562
    %v714 = vpop.f32.mrb[0].mxu0
    %v715 = vadd.f32 0.0, %v714
    %v716 = vpop.f32.mrb[0].mxu0
    %v717 = vadd.f32 0.0, %v716
    %v718 = vpop.f32.mrb[0].mxu0
    %v719 = vadd.f32 0.0, %v718
    %v720 = vpop.f32.mrb[0].mxu0
    %v721 = vadd.f32 0.0, %v720
    %722 = vmatprep.mubr.bf16.mxu0 0
    %723 = vmatmul.mubr.bf16.gmra.mrb[0].mxu0 %v563
    %v724 = vpop.f32.mrb[0].mxu0
    %v725 = vadd.f32 0.0, %v724
    %v726 = vpop.f32.mrb[0].mxu0
    %v727 = vadd.f32 0.0, %v726
    %v728 = vpop.f32.mrb[0].mxu0
    %v729 = vadd.f32 0.0, %v728
    %v730 = vpop.f32.mrb[0].mxu0
    %v731 = vadd.f32 0.0, %v730
    %732 = vdwg.mxu0
    %v733 = vadd.f32 %v492, %v655
    %v734 = vadd.f32 %v493, %v657
    %v735 = vadd.f32 %v494, %v659
    %v736 = vadd.f32 %v495, %v661
    %v737 = vadd.f32 %v496, %v665
    %v738 = vadd.f32 %v497, %v667
    %v739 = vadd.f32 %v498, %v669
    %v740 = vadd.f32 %v499, %v671
    %v741 = vadd.f32 %v500, %v675
    %v742 = vadd.f32 %v501, %v677
    %v743 = vadd.f32 %v502, %v679
    %v744 = vadd.f32 %v503, %v681
    %v745 = vadd.f32 %v504, %v685
    %v746 = vadd.f32 %v505, %v687
    %v747 = vadd.f32 %v506, %v689
    %v748 = vadd.f32 %v507, %v691
    %v749 = vadd.f32 %v508, %v695
    %v750 = vadd.f32 %v509, %v697
    %v751 = vadd.f32 %v510, %v699
    %v752 = vadd.f32 %v511, %v701
    %v753 = vadd.f32 %v512, %v705
    %v754 = vadd.f32 %v513, %v707
    %v755 = vadd.f32 %v514, %v709
    %v756 = vadd.f32 %v515, %v711
    %v757 = vadd.f32 %v516, %v715
    %v758 = vadd.f32 %v517, %v717
    %v759 = vadd.f32 %v518, %v719
    %v760 = vadd.f32 %v519, %v721
    %v761 = vadd.f32 %v520, %v725
    %v762 = vadd.f32 %v521, %v727
    %v763 = vadd.f32 %v522, %v729
    %v764 = vadd.f32 %v523, %v731
    %765 = vst [vmem:[#allocation2] sm:$0xff] %v733
    %766 = vst [vmem:[#allocation2 + $0x8] sm:$0xff] %v734
    %767 = vst [vmem:[#allocation2 + $0x10] sm:$0xff] %v735
    %768 = vst [vmem:[#allocation2 + $0x18] sm:$0xff] %v736
    %769 = vst [vmem:[#allocation2 + $0x20] sm:$0xff] %v737
    %770 = vst [vmem:[#allocation2 + $0x28] sm:$0xff] %v738
    %771 = vst [vmem:[#allocation2 + $0x30] sm:$0xff] %v739
    %772 = vst [vmem:[#allocation2 + $0x38] sm:$0xff] %v740
    %773 = vst [vmem:[#allocation2 + $0x40] sm:$0xff] %v741
    %774 = vst [vmem:[#allocation2 + $0x48] sm:$0xff] %v742
    %775 = vst [vmem:[#allocation2 + $0x50] sm:$0xff] %v743
    %776 = vst [vmem:[#allocation2 + $0x58] sm:$0xff] %v744
    %777 = vst [vmem:[#allocation2 + $0x60] sm:$0xff] %v745
    %778 = vst [vmem:[#allocation2 + $0x68] sm:$0xff] %v746
    %779 = vst [vmem:[#allocation2 + $0x70] sm:$0xff] %v747
    %780 = vst [vmem:[#allocation2 + $0x78] sm:$0xff] %v748
    %781 = vst [vmem:[#allocation2 + $0x80] sm:$0xff] %v749
    %782 = vst [vmem:[#allocation2 + $0x88] sm:$0xff] %v750
    %783 = vst [vmem:[#allocation2 + $0x90] sm:$0xff] %v751
    %784 = vst [vmem:[#allocation2 + $0x98] sm:$0xff] %v752
    %785 = vst [vmem:[#allocation2 + $0xa0] sm:$0xff] %v753
    %786 = vst [vmem:[#allocation2 + $0xa8] sm:$0xff] %v754
    %787 = vst [vmem:[#allocation2 + $0xb0] sm:$0xff] %v755
    %788 = vst [vmem:[#allocation2 + $0xb8] sm:$0xff] %v756
    %789 = vst [vmem:[#allocation2 + $0xc0] sm:$0xff] %v757
    %790 = vst [vmem:[#allocation2 + $0xc8] sm:$0xff] %v758
    %791 = vst [vmem:[#allocation2 + $0xd0] sm:$0xff] %v759
    %792 = vst [vmem:[#allocation2 + $0xd8] sm:$0xff] %v760
    %793 = vst [vmem:[#allocation2 + $0xe0] sm:$0xff] %v761
    %794 = vst [vmem:[#allocation2 + $0xe8] sm:$0xff] %v762
    %795 = vst [vmem:[#allocation2 + $0xf0] sm:$0xff] %v763
    %796 = vst [vmem:[#allocation2 + $0xf8] sm:$0xff] %v764
    // Predicated region
    $region22: #{_train_forward.3} parent=1 // pred_check
      %p797 = pneg %p30
    $region23: #{_train_forward.3} parent=1 // pred_check_branch
      %799 = sbr.rel (%p797) target = $region25
    $region24: #{_train_forward.3} parent=1 // pred_region
      %v800 = vld [vmem:[%s3] sm:$0xff]
      %v801 = vld [vmem:[%s3 + $0x8] sm:$0xff]
      %v802 = vld [vmem:[%s3 + $0x10] sm:$0xff]
      %v803 = vld [vmem:[%s3 + $0x18] sm:$0xff]
      %v804 = vld [vmem:[%s3 + $0x20] sm:$0xff]
      %v805 = vld [vmem:[%s3 + $0x28] sm:$0xff]
      %v806 = vld [vmem:[%s3 + $0x30] sm:$0xff]
      %v807 = vld [vmem:[%s3 + $0x38] sm:$0xff]
      %v808 = vld [vmem:[%s3 + $0x40] sm:$0xff]
      %v809 = vld [vmem:[%s3 + $0x48] sm:$0xff]
      %v810 = vld [vmem:[%s3 + $0x50] sm:$0xff]
      %v811 = vld [vmem:[%s3 + $0x58] sm:$0xff]
      %v812 = vld [vmem:[%s3 + $0x60] sm:$0xff]
      %v813 = vld [vmem:[%s3 + $0x68] sm:$0xff]
      %v814 = vld [vmem:[%s3 + $0x70] sm:$0xff]
      %v815 = vld [vmem:[%s3 + $0x78] sm:$0xff]
      %v816 = vld [vmem:[#allocation2] sm:$0xff]
      %v817 = vld [vmem:[#allocation2 + $0x10] sm:$0xff]
      %v818 = vld [vmem:[#allocation2 + $0x20] sm:$0xff]
      %v819 = vld [vmem:[#allocation2 + $0x30] sm:$0xff]
      %v820 = vld [vmem:[#allocation2 + $0x40] sm:$0xff]
      %v821 = vld [vmem:[#allocation2 + $0x50] sm:$0xff]
      %v822 = vld [vmem:[#allocation2 + $0x60] sm:$0xff]
      %v823 = vld [vmem:[#allocation2 + $0x70] sm:$0xff]
      %v824 = vld [vmem:[#allocation2 + $0x80] sm:$0xff]
      %v825 = vld [vmem:[#allocation2 + $0x90] sm:$0xff]
      %v826 = vld [vmem:[#allocation2 + $0xa0] sm:$0xff]
      %v827 = vld [vmem:[#allocation2 + $0xb0] sm:$0xff]
      %v828 = vld [vmem:[#allocation2 + $0xc0] sm:$0xff]
      %v829 = vld [vmem:[#allocation2 + $0xd0] sm:$0xff]
      %v830 = vld [vmem:[#allocation2 + $0xe0] sm:$0xff]
      %v831 = vld [vmem:[#allocation2 + $0xf0] sm:$0xff]
      %v832 = vsub.f32 %v800, %v816
      %v833 = vsub.f32 %v801, %v817
      %v834 = vsub.f32 %v802, %v818
      %v835 = vsub.f32 %v803, %v819
      %v836 = vsub.f32 %v804, %v820
      %v837 = vsub.f32 %v805, %v821
      %v838 = vsub.f32 %v806, %v822
      %v839 = vsub.f32 %v807, %v823
      %v840 = vsub.f32 %v808, %v824
      %v841 = vsub.f32 %v809, %v825
      %v842 = vsub.f32 %v810, %v826
      %v843 = vsub.f32 %v811, %v827
      %v844 = vsub.f32 %v812, %v828
      %v845 = vsub.f32 %v813, %v829
      %v846 = vsub.f32 %v814, %v830
      %v847 = vsub.f32 %v815, %v831
      %848 = vst [vmem:[%s3] sm:$0xff] %v832
      %849 = vst [vmem:[%s3 + $0x8] sm:$0xff] %v833
      %850 = vst [vmem:[%s3 + $0x10] sm:$0xff] %v834
      %851 = vst [vmem:[%s3 + $0x18] sm:$0xff] %v835
      %852 = vst [vmem:[%s3 + $0x20] sm:$0xff] %v836
      %853 = vst [vmem:[%s3 + $0x28] sm:$0xff] %v837
      %854 = vst [vmem:[%s3 + $0x30] sm:$0xff] %v838
      %855 = vst [vmem:[%s3 + $0x38] sm:$0xff] %v839
      %856 = vst [vmem:[%s3 + $0x40] sm:$0xff] %v840
      %857 = vst [vmem:[%s3 + $0x48] sm:$0xff] %v841
      %858 = vst [vmem:[%s3 + $0x50] sm:$0xff] %v842
      %859 = vst [vmem:[%s3 + $0x58] sm:$0xff] %v843
      %860 = vst [vmem:[%s3 + $0x60] sm:$0xff] %v844
      %861 = vst [vmem:[%s3 + $0x68] sm:$0xff] %v845
      %862 = vst [vmem:[%s3 + $0x70] sm:$0xff] %v846
      %863 = vst [vmem:[%s3 + $0x78] sm:$0xff] %v847
      %v864 = vld [vmem:[#allocation2 + $0x8] sm:$0xff]
      %v865 = vld [vmem:[#allocation2 + $0x18] sm:$0xff]
      %v866 = vld [vmem:[#allocation2 + $0x28] sm:$0xff]
      %v867 = vld [vmem:[#allocation2 + $0x38] sm:$0xff]
      %v868 = vld [vmem:[#allocation2 + $0x48] sm:$0xff]
      %v869 = vld [vmem:[#allocation2 + $0x58] sm:$0xff]
      %v870 = vld [vmem:[#allocation2 + $0x68] sm:$0xff]
      %v871 = vld [vmem:[#allocation2 + $0x78] sm:$0xff]
      %v872 = vld [vmem:[#allocation2 + $0x88] sm:$0xff]
      %v873 = vld [vmem:[#allocation2 + $0x98] sm:$0xff]
      %v874 = vld [vmem:[#allocation2 + $0xa8] sm:$0xff]
      %v875 = vld [vmem:[#allocation2 + $0xb8] sm:$0xff]
      %v876 = vld [vmem:[#allocation2 + $0xc8] sm:$0xff]
      %v877 = vld [vmem:[#allocation2 + $0xd8] sm:$0xff]
      %v878 = vld [vmem:[#allocation2 + $0xe8] sm:$0xff]
      %v879 = vld [vmem:[#allocation2 + $0xf8] sm:$0xff]
      %880 = vst [vmem:[%s4] sm:$0xff] %v864
      %881 = vst [vmem:[%s4 + $0x8] sm:$0xff] %v865
      %882 = vst [vmem:[%s4 + $0x10] sm:$0xff] %v866
      %883 = vst [vmem:[%s4 + $0x18] sm:$0xff] %v867
      %884 = vst [vmem:[%s4 + $0x20] sm:$0xff] %v868
      %885 = vst [vmem:[%s4 + $0x28] sm:$0xff] %v869
      %886 = vst [vmem:[%s4 + $0x30] sm:$0xff] %v870
      %887 = vst [vmem:[%s4 + $0x38] sm:$0xff] %v871
      %888 = vst [vmem:[%s4 + $0x40] sm:$0xff] %v872
      %889 = vst [vmem:[%s4 + $0x48] sm:$0xff] %v873
      %890 = vst [vmem:[%s4 + $0x50] sm:$0xff] %v874
      %891 = vst [vmem:[%s4 + $0x58] sm:$0xff] %v875
      %892 = vst [vmem:[%s4 + $0x60] sm:$0xff] %v876
      %893 = vst [vmem:[%s4 + $0x68] sm:$0xff] %v877
      %894 = vst [vmem:[%s4 + $0x70] sm:$0xff] %v878
      %895 = vst [vmem:[%s4 + $0x78] sm:$0xff] %v879
    $region25: #{_train_forward.3} parent=1 // pred_fallthru
      _
    // Predicated region
    $region26: #{_train_forward.3} parent=1 // pred_check
      _
    $region27: #{_train_forward.3} parent=1 // pred_check_branch
      %897 = sbr.rel (0) target = $region29
    $region28: #{_train_forward.3} parent=1 // pred_region
      _
    $region29: #{_train_forward.3} parent=1 // pred_fallthru
      _
    // Predicated region
    $region30: #{_train_forward.3} parent=1 // pred_check
      _
    $region31: #{_train_forward.3} parent=1 // pred_check_branch
      %899 = sbr.rel (0) target = $region33
    $region32: #{_train_forward.3} parent=1 // pred_region
      _
    $region33: #{_train_forward.3} parent=1 // pred_fallthru
      _
    // Predicated region
    $region34: #{_train_forward.3} parent=1 // pred_check
      _
    $region35: #{_train_forward.3} parent=1 // pred_check_branch
      %901 = sbr.rel (0) target = $region37
    $region36: #{_train_forward.3} parent=1 // pred_region
      _
    $region37: #{_train_forward.3} parent=1 // pred_fallthru
      _
    // Predicated region
    $region38: #{_train_forward.3} parent=1 // pred_check
      _
    $region39: #{_train_forward.3} parent=1 // pred_check_branch
      %903 = sbr.rel (0) target = $region41
    $region40: #{_train_forward.3} parent=1 // pred_region
      _
    $region41: #{_train_forward.3} parent=1 // pred_fallthru
      _
    %904 = vsyncpa [#allocation4], 1

</llo_original>
